<compile_context>
chip_gen: v5e
topology: v5e:2x2
jax: 0.10.0
libtpu: 0.0.40
codegen_flags: <defaults>
</compile_context>

<pallas_src>
import functools

import jax
import jax.numpy as jnp
from jax.experimental import pallas as pl
from jax.experimental.pallas import tpu as pltpu


def _round_up(x, m):
    return ((x + m - 1) // m) * m


# ---------------------------------------------------------------------------
# Fused kernel: grid axis = layer index.  One invocation = one GraphTripleConv
# layer; obj/pred state lives in the (VMEM-resident, input-aliased) output refs.
# ---------------------------------------------------------------------------
def fused_gconv_kernel(
    obj_in_ref, pred_in_ref, sidx_ref, oidx_ref,
    w1a_s_ref, w1a_p_ref, w1a_o_ref, b1a_ref,
    w1b_ref, b1b_ref,
    w2a_ref, b2a_ref, w2b_ref, b2b_ref,
    wproj_ref, bproj_ref,
    obj_out_ref, pred_out_ref,
    s_oh_scr, o_oh_scr, invc_scr,
    *, hidden, dout,
):
    layer = pl.program_id(0)
    f32 = jnp.float32
    bf16 = jnp.bfloat16
    Tp, Np = s_oh_scr.shape
    H = hidden

    # ---- one-time init: state carry + edge-derived quantities ----
    @pl.when(layer == 0)
    def _init():
        # Output VMEM blocks are write-only windows; seed the state carry from
        # the (aliased) inputs here.
        obj_out_ref[...] = obj_in_ref[...]
        pred_out_ref[...] = pred_in_ref[...]
        col = jax.lax.broadcasted_iota(jnp.int32, (Tp, Np), 1)
        s_oh_f = (col == sidx_ref[...]).astype(f32)    # (T, N) one-hot of s_idx
        o_oh_f = (col == oidx_ref[...]).astype(f32)    # (T, N) one-hot of o_idx
        s_oh_scr[...] = s_oh_f.astype(bf16)            # 0/1 exact in bf16
        o_oh_scr[...] = o_oh_f.astype(bf16)
        # per-object edge counts (clamped >= 1), stored as a pre-broadcast
        # (N, H) reciprocal so per-layer pooling is a single elementwise mul.
        counts_nh = jnp.einsum('tn,th->nh', s_oh_f + o_oh_f,
                               jnp.ones((Tp, H), f32),
                               preferred_element_type=f32)          # (N, H)
        invc_scr[...] = 1.0 / jnp.maximum(counts_nh, 1.0)

    obj = obj_out_ref[...]          # (N, D)   current object state (f32)
    pred = pred_out_ref[...]        # (T, Dp)  current predicate state (f32)
    obj_b = obj.astype(bf16)
    s_oh = s_oh_scr[...]            # bf16 one-hots
    o_oh = o_oh_scr[...]

    # ---- gather obj_vecs[s_idx], obj_vecs[o_idx] via exact bf16 one-hot matmuls
    s_vecs = jnp.dot(s_oh, obj_b, preferred_element_type=f32)       # (T, D)
    o_vecs = jnp.dot(o_oh, obj_b, preferred_element_type=f32)       # (T, D)

    # ---- net1 layer 1: three K=D matmuls summed (no concat buffer) ----
    h1 = (jnp.dot(s_vecs.astype(bf16), w1a_s_ref[0], preferred_element_type=f32)
          + jnp.dot(pred.astype(bf16), w1a_p_ref[0], preferred_element_type=f32)
          + jnp.dot(o_vecs.astype(bf16), w1a_o_ref[0], preferred_element_type=f32)
          + b1a_ref[0])
    h1 = jnp.maximum(h1, 0.0)                                        # (T, H)

    # ---- net1 layer 2: one wide-N matmul, lane-aligned column slices ----
    t_out = jnp.dot(h1.astype(bf16), w1b_ref[0],
                    preferred_element_type=f32) + b1b_ref[0]
    t_out = jnp.maximum(t_out, 0.0)                                  # (T, 2H+Dout)
    new_s = t_out[:, :H]
    new_p = t_out[:, H:H + dout]
    new_o = t_out[:, H + dout:]

    # ---- scatter_add + 'avg' pooling: bf16 one-hot^T matmuls, precomputed 1/c
    pooled = (jnp.einsum('tn,th->nh', s_oh, new_s.astype(bf16),
                         preferred_element_type=f32)
              + jnp.einsum('tn,th->nh', o_oh, new_o.astype(bf16),
                           preferred_element_type=f32))
    pooled = pooled * invc_scr[...]                                  # (N, H)

    # ---- net2: Linear -> ReLU -> Linear -> ReLU ----
    h2 = jnp.maximum(
        jnp.dot(pooled.astype(bf16), w2a_ref[0],
                preferred_element_type=f32) + b2a_ref[0], 0.0)
    out = jnp.maximum(
        jnp.dot(h2.astype(bf16), w2b_ref[0],
                preferred_element_type=f32) + b2b_ref[0], 0.0)

    # ---- residual linear projection of the layer-input obj_vecs ----
    out = out + jnp.dot(obj_b, wproj_ref[0],
                        preferred_element_type=f32) + bproj_ref[0]

    # carry state / final outputs
    obj_out_ref[...] = out
    pred_out_ref[...] = new_p


# ---------------------------------------------------------------------------
# Wrapper: pad rows, split w1a into s/p/o K-blocks, single pallas_call over all
# layers with input->output aliasing for the obj/pred state buffers.
# ---------------------------------------------------------------------------
@jax.jit
def graph_triple_conv_net(obj_vecs, pred_vecs, edges, params):
    N, D = obj_vecs.shape
    T, Dp = pred_vecs.shape
    L = params['w2a'].shape[0]
    H = params['w2a'].shape[2]
    Dout = params['wproj'].shape[2]
    assert D == Dout and Dp == Dout, "layer chaining requires D == Dp == Dout"

    # Pad rows so the MXU is filled and sublane/lane alignment is clean.
    # Padded triples get index -1 (all-zero one-hot rows: gather returns zeros,
    # scatter drops the contribution); padded objects are never referenced by
    # real edges and are sliced off at the end.
    ROW_PAD = 128
    Np = max(_round_up(N, ROW_PAD), ROW_PAD)
    Tp = max(_round_up(T, ROW_PAD), ROW_PAD)

    obj_p = jnp.zeros((Np, D), jnp.float32).at[:N].set(obj_vecs.astype(jnp.float32))
    pred_p = jnp.zeros((Tp, Dp), jnp.float32).at[:T].set(pred_vecs.astype(jnp.float32))
    s_idx = jnp.full((Tp, 1), -1, jnp.int32).at[:T, 0].set(edges[:, 0].astype(jnp.int32))
    o_idx = jnp.full((Tp, 1), -1, jnp.int32).at[:T, 0].set(edges[:, 1].astype(jnp.int32))

    # Split net1 layer-1 weight into s / p / o K-blocks (avoids the per-layer
    # concat([s, p, o]) buffer inside the kernel).
    w1a = params['w1a']                     # (L, 2D+Dp, H) bf16
    w1a_s = w1a[:, :D, :]
    w1a_p = w1a[:, D:D + Dp, :]
    w1a_o = w1a[:, D + Dp:, :]

    weight_args = (w1a_s, w1a_p, w1a_o, params['b1a'],
                   params['w1b'], params['b1b'],
                   params['w2a'], params['b2a'], params['w2b'], params['b2b'],
                   params['wproj'], params['bproj'])

    def rep_spec(a):
        # full array, same block every grid step (loaded once, stays in VMEM)
        return pl.BlockSpec(a.shape, lambda l: (0,) * a.ndim)

    def layer_spec(a):
        # leading layer axis streamed / double-buffered per grid step
        return pl.BlockSpec((1,) + a.shape[1:],
                            lambda l: (l,) + (0,) * (a.ndim - 1))

    kernel = functools.partial(fused_gconv_kernel, hidden=H, dout=Dout)

    obj_out, pred_out = pl.pallas_call(
        kernel,
        out_shape=(jax.ShapeDtypeStruct((Np, Dout), jnp.float32),
                   jax.ShapeDtypeStruct((Tp, Dout), jnp.float32)),
        grid_spec=pltpu.PrefetchScalarGridSpec(
            num_scalar_prefetch=0,
            grid=(L,),
            in_specs=[rep_spec(obj_p), rep_spec(pred_p),
                      rep_spec(s_idx), rep_spec(o_idx)]
                     + [layer_spec(w) for w in weight_args],
            out_specs=(pl.BlockSpec((Np, Dout), lambda l: (0, 0)),
                       pl.BlockSpec((Tp, Dout), lambda l: (0, 0))),
            scratch_shapes=[pltpu.VMEM((Tp, Np), jnp.bfloat16),   # s one-hot
                            pltpu.VMEM((Tp, Np), jnp.bfloat16),   # o one-hot
                            pltpu.VMEM((Np, H), jnp.float32)],    # 1/counts (N,H)
        ),
        # obj/pred state is written back in place over the (padded) inputs.
        input_output_aliases={0: 0, 1: 1},
        compiler_params=pltpu.CompilerParams(
            dimension_semantics=("arbitrary",),
            vmem_limit_bytes=48 * 1024 * 1024),
    )(obj_p, pred_p, s_idx, o_idx, *weight_args)

    return obj_out[:N], pred_out[:T]


# ---------------------------------------------------------------------------
# Pure-JAX f32 reference (mirrors the PyTorch forward) for a tolerance check.
# ---------------------------------------------------------------------------
def _reference_forward(obj_vecs, pred_vecs, edges, per_layer):
    obj, pred = obj_vecs, pred_vecs
    s_idx = edges[:, 0]
    o_idx = edges[:, 1]
    for p in per_layer:
        H = p['w2a'].shape[0]
        Dout = p['wproj'].shape[1]
        s_v = obj[s_idx]
        o_v = obj[o_idx]
        cur = jnp.concatenate([s_v, pred, o_v], axis=1)
        h1 = jax.nn.relu(cur @ p['w1a'] + p['b1a'])
        t = jax.nn.relu(h1 @ p['w1b'] + p['b1b'])
        new_s, new_p, new_o = t[:, :H], t[:, H:H + Dout], t[:, H + Dout:]
        Nn = obj.shape[0]
        pooled = jnp.zeros((Nn, H), jnp.float32)
        pooled = pooled.at[s_idx].add(new_s).at[o_idx].add(new_o)
        counts = jnp.zeros((Nn,), jnp.float32).at[s_idx].add(1.0).at[o_idx].add(1.0)
        pooled = pooled / jnp.maximum(counts, 1.0)[:, None]
        h2 = jax.nn.relu(pooled @ p['w2a'] + p['b2a'])
        out = jax.nn.relu(h2 @ p['w2b'] + p['b2b'])
        out = out + obj @ p['wproj'] + p['bproj']
        obj, pred = out, new_p
    return obj, pred


# ---------------------------------------------------------------------------
# Parameter construction (deterministic, synthetic), then layer-stacking.
# ---------------------------------------------------------------------------
def kaiming_normal(key, fan_in, shape):
    std = (2.0 / fan_in) ** 0.5
    return std * jax.random.normal(key, shape, jnp.float32)


def default_bias(key, fan_in, shape):
    bound = 1.0 / (fan_in ** 0.5)
    return jax.random.uniform(key, shape, jnp.float32, minval=-bound, maxval=bound)


def init_layer_params(key, din_obj, din_pred, hidden, dout):
    ks = jax.random.split(key, 10)
    din_cat = 2 * din_obj + din_pred
    H = hidden
    return dict(
        w1a=kaiming_normal(ks[0], din_cat, (din_cat, H)),          # net1 layer 1
        b1a=default_bias(ks[1], din_cat, (1, H)),
        w1b=kaiming_normal(ks[2], H, (H, 2 * H + dout)),           # net1 layer 2
        b1b=default_bias(ks[3], H, (1, 2 * H + dout)),
        w2a=kaiming_normal(ks[4], H, (H, H)),                      # net2 layer 1
        b2a=default_bias(ks[5], H, (1, H)),
        w2b=kaiming_normal(ks[6], H, (H, dout)),                   # net2 layer 2
        b2b=default_bias(ks[7], H, (1, dout)),
        wproj=kaiming_normal(ks[8], din_obj, (din_obj, dout)),     # residual proj
        bproj=default_bias(ks[9], din_obj, (1, dout)),
    )


def stack_layer_params(per_layer, weight_dtype=jnp.bfloat16):
    """Stack per-layer dicts along a leading layer axis; weights -> bf16."""
    stacked = {}
    for name in per_layer[0]:
        arr = jnp.stack([p[name] for p in per_layer], axis=0)
        if name.startswith('w'):
            arr = arr.astype(weight_dtype)   # biases stay f32
        stacked[name] = arr
    return stacked


if __name__ == "__main__":
    # Small graph; the wrapper pads rows to 128 internally. Feature dims are
    # lane-dense (multiples of 128); output_dim defaults to input_dim_obj.
    NUM_OBJS = 20
    NUM_TRIPLES = 30
    DIN_OBJ = 128
    DIN_PRED = 128
    HIDDEN = 128
    NUM_LAYERS = 2
    DOUT = DIN_OBJ

    key = jax.random.PRNGKey(0)
    k_obj, k_pred, k_s, k_o, k_params = jax.random.split(key, 5)

    obj_vecs = jax.random.normal(k_obj, (NUM_OBJS, DIN_OBJ), jnp.float32)
    pred_vecs = jax.random.normal(k_pred, (NUM_TRIPLES, DIN_PRED), jnp.float32)
    edges = jnp.stack(
        [jax.random.randint(k_s, (NUM_TRIPLES,), 0, NUM_OBJS),
         jax.random.randint(k_o, (NUM_TRIPLES,), 0, NUM_OBJS)], axis=1
    ).astype(jnp.int32)

    layer_keys = jax.random.split(k_params, NUM_LAYERS)
    per_layer = [init_layer_params(layer_keys[i], DIN_OBJ, DIN_PRED, HIDDEN, DOUT)
                 for i in range(NUM_LAYERS)]
    params = stack_layer_params(per_layer)

    new_obj, new_pred = graph_triple_conv_net(obj_vecs, pred_vecs, edges, params)
    jax.block_until_ready((new_obj, new_pred))

    assert new_obj.shape == (NUM_OBJS, DOUT)
    assert new_pred.shape == (NUM_TRIPLES, DOUT)
    assert bool(jnp.all(jnp.isfinite(new_obj)))
    assert bool(jnp.all(jnp.isfinite(new_pred)))

    # bf16-weight tolerance check against an f32 pure-JAX reference.
    ref_obj, ref_pred = _reference_forward(obj_vecs, pred_vecs, edges, per_layer)

    def rel_err(a, b):
        return float(jnp.linalg.norm(a - b) / (jnp.linalg.norm(b) + 1e-12))

    assert rel_err(new_obj, ref_obj) < 5e-2
    assert rel_err(new_pred, ref_pred) < 5e-2

    print("KERNEL_OK")
</pallas_src>

<mosaic_0001>
module attributes {stable_mosaic.version = 11 : i64} {
  func.func @fused_gconv_kernel(%arg0: i32, %arg1: memref<128x128xf32, #tpu.memory_space<vmem>>, %arg2: memref<128x128xf32, #tpu.memory_space<vmem>>, %arg3: memref<128x1xi32, #tpu.memory_space<vmem>>, %arg4: memref<128x1xi32, #tpu.memory_space<vmem>>, %arg5: memref<1x128x128xbf16, #tpu.memory_space<vmem>>, %arg6: memref<1x128x128xbf16, #tpu.memory_space<vmem>>, %arg7: memref<1x128x128xbf16, #tpu.memory_space<vmem>>, %arg8: memref<1x1x128xf32, #tpu.memory_space<vmem>>, %arg9: memref<1x128x384xbf16, #tpu.memory_space<vmem>>, %arg10: memref<1x1x384xf32, #tpu.memory_space<vmem>>, %arg11: memref<1x128x128xbf16, #tpu.memory_space<vmem>>, %arg12: memref<1x1x128xf32, #tpu.memory_space<vmem>>, %arg13: memref<1x128x128xbf16, #tpu.memory_space<vmem>>, %arg14: memref<1x1x128xf32, #tpu.memory_space<vmem>>, %arg15: memref<1x128x128xbf16, #tpu.memory_space<vmem>>, %arg16: memref<1x1x128xf32, #tpu.memory_space<vmem>>, %arg17: memref<128x128xf32, #tpu.memory_space<vmem>>, %arg18: memref<128x128xf32, #tpu.memory_space<vmem>>, %arg19: memref<128x128xbf16, #tpu.memory_space<vmem>>, %arg20: memref<128x128xbf16, #tpu.memory_space<vmem>>, %arg21: memref<128x128xf32, #tpu.memory_space<vmem>>) attributes {dimension_semantics = [#tpu.dimension_semantics<arbitrary>], iteration_bounds = array<i64: 2>, scalar_prefetch = 0 : i64, scratch_operands = 3 : i64, tpu.core_type = #tpu.core_type<tc>, window_params = [{pipeline_mode = #tpu.pipeline_mode<synchronous>, transform_indices = @transform_0, window_bounds = array<i64: 128, 128>}, {pipeline_mode = #tpu.pipeline_mode<synchronous>, transform_indices = @transform_1, window_bounds = array<i64: 128, 128>}, {pipeline_mode = #tpu.pipeline_mode<synchronous>, transform_indices = @transform_2, window_bounds = array<i64: 128, 1>}, {pipeline_mode = #tpu.pipeline_mode<synchronous>, transform_indices = @transform_3, window_bounds = array<i64: 128, 1>}, {transform_indices = @transform_4, window_bounds = array<i64: 1, 128, 128>}, {transform_indices = @transform_5, window_bounds = array<i64: 1, 128, 128>}, {transform_indices = @transform_6, window_bounds = array<i64: 1, 128, 128>}, {transform_indices = @transform_7, window_bounds = array<i64: 1, 1, 128>}, {transform_indices = @transform_8, window_bounds = array<i64: 1, 128, 384>}, {transform_indices = @transform_9, window_bounds = array<i64: 1, 1, 384>}, {transform_indices = @transform_10, window_bounds = array<i64: 1, 128, 128>}, {transform_indices = @transform_11, window_bounds = array<i64: 1, 1, 128>}, {transform_indices = @transform_12, window_bounds = array<i64: 1, 128, 128>}, {transform_indices = @transform_13, window_bounds = array<i64: 1, 1, 128>}, {transform_indices = @transform_14, window_bounds = array<i64: 1, 128, 128>}, {transform_indices = @transform_15, window_bounds = array<i64: 1, 1, 128>}, {pipeline_mode = #tpu.pipeline_mode<synchronous>, transform_indices = @transform_16, window_bounds = array<i64: 128, 128>}, {pipeline_mode = #tpu.pipeline_mode<synchronous>, transform_indices = @transform_17, window_bounds = array<i64: 128, 128>}]} {
    %c0_i32 = arith.constant 0 : i32
    %0 = arith.cmpi eq, %arg0, %c0_i32 : i32
    %1 = arith.extui %0 : i1 to i32
    %c0_i32_0 = arith.constant 0 : i32
    %2 = arith.cmpi ne, %1, %c0_i32_0 : i32
    scf.if %2 {
      %c0_64 = arith.constant 0 : index
      %c0_65 = arith.constant 0 : index
      %80 = vector.load %arg1[%c0_64, %c0_65] : memref<128x128xf32, #tpu.memory_space<vmem>>, vector<128x128xf32>
      %c0_66 = arith.constant 0 : index
      %c0_67 = arith.constant 0 : index
      %81 = vector.load %arg17[%c0_66, %c0_67] : memref<128x128xf32, #tpu.memory_space<vmem>>, vector<128x128xf32>
      tpu.vector_store %arg17[%c0_66, %c0_67], %80 {strides = array<i32>} : memref<128x128xf32, #tpu.memory_space<vmem>>, vector<128x128xf32>,
      %c0_68 = arith.constant 0 : index
      %c0_69 = arith.constant 0 : index
      %82 = vector.load %arg2[%c0_68, %c0_69] : memref<128x128xf32, #tpu.memory_space<vmem>>, vector<128x128xf32>
      %c0_70 = arith.constant 0 : index
      %c0_71 = arith.constant 0 : index
      %83 = vector.load %arg18[%c0_70, %c0_71] : memref<128x128xf32, #tpu.memory_space<vmem>>, vector<128x128xf32>
      tpu.vector_store %arg18[%c0_70, %c0_71], %82 {strides = array<i32>} : memref<128x128xf32, #tpu.memory_space<vmem>>, vector<128x128xf32>,
      %84 = tpu.iota {dimensions = array<i32: 1>} : vector<128x128xi32>
      %c0_72 = arith.constant 0 : index
      %c0_73 = arith.constant 0 : index
      %85 = vector.load %arg3[%c0_72, %c0_73] : memref<128x1xi32, #tpu.memory_space<vmem>>, vector<128x1xi32>
      %86 = vector.broadcast %85 : vector<128x1xi32> to vector<128x128xi32>
      %87 = arith.cmpi eq, %84, %86 : vector<128x128xi32>
      %88 = arith.extui %87 : vector<128x128xi1> to vector<128x128xi32>
      %89 = arith.sitofp %88 : vector<128x128xi32> to vector<128x128xf32>
      %c0_74 = arith.constant 0 : index
      %c0_75 = arith.constant 0 : index
      %90 = vector.load %arg4[%c0_74, %c0_75] : memref<128x1xi32, #tpu.memory_space<vmem>>, vector<128x1xi32>
      %91 = vector.broadcast %90 : vector<128x1xi32> to vector<128x128xi32>
      %92 = arith.cmpi eq, %84, %91 : vector<128x128xi32>
      %93 = arith.extui %92 : vector<128x128xi1> to vector<128x128xi32>
      %94 = arith.sitofp %93 : vector<128x128xi32> to vector<128x128xf32>
      %95 = arith.truncf %89 : vector<128x128xf32> to vector<128x128xbf16>
      %c0_76 = arith.constant 0 : index
      %c0_77 = arith.constant 0 : index
      %96 = vector.load %arg19[%c0_76, %c0_77] : memref<128x128xbf16, #tpu.memory_space<vmem>>, vector<128x128xbf16>
      tpu.vector_store %arg19[%c0_76, %c0_77], %95 {strides = array<i32>} : memref<128x128xbf16, #tpu.memory_space<vmem>>, vector<128x128xbf16>,
      %97 = arith.truncf %94 : vector<128x128xf32> to vector<128x128xbf16>
      %c0_78 = arith.constant 0 : index
      %c0_79 = arith.constant 0 : index
      %98 = vector.load %arg20[%c0_78, %c0_79] : memref<128x128xbf16, #tpu.memory_space<vmem>>, vector<128x128xbf16>
      tpu.vector_store %arg20[%c0_78, %c0_79], %97 {strides = array<i32>} : memref<128x128xbf16, #tpu.memory_space<vmem>>, vector<128x128xbf16>,
      %99 = arith.addf %89, %94 : vector<128x128xf32>
      %cst_80 = arith.constant 1.000000e+00 : f32
      %100 = vector.broadcast %cst_80 : f32 to vector<128x128xf32>
      "tpu.trace_start"() <{level = 10 : i32, message = "tn,th->nh"}> : () -> ()
      %cst_81 = arith.constant dense<0.000000e+00> : vector<128x128xf32>
      %101 = tpu.matmul %99, %100, %cst_81 {dimension_numbers = #tpu.dot_dimension_numbers<[0], [0], [1], [1], [0, 1, 1, 1], [], []>} : vector<128x128xf32>, vector<128x128xf32>, vector<128x128xf32> -> vector<128x128xf32>
      "tpu.trace_stop"() : () -> ()
      %cst_82 = arith.constant 1.000000e+00 : f32
      %102 = vector.broadcast %cst_82 : f32 to vector<128x128xf32>
      %103 = arith.maximumf %101, %102 : vector<128x128xf32>
      %cst_83 = arith.constant 1.000000e+00 : f32
      %104 = vector.broadcast %cst_83 : f32 to vector<128x128xf32>
      %105 = arith.divf %104, %103 : vector<128x128xf32>
      %c0_84 = arith.constant 0 : index
      %c0_85 = arith.constant 0 : index
      %106 = vector.load %arg21[%c0_84, %c0_85] : memref<128x128xf32, #tpu.memory_space<vmem>>, vector<128x128xf32>
      tpu.vector_store %arg21[%c0_84, %c0_85], %105 {strides = array<i32>} : memref<128x128xf32, #tpu.memory_space<vmem>>, vector<128x128xf32>,
    } else {
    }
    %c0 = arith.constant 0 : index
    %c0_1 = arith.constant 0 : index
    %3 = vector.load %arg17[%c0, %c0_1] : memref<128x128xf32, #tpu.memory_space<vmem>>, vector<128x128xf32>
    %c0_2 = arith.constant 0 : index
    %c0_3 = arith.constant 0 : index
    %4 = vector.load %arg18[%c0_2, %c0_3] : memref<128x128xf32, #tpu.memory_space<vmem>>, vector<128x128xf32>
    %5 = arith.truncf %3 : vector<128x128xf32> to vector<128x128xbf16>
    %c0_4 = arith.constant 0 : index
    %c0_5 = arith.constant 0 : index
    %6 = vector.load %arg19[%c0_4, %c0_5] : memref<128x128xbf16, #tpu.memory_space<vmem>>, vector<128x128xbf16>
    %c0_6 = arith.constant 0 : index
    %c0_7 = arith.constant 0 : index
    %7 = vector.load %arg20[%c0_6, %c0_7] : memref<128x128xbf16, #tpu.memory_space<vmem>>, vector<128x128xbf16>
    %cst = arith.constant dense<0.000000e+00> : vector<128x128xf32>
    %8 = tpu.matmul %6, %5, %cst {dimension_numbers = #tpu.dot_dimension_numbers<[1], [0], [0], [1], [0, 0, 1, 1], [], []>} : vector<128x128xbf16>, vector<128x128xbf16>, vector<128x128xf32> -> vector<128x128xf32>
    %cst_8 = arith.constant dense<0.000000e+00> : vector<128x128xf32>
    %9 = tpu.matmul %7, %5, %cst_8 {dimension_numbers = #tpu.dot_dimension_numbers<[1], [0], [0], [1], [0, 0, 1, 1], [], []>} : vector<128x128xbf16>, vector<128x128xbf16>, vector<128x128xf32> -> vector<128x128xf32>
    %10 = arith.truncf %8 : vector<128x128xf32> to vector<128x128xbf16>
    %c0_9 = arith.constant 0 : index
    %c0_10 = arith.constant 0 : index
    %c0_11 = arith.constant 0 : index
    %11 = vector.load %arg5[%c0_9, %c0_10, %c0_11] : memref<1x128x128xbf16, #tpu.memory_space<vmem>>, vector<1x128x128xbf16>
    %12 = vector.shape_cast %11 : vector<1x128x128xbf16> to vector<128x128xbf16>
    %cst_12 = arith.constant dense<0.000000e+00> : vector<128x128xf32>
    %13 = tpu.matmul %10, %12, %cst_12 {dimension_numbers = #tpu.dot_dimension_numbers<[1], [0], [0], [1], [0, 0, 1, 1], [], []>} : vector<128x128xbf16>, vector<128x128xbf16>, vector<128x128xf32> -> vector<128x128xf32>
    %14 = arith.truncf %4 : vector<128x128xf32> to vector<128x128xbf16>
    %c0_13 = arith.constant 0 : index
    %c0_14 = arith.constant 0 : index
    %c0_15 = arith.constant 0 : index
    %15 = vector.load %arg6[%c0_13, %c0_14, %c0_15] : memref<1x128x128xbf16, #tpu.memory_space<vmem>>, vector<1x128x128xbf16>
    %16 = vector.shape_cast %15 : vector<1x128x128xbf16> to vector<128x128xbf16>
    %cst_16 = arith.constant dense<0.000000e+00> : vector<128x128xf32>
    %17 = tpu.matmul %14, %16, %cst_16 {dimension_numbers = #tpu.dot_dimension_numbers<[1], [0], [0], [1], [0, 0, 1, 1], [], []>} : vector<128x128xbf16>, vector<128x128xbf16>, vector<128x128xf32> -> vector<128x128xf32>
    %18 = arith.addf %13, %17 : vector<128x128xf32>
    %19 = arith.truncf %9 : vector<128x128xf32> to vector<128x128xbf16>
    %c0_17 = arith.constant 0 : index
    %c0_18 = arith.constant 0 : index
    %c0_19 = arith.constant 0 : index
    %20 = vector.load %arg7[%c0_17, %c0_18, %c0_19] : memref<1x128x128xbf16, #tpu.memory_space<vmem>>, vector<1x128x128xbf16>
    %21 = vector.shape_cast %20 : vector<1x128x128xbf16> to vector<128x128xbf16>
    %cst_20 = arith.constant dense<0.000000e+00> : vector<128x128xf32>
    %22 = tpu.matmul %19, %21, %cst_20 {dimension_numbers = #tpu.dot_dimension_numbers<[1], [0], [0], [1], [0, 0, 1, 1], [], []>} : vector<128x128xbf16>, vector<128x128xbf16>, vector<128x128xf32> -> vector<128x128xf32>
    %23 = arith.addf %18, %22 : vector<128x128xf32>
    %c0_21 = arith.constant 0 : index
    %c0_22 = arith.constant 0 : index
    %c0_23 = arith.constant 0 : index
    %24 = vector.load %arg8[%c0_21, %c0_22, %c0_23] : memref<1x1x128xf32, #tpu.memory_space<vmem>>, vector<1x1x128xf32>
    %25 = vector.shape_cast %24 : vector<1x1x128xf32> to vector<1x128xf32>
    %26 = vector.broadcast %25 : vector<1x128xf32> to vector<128x128xf32>
    %27 = arith.addf %23, %26 : vector<128x128xf32>
    %cst_24 = arith.constant 0.000000e+00 : f32
    %28 = vector.broadcast %cst_24 : f32 to vector<128x128xf32>
    %29 = arith.maximumf %27, %28 : vector<128x128xf32>
    %30 = arith.truncf %29 : vector<128x128xf32> to vector<128x128xbf16>
    %c0_25 = arith.constant 0 : index
    %c0_26 = arith.constant 0 : index
    %c0_27 = arith.constant 0 : index
    %31 = vector.load %arg9[%c0_25, %c0_26, %c0_27] : memref<1x128x384xbf16, #tpu.memory_space<vmem>>, vector<1x128x384xbf16>
    %32 = vector.shape_cast %31 : vector<1x128x384xbf16> to vector<128x384xbf16>
    %cst_28 = arith.constant dense<0.000000e+00> : vector<128x384xf32>
    %33 = tpu.matmul %30, %32, %cst_28 {dimension_numbers = #tpu.dot_dimension_numbers<[1], [0], [0], [1], [0, 0, 1, 1], [], []>} : vector<128x128xbf16>, vector<128x384xbf16>, vector<128x384xf32> -> vector<128x384xf32>
    %c0_29 = arith.constant 0 : index
    %c0_30 = arith.constant 0 : index
    %c0_31 = arith.constant 0 : index
    %34 = vector.load %arg10[%c0_29, %c0_30, %c0_31] : memref<1x1x384xf32, #tpu.memory_space<vmem>>, vector<1x1x384xf32>
    %35 = vector.shape_cast %34 : vector<1x1x384xf32> to vector<1x384xf32>
    %36 = vector.broadcast %35 : vector<1x384xf32> to vector<128x384xf32>
    %37 = arith.addf %33, %36 : vector<128x384xf32>
    %cst_32 = arith.constant 0.000000e+00 : f32
    %38 = vector.broadcast %cst_32 : f32 to vector<128x384xf32>
    %39 = arith.maximumf %37, %38 : vector<128x384xf32>
    %40 = vector.extract_strided_slice %39 {offsets = [0, 0], sizes = [128, 128], strides = [1, 1]} : vector<128x384xf32> to vector<128x128xf32>
    %41 = vector.extract_strided_slice %39 {offsets = [0, 128], sizes = [128, 128], strides = [1, 1]} : vector<128x384xf32> to vector<128x128xf32>
    %42 = vector.extract_strided_slice %39 {offsets = [0, 256], sizes = [128, 128], strides = [1, 1]} : vector<128x384xf32> to vector<128x128xf32>
    %43 = arith.truncf %40 : vector<128x128xf32> to vector<128x128xbf16>
    "tpu.trace_start"() <{level = 10 : i32, message = "tn,th->nh"}> : () -> ()
    %cst_33 = arith.constant dense<0.000000e+00> : vector<128x128xf32>
    %44 = tpu.matmul %6, %43, %cst_33 {dimension_numbers = #tpu.dot_dimension_numbers<[0], [0], [1], [1], [0, 1, 1, 1], [], []>} : vector<128x128xbf16>, vector<128x128xbf16>, vector<128x128xf32> -> vector<128x128xf32>
    "tpu.trace_stop"() : () -> ()
    %45 = arith.truncf %42 : vector<128x128xf32> to vector<128x128xbf16>
    "tpu.trace_start"() <{level = 10 : i32, message = "tn,th->nh"}> : () -> ()
    %cst_34 = arith.constant dense<0.000000e+00> : vector<128x128xf32>
    %46 = tpu.matmul %7, %45, %cst_34 {dimension_numbers = #tpu.dot_dimension_numbers<[0], [0], [1], [1], [0, 1, 1, 1], [], []>} : vector<128x128xbf16>, vector<128x128xbf16>, vector<128x128xf32> -> vector<128x128xf32>
    "tpu.trace_stop"() : () -> ()
    %47 = arith.addf %44, %46 : vector<128x128xf32>
    %c0_35 = arith.constant 0 : index
    %c0_36 = arith.constant 0 : index
    %48 = vector.load %arg21[%c0_35, %c0_36] : memref<128x128xf32, #tpu.memory_space<vmem>>, vector<128x128xf32>
    %49 = arith.mulf %47, %48 : vector<128x128xf32>
    %50 = arith.truncf %49 : vector<128x128xf32> to vector<128x128xbf16>
    %c0_37 = arith.constant 0 : index
    %c0_38 = arith.constant 0 : index
    %c0_39 = arith.constant 0 : index
    %51 = vector.load %arg11[%c0_37, %c0_38, %c0_39] : memref<1x128x128xbf16, #tpu.memory_space<vmem>>, vector<1x128x128xbf16>
    %52 = vector.shape_cast %51 : vector<1x128x128xbf16> to vector<128x128xbf16>
    %cst_40 = arith.constant dense<0.000000e+00> : vector<128x128xf32>
    %53 = tpu.matmul %50, %52, %cst_40 {dimension_numbers = #tpu.dot_dimension_numbers<[1], [0], [0], [1], [0, 0, 1, 1], [], []>} : vector<128x128xbf16>, vector<128x128xbf16>, vector<128x128xf32> -> vector<128x128xf32>
    %c0_41 = arith.constant 0 : index
    %c0_42 = arith.constant 0 : index
    %c0_43 = arith.constant 0 : index
    %54 = vector.load %arg12[%c0_41, %c0_42, %c0_43] : memref<1x1x128xf32, #tpu.memory_space<vmem>>, vector<1x1x128xf32>
    %55 = vector.shape_cast %54 : vector<1x1x128xf32> to vector<1x128xf32>
    %56 = vector.broadcast %55 : vector<1x128xf32> to vector<128x128xf32>
    %57 = arith.addf %53, %56 : vector<128x128xf32>
    %cst_44 = arith.constant 0.000000e+00 : f32
    %58 = vector.broadcast %cst_44 : f32 to vector<128x128xf32>
    %59 = arith.maximumf %57, %58 : vector<128x128xf32>
    %60 = arith.truncf %59 : vector<128x128xf32> to vector<128x128xbf16>
    %c0_45 = arith.constant 0 : index
    %c0_46 = arith.constant 0 : index
    %c0_47 = arith.constant 0 : index
    %61 = vector.load %arg13[%c0_45, %c0_46, %c0_47] : memref<1x128x128xbf16, #tpu.memory_space<vmem>>, vector<1x128x128xbf16>
    %62 = vector.shape_cast %61 : vector<1x128x128xbf16> to vector<128x128xbf16>
    %cst_48 = arith.constant dense<0.000000e+00> : vector<128x128xf32>
    %63 = tpu.matmul %60, %62, %cst_48 {dimension_numbers = #tpu.dot_dimension_numbers<[1], [0], [0], [1], [0, 0, 1, 1], [], []>} : vector<128x128xbf16>, vector<128x128xbf16>, vector<128x128xf32> -> vector<128x128xf32>
    %c0_49 = arith.constant 0 : index
    %c0_50 = arith.constant 0 : index
    %c0_51 = arith.constant 0 : index
    %64 = vector.load %arg14[%c0_49, %c0_50, %c0_51] : memref<1x1x128xf32, #tpu.memory_space<vmem>>, vector<1x1x128xf32>
    %65 = vector.shape_cast %64 : vector<1x1x128xf32> to vector<1x128xf32>
    %66 = vector.broadcast %65 : vector<1x128xf32> to vector<128x128xf32>
    %67 = arith.addf %63, %66 : vector<128x128xf32>
    %cst_52 = arith.constant 0.000000e+00 : f32
    %68 = vector.broadcast %cst_52 : f32 to vector<128x128xf32>
    %69 = arith.maximumf %67, %68 : vector<128x128xf32>
    %c0_53 = arith.constant 0 : index
    %c0_54 = arith.constant 0 : index
    %c0_55 = arith.constant 0 : index
    %70 = vector.load %arg15[%c0_53, %c0_54, %c0_55] : memref<1x128x128xbf16, #tpu.memory_space<vmem>>, vector<1x128x128xbf16>
    %71 = vector.shape_cast %70 : vector<1x128x128xbf16> to vector<128x128xbf16>
    %cst_56 = arith.constant dense<0.000000e+00> : vector<128x128xf32>
    %72 = tpu.matmul %5, %71, %cst_56 {dimension_numbers = #tpu.dot_dimension_numbers<[1], [0], [0], [1], [0, 0, 1, 1], [], []>} : vector<128x128xbf16>, vector<128x128xbf16>, vector<128x128xf32> -> vector<128x128xf32>
    %73 = arith.addf %69, %72 : vector<128x128xf32>
    %c0_57 = arith.constant 0 : index
    %c0_58 = arith.constant 0 : index
    %c0_59 = arith.constant 0 : index
    %74 = vector.load %arg16[%c0_57, %c0_58, %c0_59] : memref<1x1x128xf32, #tpu.memory_space<vmem>>, vector<1x1x128xf32>
    %75 = vector.shape_cast %74 : vector<1x1x128xf32> to vector<1x128xf32>
    %76 = vector.broadcast %75 : vector<1x128xf32> to vector<128x128xf32>
    %77 = arith.addf %73, %76 : vector<128x128xf32>
    %c0_60 = arith.constant 0 : index
    %c0_61 = arith.constant 0 : index
    %78 = vector.load %arg17[%c0_60, %c0_61] : memref<128x128xf32, #tpu.memory_space<vmem>>, vector<128x128xf32>
    tpu.vector_store %arg17[%c0_60, %c0_61], %77 {strides = array<i32>} : memref<128x128xf32, #tpu.memory_space<vmem>>, vector<128x128xf32>,
    %c0_62 = arith.constant 0 : index
    %c0_63 = arith.constant 0 : index
    %79 = vector.load %arg18[%c0_62, %c0_63] : memref<128x128xf32, #tpu.memory_space<vmem>>, vector<128x128xf32>
    tpu.vector_store %arg18[%c0_62, %c0_63], %41 {strides = array<i32>} : memref<128x128xf32, #tpu.memory_space<vmem>>, vector<128x128xf32>,
    return
  }
  func.func @transform_0(%arg0: i32) -> (i32, i32) {
    %c0_i32 = arith.constant 0 : i32
    %c0_i32_0 = arith.constant 0 : i32
    %c0_i32_1 = arith.constant 0 : i32
    return %c0_i32, %c0_i32_0 : i32, i32
  }
  func.func @transform_1(%arg0: i32) -> (i32, i32) {
    %c0_i32 = arith.constant 0 : i32
    %c0_i32_0 = arith.constant 0 : i32
    %c0_i32_1 = arith.constant 0 : i32
    return %c0_i32, %c0_i32_0 : i32, i32
  }
  func.func @transform_2(%arg0: i32) -> (i32, i32) {
    %c0_i32 = arith.constant 0 : i32
    %c0_i32_0 = arith.constant 0 : i32
    %c0_i32_1 = arith.constant 0 : i32
    return %c0_i32, %c0_i32_0 : i32, i32
  }
  func.func @transform_3(%arg0: i32) -> (i32, i32) {
    %c0_i32 = arith.constant 0 : i32
    %c0_i32_0 = arith.constant 0 : i32
    %c0_i32_1 = arith.constant 0 : i32
    return %c0_i32, %c0_i32_0 : i32, i32
  }
  func.func @transform_4(%arg0: i32) -> (i32, i32, i32) {
    %c0_i32 = arith.constant 0 : i32
    %c0_i32_0 = arith.constant 0 : i32
    %c0_i32_1 = arith.constant 0 : i32
    return %arg0, %c0_i32, %c0_i32_0 : i32, i32, i32
  }
  func.func @transform_5(%arg0: i32) -> (i32, i32, i32) {
    %c0_i32 = arith.constant 0 : i32
    %c0_i32_0 = arith.constant 0 : i32
    %c0_i32_1 = arith.constant 0 : i32
    return %arg0, %c0_i32, %c0_i32_0 : i32, i32, i32
  }
  func.func @transform_6(%arg0: i32) -> (i32, i32, i32) {
    %c0_i32 = arith.constant 0 : i32
    %c0_i32_0 = arith.constant 0 : i32
    %c0_i32_1 = arith.constant 0 : i32
    return %arg0, %c0_i32, %c0_i32_0 : i32, i32, i32
  }
  func.func @transform_7(%arg0: i32) -> (i32, i32, i32) {
    %c0_i32 = arith.constant 0 : i32
    %c0_i32_0 = arith.constant 0 : i32
    %c0_i32_1 = arith.constant 0 : i32
    return %arg0, %c0_i32, %c0_i32_0 : i32, i32, i32
  }
  func.func @transform_8(%arg0: i32) -> (i32, i32, i32) {
    %c0_i32 = arith.constant 0 : i32
    %c0_i32_0 = arith.constant 0 : i32
    %c0_i32_1 = arith.constant 0 : i32
    return %arg0, %c0_i32, %c0_i32_0 : i32, i32, i32
  }
  func.func @transform_9(%arg0: i32) -> (i32, i32, i32) {
    %c0_i32 = arith.constant 0 : i32
    %c0_i32_0 = arith.constant 0 : i32
    %c0_i32_1 = arith.constant 0 : i32
    return %arg0, %c0_i32, %c0_i32_0 : i32, i32, i32
  }
  func.func @transform_10(%arg0: i32) -> (i32, i32, i32) {
    %c0_i32 = arith.constant 0 : i32
    %c0_i32_0 = arith.constant 0 : i32
    %c0_i32_1 = arith.constant 0 : i32
    return %arg0, %c0_i32, %c0_i32_0 : i32, i32, i32
  }
  func.func @transform_11(%arg0: i32) -> (i32, i32, i32) {
    %c0_i32 = arith.constant 0 : i32
    %c0_i32_0 = arith.constant 0 : i32
    %c0_i32_1 = arith.constant 0 : i32
    return %arg0, %c0_i32, %c0_i32_0 : i32, i32, i32
  }
  func.func @transform_12(%arg0: i32) -> (i32, i32, i32) {
    %c0_i32 = arith.constant 0 : i32
    %c0_i32_0 = arith.constant 0 : i32
    %c0_i32_1 = arith.constant 0 : i32
    return %arg0, %c0_i32, %c0_i32_0 : i32, i32, i32
  }
  func.func @transform_13(%arg0: i32) -> (i32, i32, i32) {
    %c0_i32 = arith.constant 0 : i32
    %c0_i32_0 = arith.constant 0 : i32
    %c0_i32_1 = arith.constant 0 : i32
    return %arg0, %c0_i32, %c0_i32_0 : i32, i32, i32
  }
  func.func @transform_14(%arg0: i32) -> (i32, i32, i32) {
    %c0_i32 = arith.constant 0 : i32
    %c0_i32_0 = arith.constant 0 : i32
    %c0_i32_1 = arith.constant 0 : i32
    return %arg0, %c0_i32, %c0_i32_0 : i32, i32, i32
  }
  func.func @transform_15(%arg0: i32) -> (i32, i32, i32) {
    %c0_i32 = arith.constant 0 : i32
    %c0_i32_0 = arith.constant 0 : i32
    %c0_i32_1 = arith.constant 0 : i32
    return %arg0, %c0_i32, %c0_i32_0 : i32, i32, i32
  }
  func.func @transform_16(%arg0: i32) -> (i32, i32) {
    %c0_i32 = arith.constant 0 : i32
    %c0_i32_0 = arith.constant 0 : i32
    %c0_i32_1 = arith.constant 0 : i32
    return %c0_i32, %c0_i32_0 : i32, i32
  }
  func.func @transform_17(%arg0: i32) -> (i32, i32) {
    %c0_i32 = arith.constant 0 : i32
    %c0_i32_0 = arith.constant 0 : i32
    %c0_i32_1 = arith.constant 0 : i32
    return %c0_i32, %c0_i32_0 : i32, i32
  }
}

</mosaic_0001>

<llo_original>
// kernel: graph_triple_conv_net.1
$region0: #{graph_triple_conv_net.1}
  #allocation0 [shape = 'u32[]', space=smem, size = 0x4, offset = 0x4, fixed_abs, tag = 'smem constant byte address 0x4 - core index']
  #allocation1 [shape = 'u32[72,128]{1,0:T(1,128)}', space=vmem, size = 0x9000, scoped, tag = 'internal scratch']
  #allocation2 [shape = 'bf16[128,128]{1,0:T(8,128)(2,1)}', space=vmem, size = 0x8000, scoped, tag = 'scratch operand']
  #allocation3 [shape = 'bf16[128,128]{1,0:T(8,128)(2,1)}', space=vmem, size = 0x8000, scoped, tag = 'scratch operand']
  #allocation4 [shape = 'f32[128,128]{1,0:T(8,128)}', space=vmem, size = 0x10000, scoped, tag = 'scratch operand']
  %s0 = inlined_call_operand.vmem [shape: f32[128,128], index: 0, kind: input, shape index: {}, may-alias: {0,16}]
  %s1 = inlined_call_operand.vmem [shape: f32[128,128], index: 1, kind: input, shape index: {}, may-alias: {1,17}]
  %s2 = inlined_call_operand.vmem [shape: s32[128,1], index: 2, kind: input, shape index: {}]
  %s3 = inlined_call_operand.vmem [shape: s32[128,1], index: 3, kind: input, shape index: {}]
  %s4 = inlined_call_operand.vmem [shape: bf16[2,128,128], index: 4, kind: input, shape index: {}]
  %s5 = inlined_call_operand.vmem [shape: bf16[2,128,128], index: 5, kind: input, shape index: {}]
  %s6 = inlined_call_operand.vmem [shape: bf16[2,128,128], index: 6, kind: input, shape index: {}]
  %s7 = inlined_call_operand.vmem [shape: f32[2,1,128], index: 7, kind: input, shape index: {}]
  %s8 = inlined_call_operand.vmem [shape: bf16[2,128,384], index: 8, kind: input, shape index: {}]
  %s9 = inlined_call_operand.vmem [shape: f32[2,1,384], index: 9, kind: input, shape index: {}]
  %s10 = inlined_call_operand.vmem [shape: bf16[2,128,128], index: 10, kind: input, shape index: {}]
  %s11 = inlined_call_operand.vmem [shape: f32[2,1,128], index: 11, kind: input, shape index: {}]
  %s12 = inlined_call_operand.vmem [shape: bf16[2,128,128], index: 12, kind: input, shape index: {}]
  %s13 = inlined_call_operand.vmem [shape: f32[2,1,128], index: 13, kind: input, shape index: {}]
  %s14 = inlined_call_operand.vmem [shape: bf16[2,128,128], index: 14, kind: input, shape index: {}]
  %s15 = inlined_call_operand.vmem [shape: f32[2,1,128], index: 15, kind: input, shape index: {}]
  %s16 = inlined_call_operand.vmem [shape: f32[128,128], index: 16, kind: output, shape index: {0}, may-alias: {0,16}]
  %s17 = inlined_call_operand.vmem [shape: f32[128,128], index: 17, kind: output, shape index: {1}, may-alias: {1,17}]
  %18 = xla_tuple %s16, %s17
  %s19 = sld [smem:[#allocation0]]
  $region109: #{graph_triple_conv_net.1} parent=0
    _
  %s21 = ssub.s32 1, %s19
  %s22 = scalar_select 0, %s21, %s19
  loop: start=0, step=1, limit=4
  $region2: #{graph_triple_conv_net.1} parent=0 // loop_pre_header
    _
  $region3: #{graph_triple_conv_net.1} parent=0 // loop_header
    %s24 = sphi 0, %s28
    %p25 = scmp.ge.s32.totalorder %s24, 4
    %s32 = sphi 0, %s32
    %s34 = sphi 0, %s32
    %s35 = sphi 0, %s34
    %s49 = sphi 0, %s35
    %s53 = sphi 0, %s53
    %s55 = sphi 0, %s53
    %s56 = sphi 0, %s55
    %s70 = sphi 0, %s56
    %s74 = sphi 0, %s74
    %s76 = sphi 0, %s74
    %s77 = sphi 0, %s76
    %s91 = sphi 0, %s77
    %s95 = sphi 0, %s95
    %s97 = sphi 0, %s95
    %s98 = sphi 0, %s97
    %s112 = sphi 0, %s98
    %s118 = sphi 0, %s120
    %s121 = sphi 0, %s118
    %s122 = sphi 0, %s121
    %s138 = sphi 0, %s122
    %s144 = sphi 0, %s146
    %s147 = sphi 0, %s144
    %s148 = sphi 0, %s147
    %s164 = sphi 0, %s148
    %s170 = sphi 0, %s172
    %s173 = sphi 0, %s170
    %s174 = sphi 0, %s173
    %s190 = sphi 0, %s174
    %s196 = sphi 0, %s198
    %s199 = sphi 0, %s196
    %s200 = sphi 0, %s199
    %s216 = sphi 0, %s200
    %s222 = sphi 0, %s224
    %s225 = sphi 0, %s222
    %s226 = sphi 0, %s225
    %s242 = sphi 0, %s226
    %s248 = sphi 0, %s250
    %s251 = sphi 0, %s248
    %s252 = sphi 0, %s251
    %s268 = sphi 0, %s252
    %s274 = sphi 0, %s276
    %s277 = sphi 0, %s274
    %s278 = sphi 0, %s277
    %s294 = sphi 0, %s278
    %s300 = sphi 0, %s302
    %s303 = sphi 0, %s300
    %s304 = sphi 0, %s303
    %s320 = sphi 0, %s304
    %s326 = sphi 0, %s328
    %s329 = sphi 0, %s326
    %s330 = sphi 0, %s329
    %s346 = sphi 0, %s330
    %s352 = sphi 0, %s354
    %s355 = sphi 0, %s352
    %s356 = sphi 0, %s355
    %s372 = sphi 0, %s356
    %s378 = sphi 0, %s380
    %s381 = sphi 0, %s378
    %s382 = sphi 0, %s381
    %s398 = sphi 0, %s382
    %s404 = sphi 0, %s406
    %s407 = sphi 0, %s404
    %s408 = sphi 0, %s407
    %s424 = sphi 0, %s408
    %s428 = sphi 0, %s428
    %s430 = sphi 0, %s428
    %s431 = sphi 0, %s430
    %s445 = sphi 0, %s431
    %s449 = sphi 0, %s449
    %s451 = sphi 0, %s449
    %s452 = sphi 0, %s451
    %s466 = sphi 0, %s452
  $region4: #{graph_triple_conv_net.1} parent=0 // loop_header_branch
    %27 = sbr.rel (%p25) target = $region8
  $region5: #{graph_triple_conv_net.1} parent=0 // loop_body
    %s29 = ssub.s32 %s24, 1
    %s30 = ssub.s32 %s24, 2
    %s31 = sadd.s32 %s24, 1
    %s33 = sadd.s32 %s32, 1
    %p36 = scmp.eq.s32.totalorder %s24, 1
    %p37 = scmp.ne.s32.totalorder %s32, %s34
    %p38 = scmp.eq.s32.totalorder %s24, 0
    %p39 = por %p37, %p38
    %p40 = scmp.ne.s32.totalorder %s32, %s34
    %p41 = scmp.eq.s32.totalorder %s29, 1
    %p42 = por %p40, %p41
    %p43 = scmp.ne.s32.totalorder %s34, %s35
    %p44 = scmp.eq.s32.totalorder %s29, 0
    %p45 = por %p43, %p44
    %p46 = scmp.ne.s32.totalorder %s34, %s35
    %p47 = scmp.eq.s32.totalorder %s30, 1
    %p48 = por %p46, %p47
    %p50 = scmp.ne.s32.totalorder %s35, %s49
    %p51 = scmp.eq.s32.totalorder %s30, 0
    %p52 = por %p50, %p51
    %s54 = sadd.s32 %s53, 1
    %p57 = scmp.eq.s32.totalorder %s24, 1
    %p58 = scmp.ne.s32.totalorder %s53, %s55
    %p59 = scmp.eq.s32.totalorder %s24, 0
    %p60 = por %p58, %p59
    %p61 = scmp.ne.s32.totalorder %s53, %s55
    %p62 = scmp.eq.s32.totalorder %s29, 1
    %p63 = por %p61, %p62
    %p64 = scmp.ne.s32.totalorder %s55, %s56
    %p65 = scmp.eq.s32.totalorder %s29, 0
    %p66 = por %p64, %p65
    %p67 = scmp.ne.s32.totalorder %s55, %s56
    %p68 = scmp.eq.s32.totalorder %s30, 1
    %p69 = por %p67, %p68
    %p71 = scmp.ne.s32.totalorder %s56, %s70
    %p72 = scmp.eq.s32.totalorder %s30, 0
    %p73 = por %p71, %p72
    %s75 = sadd.s32 %s74, 1
    %p78 = scmp.eq.s32.totalorder %s24, 1
    %p79 = scmp.ne.s32.totalorder %s74, %s76
    %p80 = scmp.eq.s32.totalorder %s24, 0
    %p81 = por %p79, %p80
    %p82 = scmp.ne.s32.totalorder %s74, %s76
    %p83 = scmp.eq.s32.totalorder %s29, 1
    %p84 = por %p82, %p83
    %p85 = scmp.ne.s32.totalorder %s76, %s77
    %p86 = scmp.eq.s32.totalorder %s29, 0
    %p87 = por %p85, %p86
    %p88 = scmp.ne.s32.totalorder %s76, %s77
    %p89 = scmp.eq.s32.totalorder %s30, 1
    %p90 = por %p88, %p89
    %p92 = scmp.ne.s32.totalorder %s77, %s91
    %p93 = scmp.eq.s32.totalorder %s30, 0
    %p94 = por %p92, %p93
    %s96 = sadd.s32 %s95, 1
    %p99 = scmp.eq.s32.totalorder %s24, 1
    %p100 = scmp.ne.s32.totalorder %s95, %s97
    %p101 = scmp.eq.s32.totalorder %s24, 0
    %p102 = por %p100, %p101
    %p103 = scmp.ne.s32.totalorder %s95, %s97
    %p104 = scmp.eq.s32.totalorder %s29, 1
    %p105 = por %p103, %p104
    %p106 = scmp.ne.s32.totalorder %s97, %s98
    %p107 = scmp.eq.s32.totalorder %s29, 0
    %p108 = por %p106, %p107
    %p109 = scmp.ne.s32.totalorder %s97, %s98
    %p110 = scmp.eq.s32.totalorder %s30, 1
    %p111 = por %p109, %p110
    %p113 = scmp.ne.s32.totalorder %s98, %s112
    %p114 = scmp.eq.s32.totalorder %s30, 0
    %p115 = por %p113, %p114
    %s116 = ssub.s32 %s24, %s31
    %p117 = scmp.eq.s32.totalorder %s116, 0
    %s119 = sadd.s32 %s118, 1
    %s120 = scalar_select %p117, %s118, %s119
    %p123 = pneg %p117
    %p124 = scmp.eq.s32.totalorder %s24, 1
    %p125 = por %p123, %p124
    %p126 = scmp.ne.s32.totalorder %s118, %s121
    %p127 = scmp.eq.s32.totalorder %s24, 0
    %p128 = por %p126, %p127
    %p129 = scmp.ne.s32.totalorder %s118, %s121
    %p130 = scmp.eq.s32.totalorder %s29, 1
    %p131 = por %p129, %p130
    %p132 = scmp.ne.s32.totalorder %s121, %s122
    %p133 = scmp.eq.s32.totalorder %s29, 0
    %p134 = por %p132, %p133
    %p135 = scmp.ne.s32.totalorder %s121, %s122
    %p136 = scmp.eq.s32.totalorder %s30, 1
    %p137 = por %p135, %p136
    %p139 = scmp.ne.s32.totalorder %s122, %s138
    %p140 = scmp.eq.s32.totalorder %s30, 0
    %p141 = por %p139, %p140
    %s142 = ssub.s32 %s24, %s31
    %p143 = scmp.eq.s32.totalorder %s142, 0
    %s145 = sadd.s32 %s144, 1
    %s146 = scalar_select %p143, %s144, %s145
    %p149 = pneg %p143
    %p150 = scmp.eq.s32.totalorder %s24, 1
    %p151 = por %p149, %p150
    %p152 = scmp.ne.s32.totalorder %s144, %s147
    %p153 = scmp.eq.s32.totalorder %s24, 0
    %p154 = por %p152, %p153
    %p155 = scmp.ne.s32.totalorder %s144, %s147
    %p156 = scmp.eq.s32.totalorder %s29, 1
    %p157 = por %p155, %p156
    %p158 = scmp.ne.s32.totalorder %s147, %s148
    %p159 = scmp.eq.s32.totalorder %s29, 0
    %p160 = por %p158, %p159
    %p161 = scmp.ne.s32.totalorder %s147, %s148
    %p162 = scmp.eq.s32.totalorder %s30, 1
    %p163 = por %p161, %p162
    %p165 = scmp.ne.s32.totalorder %s148, %s164
    %p166 = scmp.eq.s32.totalorder %s30, 0
    %p167 = por %p165, %p166
    %s168 = ssub.s32 %s24, %s31
    %p169 = scmp.eq.s32.totalorder %s168, 0
    %s171 = sadd.s32 %s170, 1
    %s172 = scalar_select %p169, %s170, %s171
    %p175 = pneg %p169
    %p176 = scmp.eq.s32.totalorder %s24, 1
    %p177 = por %p175, %p176
    %p178 = scmp.ne.s32.totalorder %s170, %s173
    %p179 = scmp.eq.s32.totalorder %s24, 0
    %p180 = por %p178, %p179
    %p181 = scmp.ne.s32.totalorder %s170, %s173
    %p182 = scmp.eq.s32.totalorder %s29, 1
    %p183 = por %p181, %p182
    %p184 = scmp.ne.s32.totalorder %s173, %s174
    %p185 = scmp.eq.s32.totalorder %s29, 0
    %p186 = por %p184, %p185
    %p187 = scmp.ne.s32.totalorder %s173, %s174
    %p188 = scmp.eq.s32.totalorder %s30, 1
    %p189 = por %p187, %p188
    %p191 = scmp.ne.s32.totalorder %s174, %s190
    %p192 = scmp.eq.s32.totalorder %s30, 0
    %p193 = por %p191, %p192
    %s194 = ssub.s32 %s24, %s31
    %p195 = scmp.eq.s32.totalorder %s194, 0
    %s197 = sadd.s32 %s196, 1
    %s198 = scalar_select %p195, %s196, %s197
    %p201 = pneg %p195
    %p202 = scmp.eq.s32.totalorder %s24, 1
    %p203 = por %p201, %p202
    %p204 = scmp.ne.s32.totalorder %s196, %s199
    %p205 = scmp.eq.s32.totalorder %s24, 0
    %p206 = por %p204, %p205
    %p207 = scmp.ne.s32.totalorder %s196, %s199
    %p208 = scmp.eq.s32.totalorder %s29, 1
    %p209 = por %p207, %p208
    %p210 = scmp.ne.s32.totalorder %s199, %s200
    %p211 = scmp.eq.s32.totalorder %s29, 0
    %p212 = por %p210, %p211
    %p213 = scmp.ne.s32.totalorder %s199, %s200
    %p214 = scmp.eq.s32.totalorder %s30, 1
    %p215 = por %p213, %p214
    %p217 = scmp.ne.s32.totalorder %s200, %s216
    %p218 = scmp.eq.s32.totalorder %s30, 0
    %p219 = por %p217, %p218
    %s220 = ssub.s32 %s24, %s31
    %p221 = scmp.eq.s32.totalorder %s220, 0
    %s223 = sadd.s32 %s222, 1
    %s224 = scalar_select %p221, %s222, %s223
    %p227 = pneg %p221
    %p228 = scmp.eq.s32.totalorder %s24, 1
    %p229 = por %p227, %p228
    %p230 = scmp.ne.s32.totalorder %s222, %s225
    %p231 = scmp.eq.s32.totalorder %s24, 0
    %p232 = por %p230, %p231
    %p233 = scmp.ne.s32.totalorder %s222, %s225
    %p234 = scmp.eq.s32.totalorder %s29, 1
    %p235 = por %p233, %p234
    %p236 = scmp.ne.s32.totalorder %s225, %s226
    %p237 = scmp.eq.s32.totalorder %s29, 0
    %p238 = por %p236, %p237
    %p239 = scmp.ne.s32.totalorder %s225, %s226
    %p240 = scmp.eq.s32.totalorder %s30, 1
    %p241 = por %p239, %p240
    %p243 = scmp.ne.s32.totalorder %s226, %s242
    %p244 = scmp.eq.s32.totalorder %s30, 0
    %p245 = por %p243, %p244
    %s246 = ssub.s32 %s24, %s31
    %p247 = scmp.eq.s32.totalorder %s246, 0
    %s249 = sadd.s32 %s248, 1
    %s250 = scalar_select %p247, %s248, %s249
    %p253 = pneg %p247
    %p254 = scmp.eq.s32.totalorder %s24, 1
    %p255 = por %p253, %p254
    %p256 = scmp.ne.s32.totalorder %s248, %s251
    %p257 = scmp.eq.s32.totalorder %s24, 0
    %p258 = por %p256, %p257
    %p259 = scmp.ne.s32.totalorder %s248, %s251
    %p260 = scmp.eq.s32.totalorder %s29, 1
    %p261 = por %p259, %p260
    %p262 = scmp.ne.s32.totalorder %s251, %s252
    %p263 = scmp.eq.s32.totalorder %s29, 0
    %p264 = por %p262, %p263
    %p265 = scmp.ne.s32.totalorder %s251, %s252
    %p266 = scmp.eq.s32.totalorder %s30, 1
    %p267 = por %p265, %p266
    %p269 = scmp.ne.s32.totalorder %s252, %s268
    %p270 = scmp.eq.s32.totalorder %s30, 0
    %p271 = por %p269, %p270
    %s272 = ssub.s32 %s24, %s31
    %p273 = scmp.eq.s32.totalorder %s272, 0
    %s275 = sadd.s32 %s274, 1
    %s276 = scalar_select %p273, %s274, %s275
    %p279 = pneg %p273
    %p280 = scmp.eq.s32.totalorder %s24, 1
    %p281 = por %p279, %p280
    %p282 = scmp.ne.s32.totalorder %s274, %s277
    %p283 = scmp.eq.s32.totalorder %s24, 0
    %p284 = por %p282, %p283
    %p285 = scmp.ne.s32.totalorder %s274, %s277
    %p286 = scmp.eq.s32.totalorder %s29, 1
    %p287 = por %p285, %p286
    %p288 = scmp.ne.s32.totalorder %s277, %s278
    %p289 = scmp.eq.s32.totalorder %s29, 0
    %p290 = por %p288, %p289
    %p291 = scmp.ne.s32.totalorder %s277, %s278
    %p292 = scmp.eq.s32.totalorder %s30, 1
    %p293 = por %p291, %p292
    %p295 = scmp.ne.s32.totalorder %s278, %s294
    %p296 = scmp.eq.s32.totalorder %s30, 0
    %p297 = por %p295, %p296
    %s298 = ssub.s32 %s24, %s31
    %p299 = scmp.eq.s32.totalorder %s298, 0
    %s301 = sadd.s32 %s300, 1
    %s302 = scalar_select %p299, %s300, %s301
    %p305 = pneg %p299
    %p306 = scmp.eq.s32.totalorder %s24, 1
    %p307 = por %p305, %p306
    %p308 = scmp.ne.s32.totalorder %s300, %s303
    %p309 = scmp.eq.s32.totalorder %s24, 0
    %p310 = por %p308, %p309
    %p311 = scmp.ne.s32.totalorder %s300, %s303
    %p312 = scmp.eq.s32.totalorder %s29, 1
    %p313 = por %p311, %p312
    %p314 = scmp.ne.s32.totalorder %s303, %s304
    %p315 = scmp.eq.s32.totalorder %s29, 0
    %p316 = por %p314, %p315
    %p317 = scmp.ne.s32.totalorder %s303, %s304
    %p318 = scmp.eq.s32.totalorder %s30, 1
    %p319 = por %p317, %p318
    %p321 = scmp.ne.s32.totalorder %s304, %s320
    %p322 = scmp.eq.s32.totalorder %s30, 0
    %p323 = por %p321, %p322
    %s324 = ssub.s32 %s24, %s31
    %p325 = scmp.eq.s32.totalorder %s324, 0
    %s327 = sadd.s32 %s326, 1
    %s328 = scalar_select %p325, %s326, %s327
    %p331 = pneg %p325
    %p332 = scmp.eq.s32.totalorder %s24, 1
    %p333 = por %p331, %p332
    %p334 = scmp.ne.s32.totalorder %s326, %s329
    %p335 = scmp.eq.s32.totalorder %s24, 0
    %p336 = por %p334, %p335
    %p337 = scmp.ne.s32.totalorder %s326, %s329
    %p338 = scmp.eq.s32.totalorder %s29, 1
    %p339 = por %p337, %p338
    %p340 = scmp.ne.s32.totalorder %s329, %s330
    %p341 = scmp.eq.s32.totalorder %s29, 0
    %p342 = por %p340, %p341
    %p343 = scmp.ne.s32.totalorder %s329, %s330
    %p344 = scmp.eq.s32.totalorder %s30, 1
    %p345 = por %p343, %p344
    %p347 = scmp.ne.s32.totalorder %s330, %s346
    %p348 = scmp.eq.s32.totalorder %s30, 0
    %p349 = por %p347, %p348
    %s350 = ssub.s32 %s24, %s31
    %p351 = scmp.eq.s32.totalorder %s350, 0
    %s353 = sadd.s32 %s352, 1
    %s354 = scalar_select %p351, %s352, %s353
    %p357 = pneg %p351
    %p358 = scmp.eq.s32.totalorder %s24, 1
    %p359 = por %p357, %p358
    %p360 = scmp.ne.s32.totalorder %s352, %s355
    %p361 = scmp.eq.s32.totalorder %s24, 0
    %p362 = por %p360, %p361
    %p363 = scmp.ne.s32.totalorder %s352, %s355
    %p364 = scmp.eq.s32.totalorder %s29, 1
    %p365 = por %p363, %p364
    %p366 = scmp.ne.s32.totalorder %s355, %s356
    %p367 = scmp.eq.s32.totalorder %s29, 0
    %p368 = por %p366, %p367
    %p369 = scmp.ne.s32.totalorder %s355, %s356
    %p370 = scmp.eq.s32.totalorder %s30, 1
    %p371 = por %p369, %p370
    %p373 = scmp.ne.s32.totalorder %s356, %s372
    %p374 = scmp.eq.s32.totalorder %s30, 0
    %p375 = por %p373, %p374
    %s376 = ssub.s32 %s24, %s31
    %p377 = scmp.eq.s32.totalorder %s376, 0
    %s379 = sadd.s32 %s378, 1
    %s380 = scalar_select %p377, %s378, %s379
    %p383 = pneg %p377
    %p384 = scmp.eq.s32.totalorder %s24, 1
    %p385 = por %p383, %p384
    %p386 = scmp.ne.s32.totalorder %s378, %s381
    %p387 = scmp.eq.s32.totalorder %s24, 0
    %p388 = por %p386, %p387
    %p389 = scmp.ne.s32.totalorder %s378, %s381
    %p390 = scmp.eq.s32.totalorder %s29, 1
    %p391 = por %p389, %p390
    %p392 = scmp.ne.s32.totalorder %s381, %s382
    %p393 = scmp.eq.s32.totalorder %s29, 0
    %p394 = por %p392, %p393
    %p395 = scmp.ne.s32.totalorder %s381, %s382
    %p396 = scmp.eq.s32.totalorder %s30, 1
    %p397 = por %p395, %p396
    %p399 = scmp.ne.s32.totalorder %s382, %s398
    %p400 = scmp.eq.s32.totalorder %s30, 0
    %p401 = por %p399, %p400
    %s402 = ssub.s32 %s24, %s31
    %p403 = scmp.eq.s32.totalorder %s402, 0
    %s405 = sadd.s32 %s404, 1
    %s406 = scalar_select %p403, %s404, %s405
    %p409 = pneg %p403
    %p410 = scmp.eq.s32.totalorder %s24, 1
    %p411 = por %p409, %p410
    %p412 = scmp.ne.s32.totalorder %s404, %s407
    %p413 = scmp.eq.s32.totalorder %s24, 0
    %p414 = por %p412, %p413
    %p415 = scmp.ne.s32.totalorder %s404, %s407
    %p416 = scmp.eq.s32.totalorder %s29, 1
    %p417 = por %p415, %p416
    %p418 = scmp.ne.s32.totalorder %s407, %s408
    %p419 = scmp.eq.s32.totalorder %s29, 0
    %p420 = por %p418, %p419
    %p421 = scmp.ne.s32.totalorder %s407, %s408
    %p422 = scmp.eq.s32.totalorder %s30, 1
    %p423 = por %p421, %p422
    %p425 = scmp.ne.s32.totalorder %s408, %s424
    %p426 = scmp.eq.s32.totalorder %s30, 0
    %p427 = por %p425, %p426
    %s429 = sadd.s32 %s428, 1
    %p432 = scmp.eq.s32.totalorder %s24, 1
    %p433 = scmp.ne.s32.totalorder %s428, %s430
    %p434 = scmp.eq.s32.totalorder %s24, 0
    %p435 = por %p433, %p434
    %p436 = scmp.ne.s32.totalorder %s428, %s430
    %p437 = scmp.eq.s32.totalorder %s29, 1
    %p438 = por %p436, %p437
    %p439 = scmp.ne.s32.totalorder %s430, %s431
    %p440 = scmp.eq.s32.totalorder %s29, 0
    %p441 = por %p439, %p440
    %p442 = scmp.ne.s32.totalorder %s430, %s431
    %p443 = scmp.eq.s32.totalorder %s30, 1
    %p444 = por %p442, %p443
    %p446 = scmp.ne.s32.totalorder %s431, %s445
    %p447 = scmp.eq.s32.totalorder %s30, 0
    %p448 = por %p446, %p447
    %s450 = sadd.s32 %s449, 1
    %p453 = scmp.eq.s32.totalorder %s24, 1
    %p454 = scmp.ne.s32.totalorder %s449, %s451
    %p455 = scmp.eq.s32.totalorder %s24, 0
    %p456 = por %p454, %p455
    %p457 = scmp.ne.s32.totalorder %s449, %s451
    %p458 = scmp.eq.s32.totalorder %s29, 1
    %p459 = por %p457, %p458
    %p460 = scmp.ne.s32.totalorder %s451, %s452
    %p461 = scmp.eq.s32.totalorder %s29, 0
    %p462 = por %p460, %p461
    %p463 = scmp.ne.s32.totalorder %s451, %s452
    %p464 = scmp.eq.s32.totalorder %s30, 1
    %p465 = por %p463, %p464
    %p467 = scmp.ne.s32.totalorder %s452, %s466
    %p468 = scmp.eq.s32.totalorder %s30, 0
    %p469 = por %p467, %p468
    %p470 = scmp.le.s32.totalorder 1, %s24
    %p471 = scmp.lt.s32.totalorder %s24, 3
    %p472 = pnand %p470, %p471
    %p473 = pneg %p472
    // Predicated region
    $region9: #{graph_triple_conv_net.1} parent=5 // pred_check
      _
    $region10: #{graph_triple_conv_net.1} parent=5 // pred_check_branch
      %475 = sbr.rel (%p472) target = $region12
    $region11: #{graph_triple_conv_net.1} parent=5 // pred_region
      %s476 = ssub.s32 %s24, 1
      // Predicated region
      $region13: #{graph_triple_conv_net.1} parent=11 // pred_check
        %p477 = pneg %p45
      $region14: #{graph_triple_conv_net.1} parent=11 // pred_check_branch
        %479 = sbr.rel (%p477) target = $region16
      $region15: #{graph_triple_conv_net.1} parent=11 // pred_region
        _
      $region16: #{graph_triple_conv_net.1} parent=11 // pred_fallthru
        _
      // Predicated region
      $region17: #{graph_triple_conv_net.1} parent=11 // pred_check
        %p480 = pneg %p66
      $region18: #{graph_triple_conv_net.1} parent=11 // pred_check_branch
        %482 = sbr.rel (%p480) target = $region20
      $region19: #{graph_triple_conv_net.1} parent=11 // pred_region
        _
      $region20: #{graph_triple_conv_net.1} parent=11 // pred_fallthru
        _
      // Predicated region
      $region21: #{graph_triple_conv_net.1} parent=11 // pred_check
        %p483 = pneg %p87
      $region22: #{graph_triple_conv_net.1} parent=11 // pred_check_branch
        %485 = sbr.rel (%p483) target = $region24
      $region23: #{graph_triple_conv_net.1} parent=11 // pred_region
        _
      $region24: #{graph_triple_conv_net.1} parent=11 // pred_fallthru
        _
      // Predicated region
      $region25: #{graph_triple_conv_net.1} parent=11 // pred_check
        %p486 = pneg %p108
      $region26: #{graph_triple_conv_net.1} parent=11 // pred_check_branch
        %488 = sbr.rel (%p486) target = $region28
      $region27: #{graph_triple_conv_net.1} parent=11 // pred_region
        _
      $region28: #{graph_triple_conv_net.1} parent=11 // pred_fallthru
        _
    $region12: #{graph_triple_conv_net.1} parent=5 // pred_fallthru
      _
    %p489 = scmp.lt.s32.totalorder %s24, 2
    // Predicated region
    $region29: #{graph_triple_conv_net.1} parent=5 // pred_check
      %p490 = pneg %p489
    $region30: #{graph_triple_conv_net.1} parent=5 // pred_check_branch
      %492 = sbr.rel (%p490) target = $region32
    $region31: #{graph_triple_conv_net.1} parent=5 // pred_region
      // Predicated region
      $region33: #{graph_triple_conv_net.1} parent=31 // pred_check
        %p493 = pneg %p128
      $region34: #{graph_triple_conv_net.1} parent=31 // pred_check_branch
        %495 = sbr.rel (%p493) target = $region36
      $region35: #{graph_triple_conv_net.1} parent=31 // pred_region
        %p496 = scmp.lt.s32.totalorder %s24, 1
        %s497 = scalar_select %p496, %s24, 1
        %s498 = smul.addr %s497, 16
        %s499 = smul.addr %s498, 4
        %s500 = scalar_lea.vmem %s4, %s499
      $region36: #{graph_triple_conv_net.1} parent=31 // pred_fallthru
        _
      // Predicated region
      $region37: #{graph_triple_conv_net.1} parent=31 // pred_check
        %p501 = pneg %p154
      $region38: #{graph_triple_conv_net.1} parent=31 // pred_check_branch
        %503 = sbr.rel (%p501) target = $region40
      $region39: #{graph_triple_conv_net.1} parent=31 // pred_region
        %p504 = scmp.lt.s32.totalorder %s24, 1
        %s505 = scalar_select %p504, %s24, 1
        %s506 = smul.addr %s505, 16
        %s507 = smul.addr %s506, 4
        %s508 = scalar_lea.vmem %s5, %s507
      $region40: #{graph_triple_conv_net.1} parent=31 // pred_fallthru
        _
      // Predicated region
      $region41: #{graph_triple_conv_net.1} parent=31 // pred_check
        %p509 = pneg %p180
      $region42: #{graph_triple_conv_net.1} parent=31 // pred_check_branch
        %511 = sbr.rel (%p509) target = $region44
      $region43: #{graph_triple_conv_net.1} parent=31 // pred_region
        %p512 = scmp.lt.s32.totalorder %s24, 1
        %s513 = scalar_select %p512, %s24, 1
        %s514 = smul.addr %s513, 16
        %s515 = smul.addr %s514, 4
        %s516 = scalar_lea.vmem %s6, %s515
      $region44: #{graph_triple_conv_net.1} parent=31 // pred_fallthru
        _
      // Predicated region
      $region45: #{graph_triple_conv_net.1} parent=31 // pred_check
        %p517 = pneg %p206
      $region46: #{graph_triple_conv_net.1} parent=31 // pred_check_branch
        %519 = sbr.rel (%p517) target = $region48
      $region47: #{graph_triple_conv_net.1} parent=31 // pred_region
        %p520 = scmp.lt.s32.totalorder %s24, 1
        %s521 = scalar_select %p520, %s24, 1
        %s522 = scalar_lea.vmem %s7, %s521
      $region48: #{graph_triple_conv_net.1} parent=31 // pred_fallthru
        _
      // Predicated region
      $region49: #{graph_triple_conv_net.1} parent=31 // pred_check
        %p523 = pneg %p232
      $region50: #{graph_triple_conv_net.1} parent=31 // pred_check_branch
        %525 = sbr.rel (%p523) target = $region52
      $region51: #{graph_triple_conv_net.1} parent=31 // pred_region
        %p526 = scmp.lt.s32.totalorder %s24, 1
        %s527 = scalar_select %p526, %s24, 1
        %s528 = smul.addr %s527, 48
        %s529 = smul.addr %s528, 4
        %s530 = scalar_lea.vmem %s8, %s529
      $region52: #{graph_triple_conv_net.1} parent=31 // pred_fallthru
        _
      // Predicated region
      $region53: #{graph_triple_conv_net.1} parent=31 // pred_check
        %p531 = pneg %p258
      $region54: #{graph_triple_conv_net.1} parent=31 // pred_check_branch
        %533 = sbr.rel (%p531) target = $region56
      $region55: #{graph_triple_conv_net.1} parent=31 // pred_region
        %p534 = scmp.lt.s32.totalorder %s24, 1
        %s535 = scalar_select %p534, %s24, 1
        %s536 = smul.addr %s535, 3
        %s537 = scalar_lea.vmem %s9, %s536
      $region56: #{graph_triple_conv_net.1} parent=31 // pred_fallthru
        _
      // Predicated region
      $region57: #{graph_triple_conv_net.1} parent=31 // pred_check
        %p538 = pneg %p284
      $region58: #{graph_triple_conv_net.1} parent=31 // pred_check_branch
        %540 = sbr.rel (%p538) target = $region60
      $region59: #{graph_triple_conv_net.1} parent=31 // pred_region
        %p541 = scmp.lt.s32.totalorder %s24, 1
        %s542 = scalar_select %p541, %s24, 1
        %s543 = smul.addr %s542, 16
        %s544 = smul.addr %s543, 4
        %s545 = scalar_lea.vmem %s10, %s544
      $region60: #{graph_triple_conv_net.1} parent=31 // pred_fallthru
        _
      // Predicated region
      $region61: #{graph_triple_conv_net.1} parent=31 // pred_check
        %p546 = pneg %p310
      $region62: #{graph_triple_conv_net.1} parent=31 // pred_check_branch
        %548 = sbr.rel (%p546) target = $region64
      $region63: #{graph_triple_conv_net.1} parent=31 // pred_region
        %p549 = scmp.lt.s32.totalorder %s24, 1
        %s550 = scalar_select %p549, %s24, 1
        %s551 = scalar_lea.vmem %s11, %s550
      $region64: #{graph_triple_conv_net.1} parent=31 // pred_fallthru
        _
      // Predicated region
      $region65: #{graph_triple_conv_net.1} parent=31 // pred_check
        %p552 = pneg %p336
      $region66: #{graph_triple_conv_net.1} parent=31 // pred_check_branch
        %554 = sbr.rel (%p552) target = $region68
      $region67: #{graph_triple_conv_net.1} parent=31 // pred_region
        %p555 = scmp.lt.s32.totalorder %s24, 1
        %s556 = scalar_select %p555, %s24, 1
        %s557 = smul.addr %s556, 16
        %s558 = smul.addr %s557, 4
        %s559 = scalar_lea.vmem %s12, %s558
      $region68: #{graph_triple_conv_net.1} parent=31 // pred_fallthru
        _
      // Predicated region
      $region69: #{graph_triple_conv_net.1} parent=31 // pred_check
        %p560 = pneg %p362
      $region70: #{graph_triple_conv_net.1} parent=31 // pred_check_branch
        %562 = sbr.rel (%p560) target = $region72
      $region71: #{graph_triple_conv_net.1} parent=31 // pred_region
        %p563 = scmp.lt.s32.totalorder %s24, 1
        %s564 = scalar_select %p563, %s24, 1
        %s565 = scalar_lea.vmem %s13, %s564
      $region72: #{graph_triple_conv_net.1} parent=31 // pred_fallthru
        _
      // Predicated region
      $region73: #{graph_triple_conv_net.1} parent=31 // pred_check
        %p566 = pneg %p388
      $region74: #{graph_triple_conv_net.1} parent=31 // pred_check_branch
        %568 = sbr.rel (%p566) target = $region76
      $region75: #{graph_triple_conv_net.1} parent=31 // pred_region
        %p569 = scmp.lt.s32.totalorder %s24, 1
        %s570 = scalar_select %p569, %s24, 1
        %s571 = smul.addr %s570, 16
        %s572 = smul.addr %s571, 4
        %s573 = scalar_lea.vmem %s14, %s572
      $region76: #{graph_triple_conv_net.1} parent=31 // pred_fallthru
        _
      // Predicated region
      $region77: #{graph_triple_conv_net.1} parent=31 // pred_check
        %p574 = pneg %p414
      $region78: #{graph_triple_conv_net.1} parent=31 // pred_check_branch
        %576 = sbr.rel (%p574) target = $region80
      $region79: #{graph_triple_conv_net.1} parent=31 // pred_region
        %p577 = scmp.lt.s32.totalorder %s24, 1
        %s578 = scalar_select %p577, %s24, 1
        %s579 = scalar_lea.vmem %s15, %s578
      $region80: #{graph_triple_conv_net.1} parent=31 // pred_fallthru
        _
    $region32: #{graph_triple_conv_net.1} parent=5 // pred_fallthru
      _
    %p580 = scmp.le.s32.totalorder 1, %s24
    %p581 = scmp.lt.s32.totalorder %s24, 3
    %p582 = pnand %p580, %p581
    %p583 = pneg %p582
    // Predicated region
    $region81: #{graph_triple_conv_net.1} parent=5 // pred_check
      _
    $region82: #{graph_triple_conv_net.1} parent=5 // pred_check_branch
      %585 = sbr.rel (%p582) target = $region84
    $region83: #{graph_triple_conv_net.1} parent=5 // pred_region
      %s586 = ssub.s32 %s24, 1
      %p587 = pneg %p45
      %p588 = pneg %p42
      %p589 = pneg %p66
      %p590 = pneg %p63
      %p591 = pneg %p87
      %p592 = pneg %p84
      %p593 = pneg %p108
      %p594 = pneg %p105
      %p595 = scmp.lt.s32.totalorder %s29, 1
      %s596 = scalar_select %p595, %s29, 1
      %s597 = smul.addr %s596, 16
      %s598 = smul.addr %s597, 4
      %s599 = scalar_lea.vmem %s4, %s598
      %p600 = pneg %p134
      %p601 = pneg %p131
      %p602 = scmp.lt.s32.totalorder %s29, 1
      %s603 = scalar_select %p602, %s29, 1
      %s604 = smul.addr %s603, 16
      %s605 = smul.addr %s604, 4
      %s606 = scalar_lea.vmem %s5, %s605
      %p607 = pneg %p160
      %p608 = pneg %p157
      %p609 = scmp.lt.s32.totalorder %s29, 1
      %s610 = scalar_select %p609, %s29, 1
      %s611 = smul.addr %s610, 16
      %s612 = smul.addr %s611, 4
      %s613 = scalar_lea.vmem %s6, %s612
      %p614 = pneg %p186
      %p615 = pneg %p183
      %p616 = scmp.lt.s32.totalorder %s29, 1
      %s617 = scalar_select %p616, %s29, 1
      %s618 = scalar_lea.vmem %s7, %s617
      %p619 = pneg %p212
      %p620 = pneg %p209
      %p621 = scmp.lt.s32.totalorder %s29, 1
      %s622 = scalar_select %p621, %s29, 1
      %s623 = smul.addr %s622, 48
      %s624 = smul.addr %s623, 4
      %s625 = scalar_lea.vmem %s8, %s624
      %p626 = pneg %p238
      %p627 = pneg %p235
      %p628 = scmp.lt.s32.totalorder %s29, 1
      %s629 = scalar_select %p628, %s29, 1
      %s630 = smul.addr %s629, 3
      %s631 = scalar_lea.vmem %s9, %s630
      %p632 = pneg %p264
      %p633 = pneg %p261
      %p634 = scmp.lt.s32.totalorder %s29, 1
      %s635 = scalar_select %p634, %s29, 1
      %s636 = smul.addr %s635, 16
      %s637 = smul.addr %s636, 4
      %s638 = scalar_lea.vmem %s10, %s637
      %p639 = pneg %p290
      %p640 = pneg %p287
      %p641 = scmp.lt.s32.totalorder %s29, 1
      %s642 = scalar_select %p641, %s29, 1
      %s643 = scalar_lea.vmem %s11, %s642
      %p644 = pneg %p316
      %p645 = pneg %p313
      %p646 = scmp.lt.s32.totalorder %s29, 1
      %s647 = scalar_select %p646, %s29, 1
      %s648 = smul.addr %s647, 16
      %s649 = smul.addr %s648, 4
      %s650 = scalar_lea.vmem %s12, %s649
      %p651 = pneg %p342
      %p652 = pneg %p339
      %p653 = scmp.lt.s32.totalorder %s29, 1
      %s654 = scalar_select %p653, %s29, 1
      %s655 = scalar_lea.vmem %s13, %s654
      %p656 = pneg %p368
      %p657 = pneg %p365
      %p658 = scmp.lt.s32.totalorder %s29, 1
      %s659 = scalar_select %p658, %s29, 1
      %s660 = smul.addr %s659, 16
      %s661 = smul.addr %s660, 4
      %s662 = scalar_lea.vmem %s14, %s661
      %p663 = pneg %p394
      %p664 = pneg %p391
      %p665 = scmp.lt.s32.totalorder %s29, 1
      %s666 = scalar_select %p665, %s29, 1
      %s667 = scalar_lea.vmem %s15, %s666
      %p668 = pneg %p420
      %p669 = pneg %p417
      %p670 = pneg %p441
      %p671 = pneg %p438
      %p672 = pneg %p462
      %p673 = pneg %p459
      %p674 = scmp.lt.s32.totalorder %s29, 1
      %s675 = scalar_select %p674, %s29, 1
      %s676 = smul.addr %s675, 16
      %s677 = smul.addr %s676, 4
      %s678 = scalar_lea.vmem %s4, %s677
      %p679 = scmp.lt.s32.totalorder %s29, 1
      %s680 = scalar_select %p679, %s29, 1
      %s681 = smul.addr %s680, 16
      %s682 = smul.addr %s681, 4
      %s683 = scalar_lea.vmem %s5, %s682
      %p684 = scmp.lt.s32.totalorder %s29, 1
      %s685 = scalar_select %p684, %s29, 1
      %s686 = smul.addr %s685, 16
      %s687 = smul.addr %s686, 4
      %s688 = scalar_lea.vmem %s6, %s687
      %p689 = scmp.lt.s32.totalorder %s29, 1
      %s690 = scalar_select %p689, %s29, 1
      %s691 = scalar_lea.vmem %s7, %s690
      %p692 = scmp.lt.s32.totalorder %s29, 1
      %s693 = scalar_select %p692, %s29, 1
      %s694 = smul.addr %s693, 48
      %s695 = smul.addr %s694, 4
      %s696 = scalar_lea.vmem %s8, %s695
      %p697 = scmp.lt.s32.totalorder %s29, 1
      %s698 = scalar_select %p697, %s29, 1
      %s699 = smul.addr %s698, 3
      %s700 = scalar_lea.vmem %s9, %s699
      %p701 = scmp.lt.s32.totalorder %s29, 1
      %s702 = scalar_select %p701, %s29, 1
      %s703 = smul.addr %s702, 16
      %s704 = smul.addr %s703, 4
      %s705 = scalar_lea.vmem %s10, %s704
      %p706 = scmp.lt.s32.totalorder %s29, 1
      %s707 = scalar_select %p706, %s29, 1
      %s708 = scalar_lea.vmem %s11, %s707
      %p709 = scmp.lt.s32.totalorder %s29, 1
      %s710 = scalar_select %p709, %s29, 1
      %s711 = smul.addr %s710, 16
      %s712 = smul.addr %s711, 4
      %s713 = scalar_lea.vmem %s12, %s712
      %p714 = scmp.lt.s32.totalorder %s29, 1
      %s715 = scalar_select %p714, %s29, 1
      %s716 = scalar_lea.vmem %s13, %s715
      %p717 = scmp.lt.s32.totalorder %s29, 1
      %s718 = scalar_select %p717, %s29, 1
      %s719 = smul.addr %s718, 16
      %s720 = smul.addr %s719, 4
      %s721 = scalar_lea.vmem %s14, %s720
      %p722 = scmp.lt.s32.totalorder %s29, 1
      %s723 = scalar_select %p722, %s29, 1
      %s724 = scalar_lea.vmem %s15, %s723
      %p725 = scmp.eq.s32.totalorder %s29, 0
      // Predicated region
      $region85: #{graph_triple_conv_net.1} parent=83 // pred_check
        %p726 = pneg %p725
      $region86: #{graph_triple_conv_net.1} parent=83 // pred_check_branch
        %728 = sbr.rel (%p726) target = $region88
      $region87: #{graph_triple_conv_net.1} parent=83 // pred_region
        %v729 = vld [vmem:[%s0] sm:$0xff]
        %v730 = vld [vmem:[%s0 + $0x8] sm:$0xff]
        %v731 = vld [vmem:[%s0 + $0x10] sm:$0xff]
        %v732 = vld [vmem:[%s0 + $0x18] sm:$0xff]
        %v733 = vld [vmem:[%s0 + $0x20] sm:$0xff]
        %v734 = vld [vmem:[%s0 + $0x28] sm:$0xff]
        %v735 = vld [vmem:[%s0 + $0x30] sm:$0xff]
        %v736 = vld [vmem:[%s0 + $0x38] sm:$0xff]
        %v737 = vld [vmem:[%s0 + $0x40] sm:$0xff]
        %v738 = vld [vmem:[%s0 + $0x48] sm:$0xff]
        %v739 = vld [vmem:[%s0 + $0x50] sm:$0xff]
        %v740 = vld [vmem:[%s0 + $0x58] sm:$0xff]
        %v741 = vld [vmem:[%s0 + $0x60] sm:$0xff]
        %v742 = vld [vmem:[%s0 + $0x68] sm:$0xff]
        %v743 = vld [vmem:[%s0 + $0x70] sm:$0xff]
        %v744 = vld [vmem:[%s0 + $0x78] sm:$0xff]
        %745 = vst [vmem:[%s16] sm:$0xff] %v729
        %746 = vst [vmem:[%s16 + $0x8] sm:$0xff] %v730
        %747 = vst [vmem:[%s16 + $0x10] sm:$0xff] %v731
        %748 = vst [vmem:[%s16 + $0x18] sm:$0xff] %v732
        %749 = vst [vmem:[%s16 + $0x20] sm:$0xff] %v733
        %750 = vst [vmem:[%s16 + $0x28] sm:$0xff] %v734
        %751 = vst [vmem:[%s16 + $0x30] sm:$0xff] %v735
        %752 = vst [vmem:[%s16 + $0x38] sm:$0xff] %v736
        %753 = vst [vmem:[%s16 + $0x40] sm:$0xff] %v737
        %754 = vst [vmem:[%s16 + $0x48] sm:$0xff] %v738
        %755 = vst [vmem:[%s16 + $0x50] sm:$0xff] %v739
        %756 = vst [vmem:[%s16 + $0x58] sm:$0xff] %v740
        %757 = vst [vmem:[%s16 + $0x60] sm:$0xff] %v741
        %758 = vst [vmem:[%s16 + $0x68] sm:$0xff] %v742
        %759 = vst [vmem:[%s16 + $0x70] sm:$0xff] %v743
        %760 = vst [vmem:[%s16 + $0x78] sm:$0xff] %v744
        %v761 = vld [vmem:[%s1] sm:$0xff]
        %v762 = vld [vmem:[%s1 + $0x8] sm:$0xff]
        %v763 = vld [vmem:[%s1 + $0x10] sm:$0xff]
        %v764 = vld [vmem:[%s1 + $0x18] sm:$0xff]
        %v765 = vld [vmem:[%s1 + $0x20] sm:$0xff]
        %v766 = vld [vmem:[%s1 + $0x28] sm:$0xff]
        %v767 = vld [vmem:[%s1 + $0x30] sm:$0xff]
        %v768 = vld [vmem:[%s1 + $0x38] sm:$0xff]
        %v769 = vld [vmem:[%s1 + $0x40] sm:$0xff]
        %v770 = vld [vmem:[%s1 + $0x48] sm:$0xff]
        %v771 = vld [vmem:[%s1 + $0x50] sm:$0xff]
        %v772 = vld [vmem:[%s1 + $0x58] sm:$0xff]
        %v773 = vld [vmem:[%s1 + $0x60] sm:$0xff]
        %v774 = vld [vmem:[%s1 + $0x68] sm:$0xff]
        %v775 = vld [vmem:[%s1 + $0x70] sm:$0xff]
        %v776 = vld [vmem:[%s1 + $0x78] sm:$0xff]
        %777 = vst [vmem:[%s17] sm:$0xff] %v761
        %778 = vst [vmem:[%s17 + $0x8] sm:$0xff] %v762
        %779 = vst [vmem:[%s17 + $0x10] sm:$0xff] %v763
        %780 = vst [vmem:[%s17 + $0x18] sm:$0xff] %v764
        %781 = vst [vmem:[%s17 + $0x20] sm:$0xff] %v765
        %782 = vst [vmem:[%s17 + $0x28] sm:$0xff] %v766
        %783 = vst [vmem:[%s17 + $0x30] sm:$0xff] %v767
        %784 = vst [vmem:[%s17 + $0x38] sm:$0xff] %v768
        %785 = vst [vmem:[%s17 + $0x40] sm:$0xff] %v769
        %786 = vst [vmem:[%s17 + $0x48] sm:$0xff] %v770
        %787 = vst [vmem:[%s17 + $0x50] sm:$0xff] %v771
        %788 = vst [vmem:[%s17 + $0x58] sm:$0xff] %v772
        %789 = vst [vmem:[%s17 + $0x60] sm:$0xff] %v773
        %790 = vst [vmem:[%s17 + $0x68] sm:$0xff] %v774
        %791 = vst [vmem:[%s17 + $0x70] sm:$0xff] %v775
        %792 = vst [vmem:[%s17 + $0x78] sm:$0xff] %v776
        %v793 = vlaneseq
        %v794 = vand.u32 %v793, 127
        %v795 = vld [vmem:[%s2] sm:$0xff]
        %v796 = vld [vmem:[%s2 + $0x8] sm:$0xff]
        %v797 = vld [vmem:[%s2 + $0x10] sm:$0xff]
        %v798 = vld [vmem:[%s2 + $0x18] sm:$0xff]
        %v799 = vld [vmem:[%s2 + $0x20] sm:$0xff]
        %v800 = vld [vmem:[%s2 + $0x28] sm:$0xff]
        %v801 = vld [vmem:[%s2 + $0x30] sm:$0xff]
        %v802 = vld [vmem:[%s2 + $0x38] sm:$0xff]
        %v803 = vld [vmem:[%s2 + $0x40] sm:$0xff]
        %v804 = vld [vmem:[%s2 + $0x48] sm:$0xff]
        %v805 = vld [vmem:[%s2 + $0x50] sm:$0xff]
        %v806 = vld [vmem:[%s2 + $0x58] sm:$0xff]
        %v807 = vld [vmem:[%s2 + $0x60] sm:$0xff]
        %v808 = vld [vmem:[%s2 + $0x68] sm:$0xff]
        %v809 = vld [vmem:[%s2 + $0x70] sm:$0xff]
        %v810 = vld [vmem:[%s2 + $0x78] sm:$0xff]
        %811 = vset.pattern.permute.xlu0 0
        %812 = vperm.xlu0 %811, %v795
        %v813 = vpop.permute.xlu0 %812
        %814 = vset.pattern.permute.xlu0 0
        %815 = vperm.xlu0 %814, %v796
        %v816 = vpop.permute.xlu0 %815
        %817 = vset.pattern.permute.xlu0 0
        %818 = vperm.xlu0 %817, %v797
        %v819 = vpop.permute.xlu0 %818
        %820 = vset.pattern.permute.xlu0 0
        %821 = vperm.xlu0 %820, %v798
        %v822 = vpop.permute.xlu0 %821
        %823 = vset.pattern.permute.xlu0 0
        %824 = vperm.xlu0 %823, %v799
        %v825 = vpop.permute.xlu0 %824
        %826 = vset.pattern.permute.xlu0 0
        %827 = vperm.xlu0 %826, %v800
        %v828 = vpop.permute.xlu0 %827
        %829 = vset.pattern.permute.xlu0 0
        %830 = vperm.xlu0 %829, %v801
        %v831 = vpop.permute.xlu0 %830
        %832 = vset.pattern.permute.xlu0 0
        %833 = vperm.xlu0 %832, %v802
        %v834 = vpop.permute.xlu0 %833
        %835 = vset.pattern.permute.xlu0 0
        %836 = vperm.xlu0 %835, %v803
        %v837 = vpop.permute.xlu0 %836
        %838 = vset.pattern.permute.xlu0 0
        %839 = vperm.xlu0 %838, %v804
        %v840 = vpop.permute.xlu0 %839
        %841 = vset.pattern.permute.xlu0 0
        %842 = vperm.xlu0 %841, %v805
        %v843 = vpop.permute.xlu0 %842
        %844 = vset.pattern.permute.xlu0 0
        %845 = vperm.xlu0 %844, %v806
        %v846 = vpop.permute.xlu0 %845
        %847 = vset.pattern.permute.xlu0 0
        %848 = vperm.xlu0 %847, %v807
        %v849 = vpop.permute.xlu0 %848
        %850 = vset.pattern.permute.xlu0 0
        %851 = vperm.xlu0 %850, %v808
        %v852 = vpop.permute.xlu0 %851
        %853 = vset.pattern.permute.xlu0 0
        %854 = vperm.xlu0 %853, %v809
        %v855 = vpop.permute.xlu0 %854
        %856 = vset.pattern.permute.xlu0 0
        %857 = vperm.xlu0 %856, %v810
        %v858 = vpop.permute.xlu0 %857
        %vm859 = vcmp.eq.s32.totalorder %v794, %v813
        %vm860 = vcmp.eq.s32.totalorder %v794, %v816
        %vm861 = vcmp.eq.s32.totalorder %v794, %v819
        %vm862 = vcmp.eq.s32.totalorder %v794, %v822
        %vm863 = vcmp.eq.s32.totalorder %v794, %v825
        %vm864 = vcmp.eq.s32.totalorder %v794, %v828
        %vm865 = vcmp.eq.s32.totalorder %v794, %v831
        %vm866 = vcmp.eq.s32.totalorder %v794, %v834
        %vm867 = vcmp.eq.s32.totalorder %v794, %v837
        %vm868 = vcmp.eq.s32.totalorder %v794, %v840
        %vm869 = vcmp.eq.s32.totalorder %v794, %v843
        %vm870 = vcmp.eq.s32.totalorder %v794, %v846
        %vm871 = vcmp.eq.s32.totalorder %v794, %v849
        %vm872 = vcmp.eq.s32.totalorder %v794, %v852
        %vm873 = vcmp.eq.s32.totalorder %v794, %v855
        %vm874 = vcmp.eq.s32.totalorder %v794, %v858
        %v875 = vsel %vm859, 1, 0
        %v876 = vsel %vm860, 1, 0
        %v877 = vsel %vm861, 1, 0
        %v878 = vsel %vm862, 1, 0
        %v879 = vsel %vm863, 1, 0
        %v880 = vsel %vm864, 1, 0
        %v881 = vsel %vm865, 1, 0
        %v882 = vsel %vm866, 1, 0
        %v883 = vsel %vm867, 1, 0
        %v884 = vsel %vm868, 1, 0
        %v885 = vsel %vm869, 1, 0
        %v886 = vsel %vm870, 1, 0
        %v887 = vsel %vm871, 1, 0
        %v888 = vsel %vm872, 1, 0
        %v889 = vsel %vm873, 1, 0
        %v890 = vsel %vm874, 1, 0
        %v891 = vcvt.s32.f32 %v875
        %v892 = vcvt.s32.f32 %v876
        %v893 = vcvt.s32.f32 %v877
        %v894 = vcvt.s32.f32 %v878
        %v895 = vcvt.s32.f32 %v879
        %v896 = vcvt.s32.f32 %v880
        %v897 = vcvt.s32.f32 %v881
        %v898 = vcvt.s32.f32 %v882
        %v899 = vcvt.s32.f32 %v883
        %v900 = vcvt.s32.f32 %v884
        %v901 = vcvt.s32.f32 %v885
        %v902 = vcvt.s32.f32 %v886
        %v903 = vcvt.s32.f32 %v887
        %v904 = vcvt.s32.f32 %v888
        %v905 = vcvt.s32.f32 %v889
        %v906 = vcvt.s32.f32 %v890
        %v907 = vld [vmem:[%s3] sm:$0xff]
        %v908 = vld [vmem:[%s3 + $0x8] sm:$0xff]
        %v909 = vld [vmem:[%s3 + $0x10] sm:$0xff]
        %v910 = vld [vmem:[%s3 + $0x18] sm:$0xff]
        %v911 = vld [vmem:[%s3 + $0x20] sm:$0xff]
        %v912 = vld [vmem:[%s3 + $0x28] sm:$0xff]
        %v913 = vld [vmem:[%s3 + $0x30] sm:$0xff]
        %v914 = vld [vmem:[%s3 + $0x38] sm:$0xff]
        %v915 = vld [vmem:[%s3 + $0x40] sm:$0xff]
        %v916 = vld [vmem:[%s3 + $0x48] sm:$0xff]
        %v917 = vld [vmem:[%s3 + $0x50] sm:$0xff]
        %v918 = vld [vmem:[%s3 + $0x58] sm:$0xff]
        %v919 = vld [vmem:[%s3 + $0x60] sm:$0xff]
        %v920 = vld [vmem:[%s3 + $0x68] sm:$0xff]
        %v921 = vld [vmem:[%s3 + $0x70] sm:$0xff]
        %v922 = vld [vmem:[%s3 + $0x78] sm:$0xff]
        %923 = vset.pattern.permute.xlu0 0
        %924 = vperm.xlu0 %923, %v907
        %v925 = vpop.permute.xlu0 %924
        %926 = vset.pattern.permute.xlu0 0
        %927 = vperm.xlu0 %926, %v908
        %v928 = vpop.permute.xlu0 %927
        %929 = vset.pattern.permute.xlu0 0
        %930 = vperm.xlu0 %929, %v909
        %v931 = vpop.permute.xlu0 %930
        %932 = vset.pattern.permute.xlu0 0
        %933 = vperm.xlu0 %932, %v910
        %v934 = vpop.permute.xlu0 %933
        %935 = vset.pattern.permute.xlu0 0
        %936 = vperm.xlu0 %935, %v911
        %v937 = vpop.permute.xlu0 %936
        %938 = vset.pattern.permute.xlu0 0
        %939 = vperm.xlu0 %938, %v912
        %v940 = vpop.permute.xlu0 %939
        %941 = vset.pattern.permute.xlu0 0
        %942 = vperm.xlu0 %941, %v913
        %v943 = vpop.permute.xlu0 %942
        %944 = vset.pattern.permute.xlu0 0
        %945 = vperm.xlu0 %944, %v914
        %v946 = vpop.permute.xlu0 %945
        %947 = vset.pattern.permute.xlu0 0
        %948 = vperm.xlu0 %947, %v915
        %v949 = vpop.permute.xlu0 %948
        %950 = vset.pattern.permute.xlu0 0
        %951 = vperm.xlu0 %950, %v916
        %v952 = vpop.permute.xlu0 %951
        %953 = vset.pattern.permute.xlu0 0
        %954 = vperm.xlu0 %953, %v917
        %v955 = vpop.permute.xlu0 %954
        %956 = vset.pattern.permute.xlu0 0
        %957 = vperm.xlu0 %956, %v918
        %v958 = vpop.permute.xlu0 %957
        %959 = vset.pattern.permute.xlu0 0
        %960 = vperm.xlu0 %959, %v919
        %v961 = vpop.permute.xlu0 %960
        %962 = vset.pattern.permute.xlu0 0
        %963 = vperm.xlu0 %962, %v920
        %v964 = vpop.permute.xlu0 %963
        %965 = vset.pattern.permute.xlu0 0
        %966 = vperm.xlu0 %965, %v921
        %v967 = vpop.permute.xlu0 %966
        %968 = vset.pattern.permute.xlu0 0
        %969 = vperm.xlu0 %968, %v922
        %v970 = vpop.permute.xlu0 %969
        %vm971 = vcmp.eq.s32.totalorder %v794, %v925
        %vm972 = vcmp.eq.s32.totalorder %v794, %v928
        %vm973 = vcmp.eq.s32.totalorder %v794, %v931
        %vm974 = vcmp.eq.s32.totalorder %v794, %v934
        %vm975 = vcmp.eq.s32.totalorder %v794, %v937
        %vm976 = vcmp.eq.s32.totalorder %v794, %v940
        %vm977 = vcmp.eq.s32.totalorder %v794, %v943
        %vm978 = vcmp.eq.s32.totalorder %v794, %v946
        %vm979 = vcmp.eq.s32.totalorder %v794, %v949
        %vm980 = vcmp.eq.s32.totalorder %v794, %v952
        %vm981 = vcmp.eq.s32.totalorder %v794, %v955
        %vm982 = vcmp.eq.s32.totalorder %v794, %v958
        %vm983 = vcmp.eq.s32.totalorder %v794, %v961
        %vm984 = vcmp.eq.s32.totalorder %v794, %v964
        %vm985 = vcmp.eq.s32.totalorder %v794, %v967
        %vm986 = vcmp.eq.s32.totalorder %v794, %v970
        %v987 = vsel %vm971, 1, 0
        %v988 = vsel %vm972, 1, 0
        %v989 = vsel %vm973, 1, 0
        %v990 = vsel %vm974, 1, 0
        %v991 = vsel %vm975, 1, 0
        %v992 = vsel %vm976, 1, 0
        %v993 = vsel %vm977, 1, 0
        %v994 = vsel %vm978, 1, 0
        %v995 = vsel %vm979, 1, 0
        %v996 = vsel %vm980, 1, 0
        %v997 = vsel %vm981, 1, 0
        %v998 = vsel %vm982, 1, 0
        %v999 = vsel %vm983, 1, 0
        %v1000 = vsel %vm984, 1, 0
        %v1001 = vsel %vm985, 1, 0
        %v1002 = vsel %vm986, 1, 0
        %v1003 = vcvt.s32.f32 %v987
        %v1004 = vcvt.s32.f32 %v988
        %v1005 = vcvt.s32.f32 %v989
        %v1006 = vcvt.s32.f32 %v990
        %v1007 = vcvt.s32.f32 %v991
        %v1008 = vcvt.s32.f32 %v992
        %v1009 = vcvt.s32.f32 %v993
        %v1010 = vcvt.s32.f32 %v994
        %v1011 = vcvt.s32.f32 %v995
        %v1012 = vcvt.s32.f32 %v996
        %v1013 = vcvt.s32.f32 %v997
        %v1014 = vcvt.s32.f32 %v998
        %v1015 = vcvt.s32.f32 %v999
        %v1016 = vcvt.s32.f32 %v1000
        %v1017 = vcvt.s32.f32 %v1001
        %v1018 = vcvt.s32.f32 %v1002
        %v1019 = vpack.c.bf16 %v891, %v891
        %v1020 = vpack.c.bf16 %v892, %v892
        %v1021 = vpack.c.bf16 %v893, %v893
        %v1022 = vpack.c.bf16 %v894, %v894
        %v1023 = vpack.c.bf16 %v895, %v895
        %v1024 = vpack.c.bf16 %v896, %v896
        %v1025 = vpack.c.bf16 %v897, %v897
        %v1026 = vpack.c.bf16 %v898, %v898
        %v1027 = vpack.c.bf16 %v899, %v899
        %v1028 = vpack.c.bf16 %v900, %v900
        %v1029 = vpack.c.bf16 %v901, %v901
        %v1030 = vpack.c.bf16 %v902, %v902
        %v1031 = vpack.c.bf16 %v903, %v903
        %v1032 = vpack.c.bf16 %v904, %v904
        %v1033 = vpack.c.bf16 %v905, %v905
        %v1034 = vpack.c.bf16 %v906, %v906
        %1035 = vst [vmem:[#allocation2] sm:$0xf] %v1019
        %1036 = vst [vmem:[#allocation2 + $0x4] sm:$0xf] %v1020
        %1037 = vst [vmem:[#allocation2 + $0x8] sm:$0xf] %v1021
        %1038 = vst [vmem:[#allocation2 + $0xc] sm:$0xf] %v1022
        %1039 = vst [vmem:[#allocation2 + $0x10] sm:$0xf] %v1023
        %1040 = vst [vmem:[#allocation2 + $0x14] sm:$0xf] %v1024
        %1041 = vst [vmem:[#allocation2 + $0x18] sm:$0xf] %v1025
        %1042 = vst [vmem:[#allocation2 + $0x1c] sm:$0xf] %v1026
        %1043 = vst [vmem:[#allocation2 + $0x20] sm:$0xf] %v1027
        %1044 = vst [vmem:[#allocation2 + $0x24] sm:$0xf] %v1028
        %1045 = vst [vmem:[#allocation2 + $0x28] sm:$0xf] %v1029
        %1046 = vst [vmem:[#allocation2 + $0x2c] sm:$0xf] %v1030
        %1047 = vst [vmem:[#allocation2 + $0x30] sm:$0xf] %v1031
        %1048 = vst [vmem:[#allocation2 + $0x34] sm:$0xf] %v1032
        %1049 = vst [vmem:[#allocation2 + $0x38] sm:$0xf] %v1033
        %1050 = vst [vmem:[#allocation2 + $0x3c] sm:$0xf] %v1034
        %v1051 = vpack.c.bf16 %v1003, %v1003
        %v1052 = vpack.c.bf16 %v1004, %v1004
        %v1053 = vpack.c.bf16 %v1005, %v1005
        %v1054 = vpack.c.bf16 %v1006, %v1006
        %v1055 = vpack.c.bf16 %v1007, %v1007
        %v1056 = vpack.c.bf16 %v1008, %v1008
        %v1057 = vpack.c.bf16 %v1009, %v1009
        %v1058 = vpack.c.bf16 %v1010, %v1010
        %v1059 = vpack.c.bf16 %v1011, %v1011
        %v1060 = vpack.c.bf16 %v1012, %v1012
        %v1061 = vpack.c.bf16 %v1013, %v1013
        %v1062 = vpack.c.bf16 %v1014, %v1014
        %v1063 = vpack.c.bf16 %v1015, %v1015
        %v1064 = vpack.c.bf16 %v1016, %v1016
        %v1065 = vpack.c.bf16 %v1017, %v1017
        %v1066 = vpack.c.bf16 %v1018, %v1018
        %1067 = vst [vmem:[#allocation3] sm:$0xf] %v1051
        %1068 = vst [vmem:[#allocation3 + $0x4] sm:$0xf] %v1052
        %1069 = vst [vmem:[#allocation3 + $0x8] sm:$0xf] %v1053
        %1070 = vst [vmem:[#allocation3 + $0xc] sm:$0xf] %v1054
        %1071 = vst [vmem:[#allocation3 + $0x10] sm:$0xf] %v1055
        %1072 = vst [vmem:[#allocation3 + $0x14] sm:$0xf] %v1056
        %1073 = vst [vmem:[#allocation3 + $0x18] sm:$0xf] %v1057
        %1074 = vst [vmem:[#allocation3 + $0x1c] sm:$0xf] %v1058
        %1075 = vst [vmem:[#allocation3 + $0x20] sm:$0xf] %v1059
        %1076 = vst [vmem:[#allocation3 + $0x24] sm:$0xf] %v1060
        %1077 = vst [vmem:[#allocation3 + $0x28] sm:$0xf] %v1061
        %1078 = vst [vmem:[#allocation3 + $0x2c] sm:$0xf] %v1062
        %1079 = vst [vmem:[#allocation3 + $0x30] sm:$0xf] %v1063
        %1080 = vst [vmem:[#allocation3 + $0x34] sm:$0xf] %v1064
        %1081 = vst [vmem:[#allocation3 + $0x38] sm:$0xf] %v1065
        %1082 = vst [vmem:[#allocation3 + $0x3c] sm:$0xf] %v1066
        %v1083 = vadd.f32 %v891, %v1003
        %v1084 = vadd.f32 %v892, %v1004
        %v1085 = vadd.f32 %v893, %v1005
        %v1086 = vadd.f32 %v894, %v1006
        %v1087 = vadd.f32 %v895, %v1007
        %v1088 = vadd.f32 %v896, %v1008
        %v1089 = vadd.f32 %v897, %v1009
        %v1090 = vadd.f32 %v898, %v1010
        %v1091 = vadd.f32 %v899, %v1011
        %v1092 = vadd.f32 %v900, %v1012
        %v1093 = vadd.f32 %v901, %v1013
        %v1094 = vadd.f32 %v902, %v1014
        %v1095 = vadd.f32 %v903, %v1015
        %v1096 = vadd.f32 %v904, %v1016
        %v1097 = vadd.f32 %v905, %v1017
        %v1098 = vadd.f32 %v906, %v1018
        %1099 = vxpose.xlu0.b32.start [1/16] %v1083, 128
        %1100 = vxpose.xlu0.b32.cont [2/16] %v1084, 128
        %1101 = vxpose.xlu0.b32.cont [3/16] %v1085, 128
        %1102 = vxpose.xlu0.b32.cont [4/16] %v1086, 128
        %1103 = vxpose.xlu0.b32.cont [5/16] %v1087, 128
        %1104 = vxpose.xlu0.b32.cont [6/16] %v1088, 128
        %1105 = vxpose.xlu0.b32.cont [7/16] %v1089, 128
        %1106 = vxpose.xlu0.b32.cont [8/16] %v1090, 128
        %1107 = vxpose.xlu0.b32.cont [9/16] %v1091, 128
        %1108 = vxpose.xlu0.b32.cont [10/16] %v1092, 128
        %1109 = vxpose.xlu0.b32.cont [11/16] %v1093, 128
        %1110 = vxpose.xlu0.b32.cont [12/16] %v1094, 128
        %1111 = vxpose.xlu0.b32.cont [13/16] %v1095, 128
        %1112 = vxpose.xlu0.b32.cont [14/16] %v1096, 128
        %1113 = vxpose.xlu0.b32.cont [15/16] %v1097, 128
        %1114 = vxpose.xlu0.b32.end [16/16] %v1098, 128
        %v1115 = vpop.trf.xlu0
        %v1116 = vpop.trf.xlu0
        %v1117 = vpop.trf.xlu0
        %v1118 = vpop.trf.xlu0
        %v1119 = vpop.trf.xlu0
        %v1120 = vpop.trf.xlu0
        %v1121 = vpop.trf.xlu0
        %v1122 = vpop.trf.xlu0
        %v1123 = vpop.trf.xlu0
        %v1124 = vpop.trf.xlu0
        %v1125 = vpop.trf.xlu0
        %v1126 = vpop.trf.xlu0
        %v1127 = vpop.trf.xlu0
        %v1128 = vpop.trf.xlu0
        %v1129 = vpop.trf.xlu0
        %v1130 = vpop.trf.xlu0
        %1131 = vmatpush.msra.mxu0 1.0
        %1132 = vmatpush.msra.mxu0 1.0
        %1133 = vmatpush.msra.mxu0 1.0
        %1134 = vmatpush.msra.mxu0 1.0
        %1135 = vmatpush.msra.mxu0 1.0
        %1136 = vmatpush.msra.mxu0 1.0
        %1137 = vmatpush.msra.mxu0 1.0
        %1138 = vmatpush.msra.mxu0 1.0
        %1139 = vmatpush.msra.mxu0 1.0
        %1140 = vmatpush.msra.mxu0 1.0
        %1141 = vmatpush.msra.mxu0 1.0
        %1142 = vmatpush.msra.mxu0 1.0
        %1143 = vmatpush.msra.mxu0 1.0
        %1144 = vmatpush.msra.mxu0 1.0
        %1145 = vmatpush.msra.mxu0 1.0
        %1146 = vmatpush.msra.mxu0 1.0
        %1147 = vmatmul.f32.gmra.mxu0 %v1115
        %v1148 = vpop.f32.mrf.mxu0
        %v1149 = vadd.f32 0.0, %v1148
        %1150 = vmatmul.f32.gmra.mxu0 %v1116
        %v1151 = vpop.f32.mrf.mxu0
        %v1152 = vadd.f32 0.0, %v1151
        %1153 = vmatmul.f32.gmra.mxu0 %v1117
        %v1154 = vpop.f32.mrf.mxu0
        %v1155 = vadd.f32 0.0, %v1154
        %1156 = vmatmul.f32.gmra.mxu0 %v1118
        %v1157 = vpop.f32.mrf.mxu0
        %v1158 = vadd.f32 0.0, %v1157
        %1159 = vmatmul.f32.gmra.mxu0 %v1119
        %v1160 = vpop.f32.mrf.mxu0
        %v1161 = vadd.f32 0.0, %v1160
        %1162 = vmatmul.f32.gmra.mxu0 %v1120
        %v1163 = vpop.f32.mrf.mxu0
        %v1164 = vadd.f32 0.0, %v1163
        %1165 = vmatmul.f32.gmra.mxu0 %v1121
        %v1166 = vpop.f32.mrf.mxu0
        %v1167 = vadd.f32 0.0, %v1166
        %1168 = vmatmul.f32.gmra.mxu0 %v1122
        %v1169 = vpop.f32.mrf.mxu0
        %v1170 = vadd.f32 0.0, %v1169
        %1171 = vmatmul.f32.gmra.mxu0 %v1123
        %v1172 = vpop.f32.mrf.mxu0
        %v1173 = vadd.f32 0.0, %v1172
        %1174 = vmatmul.f32.gmra.mxu0 %v1124
        %v1175 = vpop.f32.mrf.mxu0
        %v1176 = vadd.f32 0.0, %v1175
        %1177 = vmatmul.f32.gmra.mxu0 %v1125
        %v1178 = vpop.f32.mrf.mxu0
        %v1179 = vadd.f32 0.0, %v1178
        %1180 = vmatmul.f32.gmra.mxu0 %v1126
        %v1181 = vpop.f32.mrf.mxu0
        %v1182 = vadd.f32 0.0, %v1181
        %1183 = vmatmul.f32.gmra.mxu0 %v1127
        %v1184 = vpop.f32.mrf.mxu0
        %v1185 = vadd.f32 0.0, %v1184
        %1186 = vmatmul.f32.gmra.mxu0 %v1128
        %v1187 = vpop.f32.mrf.mxu0
        %v1188 = vadd.f32 0.0, %v1187
        %1189 = vmatmul.f32.gmra.mxu0 %v1129
        %v1190 = vpop.f32.mrf.mxu0
        %v1191 = vadd.f32 0.0, %v1190
        %1192 = vmatmul.f32.gmra.mxu0 %v1130
        %v1193 = vpop.f32.mrf.mxu0
        %v1194 = vadd.f32 0.0, %v1193
        %1195 = vdwg.mxu0
        %v1196 = vmax.f32 %v1149, 1.0
        %v1197 = vmax.f32 %v1152, 1.0
        %v1198 = vmax.f32 %v1155, 1.0
        %v1199 = vmax.f32 %v1158, 1.0
        %v1200 = vmax.f32 %v1161, 1.0
        %v1201 = vmax.f32 %v1164, 1.0
        %v1202 = vmax.f32 %v1167, 1.0
        %v1203 = vmax.f32 %v1170, 1.0
        %v1204 = vmax.f32 %v1173, 1.0
        %v1205 = vmax.f32 %v1176, 1.0
        %v1206 = vmax.f32 %v1179, 1.0
        %v1207 = vmax.f32 %v1182, 1.0
        %v1208 = vmax.f32 %v1185, 1.0
        %v1209 = vmax.f32 %v1188, 1.0
        %v1210 = vmax.f32 %v1191, 1.0
        %v1211 = vmax.f32 %v1194, 1.0
        %v1212 = vrcp.pop %v1196
        %v1213 = vmul.f32 %v1196, %v1212
        %v1214 = vsub.f32 1.0, %v1213
        %v1215 = vmul.f32 %v1212, %v1214
        %v1216 = vadd.f32 %v1212, %v1215
        %vm1217 = vweird.f32 %v1196
        %vm1218 = vweird.f32 %v1212
        %vm1219 = vmor %vm1217, %vm1218
        %v1220 = vsel %vm1219, %v1212, %v1216
        %v1221 = vand.u32 2147483647, %v1196
        %vm1222 = vcmp.eq.f32.partialorder %v1221, 8.507059e+37
        %v1223 = vand.u32 %v1196, 2147483648
        %v1224 = vor.u32 1.1754944e-38, %v1223
        %v1225 = vsel %vm1222, %v1224, %v1220
        %v1226 = vmul.f32 1.0, %v1225
        %v1227 = vrcp.pop %v1197
        %v1228 = vmul.f32 %v1197, %v1227
        %v1229 = vsub.f32 1.0, %v1228
        %v1230 = vmul.f32 %v1227, %v1229
        %v1231 = vadd.f32 %v1227, %v1230
        %vm1232 = vweird.f32 %v1197
        %vm1233 = vweird.f32 %v1227
        %vm1234 = vmor %vm1232, %vm1233
        %v1235 = vsel %vm1234, %v1227, %v1231
        %v1236 = vand.u32 2147483647, %v1197
        %vm1237 = vcmp.eq.f32.partialorder %v1236, 8.507059e+37
        %v1238 = vand.u32 %v1197, 2147483648
        %v1239 = vor.u32 1.1754944e-38, %v1238
        %v1240 = vsel %vm1237, %v1239, %v1235
        %v1241 = vmul.f32 1.0, %v1240
        %v1242 = vrcp.pop %v1198
        %v1243 = vmul.f32 %v1198, %v1242
        %v1244 = vsub.f32 1.0, %v1243
        %v1245 = vmul.f32 %v1242, %v1244
        %v1246 = vadd.f32 %v1242, %v1245
        %vm1247 = vweird.f32 %v1198
        %vm1248 = vweird.f32 %v1242
        %vm1249 = vmor %vm1247, %vm1248
        %v1250 = vsel %vm1249, %v1242, %v1246
        %v1251 = vand.u32 2147483647, %v1198
        %vm1252 = vcmp.eq.f32.partialorder %v1251, 8.507059e+37
        %v1253 = vand.u32 %v1198, 2147483648
        %v1254 = vor.u32 1.1754944e-38, %v1253
        %v1255 = vsel %vm1252, %v1254, %v1250
        %v1256 = vmul.f32 1.0, %v1255
        %v1257 = vrcp.pop %v1199
        %v1258 = vmul.f32 %v1199, %v1257
        %v1259 = vsub.f32 1.0, %v1258
        %v1260 = vmul.f32 %v1257, %v1259
        %v1261 = vadd.f32 %v1257, %v1260
        %vm1262 = vweird.f32 %v1199
        %vm1263 = vweird.f32 %v1257
        %vm1264 = vmor %vm1262, %vm1263
        %v1265 = vsel %vm1264, %v1257, %v1261
        %v1266 = vand.u32 2147483647, %v1199
        %vm1267 = vcmp.eq.f32.partialorder %v1266, 8.507059e+37
        %v1268 = vand.u32 %v1199, 2147483648
        %v1269 = vor.u32 1.1754944e-38, %v1268
        %v1270 = vsel %vm1267, %v1269, %v1265
        %v1271 = vmul.f32 1.0, %v1270
        %v1272 = vrcp.pop %v1200
        %v1273 = vmul.f32 %v1200, %v1272
        %v1274 = vsub.f32 1.0, %v1273
        %v1275 = vmul.f32 %v1272, %v1274
        %v1276 = vadd.f32 %v1272, %v1275
        %vm1277 = vweird.f32 %v1200
        %vm1278 = vweird.f32 %v1272
        %vm1279 = vmor %vm1277, %vm1278
        %v1280 = vsel %vm1279, %v1272, %v1276
        %v1281 = vand.u32 2147483647, %v1200
        %vm1282 = vcmp.eq.f32.partialorder %v1281, 8.507059e+37
        %v1283 = vand.u32 %v1200, 2147483648
        %v1284 = vor.u32 1.1754944e-38, %v1283
        %v1285 = vsel %vm1282, %v1284, %v1280
        %v1286 = vmul.f32 1.0, %v1285
        %v1287 = vrcp.pop %v1201
        %v1288 = vmul.f32 %v1201, %v1287
        %v1289 = vsub.f32 1.0, %v1288
        %v1290 = vmul.f32 %v1287, %v1289
        %v1291 = vadd.f32 %v1287, %v1290
        %vm1292 = vweird.f32 %v1201
        %vm1293 = vweird.f32 %v1287
        %vm1294 = vmor %vm1292, %vm1293
        %v1295 = vsel %vm1294, %v1287, %v1291
        %v1296 = vand.u32 2147483647, %v1201
        %vm1297 = vcmp.eq.f32.partialorder %v1296, 8.507059e+37
        %v1298 = vand.u32 %v1201, 2147483648
        %v1299 = vor.u32 1.1754944e-38, %v1298
        %v1300 = vsel %vm1297, %v1299, %v1295
        %v1301 = vmul.f32 1.0, %v1300
        %v1302 = vrcp.pop %v1202
        %v1303 = vmul.f32 %v1202, %v1302
        %v1304 = vsub.f32 1.0, %v1303
        %v1305 = vmul.f32 %v1302, %v1304
        %v1306 = vadd.f32 %v1302, %v1305
        %vm1307 = vweird.f32 %v1202
        %vm1308 = vweird.f32 %v1302
        %vm1309 = vmor %vm1307, %vm1308
        %v1310 = vsel %vm1309, %v1302, %v1306
        %v1311 = vand.u32 2147483647, %v1202
        %vm1312 = vcmp.eq.f32.partialorder %v1311, 8.507059e+37
        %v1313 = vand.u32 %v1202, 2147483648
        %v1314 = vor.u32 1.1754944e-38, %v1313
        %v1315 = vsel %vm1312, %v1314, %v1310
        %v1316 = vmul.f32 1.0, %v1315
        %v1317 = vrcp.pop %v1203
        %v1318 = vmul.f32 %v1203, %v1317
        %v1319 = vsub.f32 1.0, %v1318
        %v1320 = vmul.f32 %v1317, %v1319
        %v1321 = vadd.f32 %v1317, %v1320
        %vm1322 = vweird.f32 %v1203
        %vm1323 = vweird.f32 %v1317
        %vm1324 = vmor %vm1322, %vm1323
        %v1325 = vsel %vm1324, %v1317, %v1321
        %v1326 = vand.u32 2147483647, %v1203
        %vm1327 = vcmp.eq.f32.partialorder %v1326, 8.507059e+37
        %v1328 = vand.u32 %v1203, 2147483648
        %v1329 = vor.u32 1.1754944e-38, %v1328
        %v1330 = vsel %vm1327, %v1329, %v1325
        %v1331 = vmul.f32 1.0, %v1330
        %v1332 = vrcp.pop %v1204
        %v1333 = vmul.f32 %v1204, %v1332
        %v1334 = vsub.f32 1.0, %v1333
        %v1335 = vmul.f32 %v1332, %v1334
        %v1336 = vadd.f32 %v1332, %v1335
        %vm1337 = vweird.f32 %v1204
        %vm1338 = vweird.f32 %v1332
        %vm1339 = vmor %vm1337, %vm1338
        %v1340 = vsel %vm1339, %v1332, %v1336
        %v1341 = vand.u32 2147483647, %v1204
        %vm1342 = vcmp.eq.f32.partialorder %v1341, 8.507059e+37
        %v1343 = vand.u32 %v1204, 2147483648
        %v1344 = vor.u32 1.1754944e-38, %v1343
        %v1345 = vsel %vm1342, %v1344, %v1340
        %v1346 = vmul.f32 1.0, %v1345
        %v1347 = vrcp.pop %v1205
        %v1348 = vmul.f32 %v1205, %v1347
        %v1349 = vsub.f32 1.0, %v1348
        %v1350 = vmul.f32 %v1347, %v1349
        %v1351 = vadd.f32 %v1347, %v1350
        %vm1352 = vweird.f32 %v1205
        %vm1353 = vweird.f32 %v1347
        %vm1354 = vmor %vm1352, %vm1353
        %v1355 = vsel %vm1354, %v1347, %v1351
        %v1356 = vand.u32 2147483647, %v1205
        %vm1357 = vcmp.eq.f32.partialorder %v1356, 8.507059e+37
        %v1358 = vand.u32 %v1205, 2147483648
        %v1359 = vor.u32 1.1754944e-38, %v1358
        %v1360 = vsel %vm1357, %v1359, %v1355
        %v1361 = vmul.f32 1.0, %v1360
        %v1362 = vrcp.pop %v1206
        %v1363 = vmul.f32 %v1206, %v1362
        %v1364 = vsub.f32 1.0, %v1363
        %v1365 = vmul.f32 %v1362, %v1364
        %v1366 = vadd.f32 %v1362, %v1365
        %vm1367 = vweird.f32 %v1206
        %vm1368 = vweird.f32 %v1362
        %vm1369 = vmor %vm1367, %vm1368
        %v1370 = vsel %vm1369, %v1362, %v1366
        %v1371 = vand.u32 2147483647, %v1206
        %vm1372 = vcmp.eq.f32.partialorder %v1371, 8.507059e+37
        %v1373 = vand.u32 %v1206, 2147483648
        %v1374 = vor.u32 1.1754944e-38, %v1373
        %v1375 = vsel %vm1372, %v1374, %v1370
        %v1376 = vmul.f32 1.0, %v1375
        %v1377 = vrcp.pop %v1207
        %v1378 = vmul.f32 %v1207, %v1377
        %v1379 = vsub.f32 1.0, %v1378
        %v1380 = vmul.f32 %v1377, %v1379
        %v1381 = vadd.f32 %v1377, %v1380
        %vm1382 = vweird.f32 %v1207
        %vm1383 = vweird.f32 %v1377
        %vm1384 = vmor %vm1382, %vm1383
        %v1385 = vsel %vm1384, %v1377, %v1381
        %v1386 = vand.u32 2147483647, %v1207
        %vm1387 = vcmp.eq.f32.partialorder %v1386, 8.507059e+37
        %v1388 = vand.u32 %v1207, 2147483648
        %v1389 = vor.u32 1.1754944e-38, %v1388
        %v1390 = vsel %vm1387, %v1389, %v1385
        %v1391 = vmul.f32 1.0, %v1390
        %v1392 = vrcp.pop %v1208
        %v1393 = vmul.f32 %v1208, %v1392
        %v1394 = vsub.f32 1.0, %v1393
        %v1395 = vmul.f32 %v1392, %v1394
        %v1396 = vadd.f32 %v1392, %v1395
        %vm1397 = vweird.f32 %v1208
        %vm1398 = vweird.f32 %v1392
        %vm1399 = vmor %vm1397, %vm1398
        %v1400 = vsel %vm1399, %v1392, %v1396
        %v1401 = vand.u32 2147483647, %v1208
        %vm1402 = vcmp.eq.f32.partialorder %v1401, 8.507059e+37
        %v1403 = vand.u32 %v1208, 2147483648
        %v1404 = vor.u32 1.1754944e-38, %v1403
        %v1405 = vsel %vm1402, %v1404, %v1400
        %v1406 = vmul.f32 1.0, %v1405
        %v1407 = vrcp.pop %v1209
        %v1408 = vmul.f32 %v1209, %v1407
        %v1409 = vsub.f32 1.0, %v1408
        %v1410 = vmul.f32 %v1407, %v1409
        %v1411 = vadd.f32 %v1407, %v1410
        %vm1412 = vweird.f32 %v1209
        %vm1413 = vweird.f32 %v1407
        %vm1414 = vmor %vm1412, %vm1413
        %v1415 = vsel %vm1414, %v1407, %v1411
        %v1416 = vand.u32 2147483647, %v1209
        %vm1417 = vcmp.eq.f32.partialorder %v1416, 8.507059e+37
        %v1418 = vand.u32 %v1209, 2147483648
        %v1419 = vor.u32 1.1754944e-38, %v1418
        %v1420 = vsel %vm1417, %v1419, %v1415
        %v1421 = vmul.f32 1.0, %v1420
        %v1422 = vrcp.pop %v1210
        %v1423 = vmul.f32 %v1210, %v1422
        %v1424 = vsub.f32 1.0, %v1423
        %v1425 = vmul.f32 %v1422, %v1424
        %v1426 = vadd.f32 %v1422, %v1425
        %vm1427 = vweird.f32 %v1210
        %vm1428 = vweird.f32 %v1422
        %vm1429 = vmor %vm1427, %vm1428
        %v1430 = vsel %vm1429, %v1422, %v1426
        %v1431 = vand.u32 2147483647, %v1210
        %vm1432 = vcmp.eq.f32.partialorder %v1431, 8.507059e+37
        %v1433 = vand.u32 %v1210, 2147483648
        %v1434 = vor.u32 1.1754944e-38, %v1433
        %v1435 = vsel %vm1432, %v1434, %v1430
        %v1436 = vmul.f32 1.0, %v1435
        %v1437 = vrcp.pop %v1211
        %v1438 = vmul.f32 %v1211, %v1437
        %v1439 = vsub.f32 1.0, %v1438
        %v1440 = vmul.f32 %v1437, %v1439
        %v1441 = vadd.f32 %v1437, %v1440
        %vm1442 = vweird.f32 %v1211
        %vm1443 = vweird.f32 %v1437
        %vm1444 = vmor %vm1442, %vm1443
        %v1445 = vsel %vm1444, %v1437, %v1441
        %v1446 = vand.u32 2147483647, %v1211
        %vm1447 = vcmp.eq.f32.partialorder %v1446, 8.507059e+37
        %v1448 = vand.u32 %v1211, 2147483648
        %v1449 = vor.u32 1.1754944e-38, %v1448
        %v1450 = vsel %vm1447, %v1449, %v1445
        %v1451 = vmul.f32 1.0, %v1450
        %1452 = vst [vmem:[#allocation4] sm:$0xff] %v1226
        %1453 = vst [vmem:[#allocation4 + $0x8] sm:$0xff] %v1241
        %1454 = vst [vmem:[#allocation4 + $0x10] sm:$0xff] %v1256
        %1455 = vst [vmem:[#allocation4 + $0x18] sm:$0xff] %v1271
        %1456 = vst [vmem:[#allocation4 + $0x20] sm:$0xff] %v1286
        %1457 = vst [vmem:[#allocation4 + $0x28] sm:$0xff] %v1301
        %1458 = vst [vmem:[#allocation4 + $0x30] sm:$0xff] %v1316
        %1459 = vst [vmem:[#allocation4 + $0x38] sm:$0xff] %v1331
        %1460 = vst [vmem:[#allocation4 + $0x40] sm:$0xff] %v1346
        %1461 = vst [vmem:[#allocation4 + $0x48] sm:$0xff] %v1361
        %1462 = vst [vmem:[#allocation4 + $0x50] sm:$0xff] %v1376
        %1463 = vst [vmem:[#allocation4 + $0x58] sm:$0xff] %v1391
        %1464 = vst [vmem:[#allocation4 + $0x60] sm:$0xff] %v1406
        %1465 = vst [vmem:[#allocation4 + $0x68] sm:$0xff] %v1421
        %1466 = vst [vmem:[#allocation4 + $0x70] sm:$0xff] %v1436
        %1467 = vst [vmem:[#allocation4 + $0x78] sm:$0xff] %v1451
      $region88: #{graph_triple_conv_net.1} parent=83 // pred_fallthru
        _
      %v1468 = vld [vmem:[%s16] sm:$0xff]
      %v1469 = vld [vmem:[%s16 + $0x8] sm:$0xff]
      %v1470 = vld [vmem:[%s16 + $0x10] sm:$0xff]
      %v1471 = vld [vmem:[%s16 + $0x18] sm:$0xff]
      %v1472 = vld [vmem:[%s16 + $0x20] sm:$0xff]
      %v1473 = vld [vmem:[%s16 + $0x28] sm:$0xff]
      %v1474 = vld [vmem:[%s16 + $0x30] sm:$0xff]
      %v1475 = vld [vmem:[%s16 + $0x38] sm:$0xff]
      %v1476 = vld [vmem:[%s16 + $0x40] sm:$0xff]
      %v1477 = vld [vmem:[%s16 + $0x48] sm:$0xff]
      %v1478 = vld [vmem:[%s16 + $0x50] sm:$0xff]
      %v1479 = vld [vmem:[%s16 + $0x58] sm:$0xff]
      %v1480 = vld [vmem:[%s16 + $0x60] sm:$0xff]
      %v1481 = vld [vmem:[%s16 + $0x68] sm:$0xff]
      %v1482 = vld [vmem:[%s16 + $0x70] sm:$0xff]
      %v1483 = vld [vmem:[%s16 + $0x78] sm:$0xff]
      %v1484 = vld [vmem:[%s17] sm:$0xff]
      %v1485 = vld [vmem:[%s17 + $0x8] sm:$0xff]
      %v1486 = vld [vmem:[%s17 + $0x10] sm:$0xff]
      %v1487 = vld [vmem:[%s17 + $0x18] sm:$0xff]
      %v1488 = vld [vmem:[%s17 + $0x20] sm:$0xff]
      %v1489 = vld [vmem:[%s17 + $0x28] sm:$0xff]
      %v1490 = vld [vmem:[%s17 + $0x30] sm:$0xff]
      %v1491 = vld [vmem:[%s17 + $0x38] sm:$0xff]
      %v1492 = vld [vmem:[%s17 + $0x40] sm:$0xff]
      %v1493 = vld [vmem:[%s17 + $0x48] sm:$0xff]
      %v1494 = vld [vmem:[%s17 + $0x50] sm:$0xff]
      %v1495 = vld [vmem:[%s17 + $0x58] sm:$0xff]
      %v1496 = vld [vmem:[%s17 + $0x60] sm:$0xff]
      %v1497 = vld [vmem:[%s17 + $0x68] sm:$0xff]
      %v1498 = vld [vmem:[%s17 + $0x70] sm:$0xff]
      %v1499 = vld [vmem:[%s17 + $0x78] sm:$0xff]
      %v1500 = vpack.c.bf16 %v1469, %v1468
      %v1501 = vpack.c.bf16 %v1471, %v1470
      %v1502 = vpack.c.bf16 %v1473, %v1472
      %v1503 = vpack.c.bf16 %v1475, %v1474
      %v1504 = vpack.c.bf16 %v1477, %v1476
      %v1505 = vpack.c.bf16 %v1479, %v1478
      %v1506 = vpack.c.bf16 %v1481, %v1480
      %v1507 = vpack.c.bf16 %v1483, %v1482
      %v1508 = vld [vmem:[#allocation2] sm:$0xf]
      %v1509 = vld [vmem:[#allocation2 + $0x4] sm:$0xf]
      %v1510 = vld [vmem:[#allocation2 + $0x8] sm:$0xf]
      %v1511 = vld [vmem:[#allocation2 + $0xc] sm:$0xf]
      %v1512 = vld [vmem:[#allocation2 + $0x10] sm:$0xf]
      %v1513 = vld [vmem:[#allocation2 + $0x14] sm:$0xf]
      %v1514 = vld [vmem:[#allocation2 + $0x18] sm:$0xf]
      %v1515 = vld [vmem:[#allocation2 + $0x1c] sm:$0xf]
      %v1516 = vld [vmem:[#allocation2 + $0x20] sm:$0xf]
      %v1517 = vld [vmem:[#allocation2 + $0x24] sm:$0xf]
      %v1518 = vld [vmem:[#allocation2 + $0x28] sm:$0xf]
      %v1519 = vld [vmem:[#allocation2 + $0x2c] sm:$0xf]
      %v1520 = vld [vmem:[#allocation2 + $0x30] sm:$0xf]
      %v1521 = vld [vmem:[#allocation2 + $0x34] sm:$0xf]
      %v1522 = vld [vmem:[#allocation2 + $0x38] sm:$0xf]
      %v1523 = vld [vmem:[#allocation2 + $0x3c] sm:$0xf]
      %v1524 = vld [vmem:[#allocation3] sm:$0xf]
      %v1525 = vld [vmem:[#allocation3 + $0x4] sm:$0xf]
      %v1526 = vld [vmem:[#allocation3 + $0x8] sm:$0xf]
      %v1527 = vld [vmem:[#allocation3 + $0xc] sm:$0xf]
      %v1528 = vld [vmem:[#allocation3 + $0x10] sm:$0xf]
      %v1529 = vld [vmem:[#allocation3 + $0x14] sm:$0xf]
      %v1530 = vld [vmem:[#allocation3 + $0x18] sm:$0xf]
      %v1531 = vld [vmem:[#allocation3 + $0x1c] sm:$0xf]
      %v1532 = vld [vmem:[#allocation3 + $0x20] sm:$0xf]
      %v1533 = vld [vmem:[#allocation3 + $0x24] sm:$0xf]
      %v1534 = vld [vmem:[#allocation3 + $0x28] sm:$0xf]
      %v1535 = vld [vmem:[#allocation3 + $0x2c] sm:$0xf]
      %v1536 = vld [vmem:[#allocation3 + $0x30] sm:$0xf]
      %v1537 = vld [vmem:[#allocation3 + $0x34] sm:$0xf]
      %v1538 = vld [vmem:[#allocation3 + $0x38] sm:$0xf]
      %v1539 = vld [vmem:[#allocation3 + $0x3c] sm:$0xf]
      %v1556 = vunpack.c.l.b16 %v1508
      %v1557 = vunpack.c.l.b16 %v1509
      %v1558 = vunpack.c.l.b16 %v1510
      %v1559 = vunpack.c.l.b16 %v1511
      %v1560 = vunpack.c.l.b16 %v1512
      %v1561 = vunpack.c.l.b16 %v1513
      %v1562 = vunpack.c.l.b16 %v1514
      %v1563 = vunpack.c.l.b16 %v1515
      %v1564 = vunpack.c.l.b16 %v1516
      %v1565 = vunpack.c.l.b16 %v1517
      %v1566 = vunpack.c.l.b16 %v1518
      %v1567 = vunpack.c.l.b16 %v1519
      %v1568 = vunpack.c.l.b16 %v1520
      %v1569 = vunpack.c.l.b16 %v1521
      %v1570 = vunpack.c.l.b16 %v1522
      %v1571 = vunpack.c.l.b16 %v1523
      %v1572 = vpack.c.b16 %v1557, %v1556
      %v1573 = vpack.c.b16 %v1559, %v1558
      %v1574 = vpack.c.b16 %v1561, %v1560
      %v1575 = vpack.c.b16 %v1563, %v1562
      %v1576 = vpack.c.b16 %v1565, %v1564
      %v1577 = vpack.c.b16 %v1567, %v1566
      %v1578 = vpack.c.b16 %v1569, %v1568
      %v1579 = vpack.c.b16 %v1571, %v1570
      %1588 = vmatpush.bf16.msra.mxu0 %v1507
      %1589 = vmatpush.bf16.msra.mxu0 %v1506
      %1590 = vmatpush.bf16.msra.mxu0 %v1505
      %1591 = vmatpush.bf16.msra.mxu0 %v1504
      %1592 = vmatpush.bf16.msra.mxu0 %v1503
      %1593 = vmatpush.bf16.msra.mxu0 %v1502
      %1594 = vmatpush.bf16.msra.mxu0 %v1501
      %1595 = vmatpush.bf16.msra.mxu0 %v1500
      %1596 = vmatmul.bf16.gmra.mxu0 %v1572
      %v1597 = vpop.f32.mrf.mxu0
      %v1598 = vadd.f32 0.0, %v1597
      %v1599 = vpop.f32.mrf.mxu0
      %v1600 = vadd.f32 0.0, %v1599
      %1601 = vmatmul.bf16.gmra.mxu0 %v1573
      %v1602 = vpop.f32.mrf.mxu0
      %v1603 = vadd.f32 0.0, %v1602
      %v1604 = vpop.f32.mrf.mxu0
      %v1605 = vadd.f32 0.0, %v1604
      %1606 = vmatmul.bf16.gmra.mxu0 %v1574
      %v1607 = vpop.f32.mrf.mxu0
      %v1608 = vadd.f32 0.0, %v1607
      %v1609 = vpop.f32.mrf.mxu0
      %v1610 = vadd.f32 0.0, %v1609
      %1611 = vmatmul.bf16.gmra.mxu0 %v1575
      %v1612 = vpop.f32.mrf.mxu0
      %v1613 = vadd.f32 0.0, %v1612
      %v1614 = vpop.f32.mrf.mxu0
      %v1615 = vadd.f32 0.0, %v1614
      %1616 = vmatmul.bf16.gmra.mxu0 %v1576
      %v1617 = vpop.f32.mrf.mxu0
      %v1618 = vadd.f32 0.0, %v1617
      %v1619 = vpop.f32.mrf.mxu0
      %v1620 = vadd.f32 0.0, %v1619
      %1621 = vmatmul.bf16.gmra.mxu0 %v1577
      %v1622 = vpop.f32.mrf.mxu0
      %v1623 = vadd.f32 0.0, %v1622
      %v1624 = vpop.f32.mrf.mxu0
      %v1625 = vadd.f32 0.0, %v1624
      %1626 = vmatmul.bf16.gmra.mxu0 %v1578
      %v1627 = vpop.f32.mrf.mxu0
      %v1628 = vadd.f32 0.0, %v1627
      %v1629 = vpop.f32.mrf.mxu0
      %v1630 = vadd.f32 0.0, %v1629
      %1631 = vmatmul.bf16.gmra.mxu0 %v1579
      %v1632 = vpop.f32.mrf.mxu0
      %v1633 = vadd.f32 0.0, %v1632
      %v1634 = vpop.f32.mrf.mxu0
      %v1635 = vadd.f32 0.0, %v1634
      %1636 = vdwg.mxu0
      %v1653 = vunpack.c.l.b16 %v1524
      %v1654 = vunpack.c.l.b16 %v1525
      %v1655 = vunpack.c.l.b16 %v1526
      %v1656 = vunpack.c.l.b16 %v1527
      %v1657 = vunpack.c.l.b16 %v1528
      %v1658 = vunpack.c.l.b16 %v1529
      %v1659 = vunpack.c.l.b16 %v1530
      %v1660 = vunpack.c.l.b16 %v1531
      %v1661 = vunpack.c.l.b16 %v1532
      %v1662 = vunpack.c.l.b16 %v1533
      %v1663 = vunpack.c.l.b16 %v1534
      %v1664 = vunpack.c.l.b16 %v1535
      %v1665 = vunpack.c.l.b16 %v1536
      %v1666 = vunpack.c.l.b16 %v1537
      %v1667 = vunpack.c.l.b16 %v1538
      %v1668 = vunpack.c.l.b16 %v1539
      %v1669 = vpack.c.b16 %v1654, %v1653
      %v1670 = vpack.c.b16 %v1656, %v1655
      %v1671 = vpack.c.b16 %v1658, %v1657
      %v1672 = vpack.c.b16 %v1660, %v1659
      %v1673 = vpack.c.b16 %v1662, %v1661
      %v1674 = vpack.c.b16 %v1664, %v1663
      %v1675 = vpack.c.b16 %v1666, %v1665
      %v1676 = vpack.c.b16 %v1668, %v1667
      %1685 = vmatpush.bf16.msra.mxu0 %v1507
      %1686 = vmatpush.bf16.msra.mxu0 %v1506
      %1687 = vmatpush.bf16.msra.mxu0 %v1505
      %1688 = vmatpush.bf16.msra.mxu0 %v1504
      %1689 = vmatpush.bf16.msra.mxu0 %v1503
      %1690 = vmatpush.bf16.msra.mxu0 %v1502
      %1691 = vmatpush.bf16.msra.mxu0 %v1501
      %1692 = vmatpush.bf16.msra.mxu0 %v1500
      %1693 = vmatmul.bf16.gmra.mxu0 %v1669
      %v1694 = vpop.f32.mrf.mxu0
      %v1695 = vadd.f32 0.0, %v1694
      %v1696 = vpop.f32.mrf.mxu0
      %v1697 = vadd.f32 0.0, %v1696
      %1698 = vmatmul.bf16.gmra.mxu0 %v1670
      %v1699 = vpop.f32.mrf.mxu0
      %v1700 = vadd.f32 0.0, %v1699
      %v1701 = vpop.f32.mrf.mxu0
      %v1702 = vadd.f32 0.0, %v1701
      %1703 = vmatmul.bf16.gmra.mxu0 %v1671
      %v1704 = vpop.f32.mrf.mxu0
      %v1705 = vadd.f32 0.0, %v1704
      %v1706 = vpop.f32.mrf.mxu0
      %v1707 = vadd.f32 0.0, %v1706
      %1708 = vmatmul.bf16.gmra.mxu0 %v1672
      %v1709 = vpop.f32.mrf.mxu0
      %v1710 = vadd.f32 0.0, %v1709
      %v1711 = vpop.f32.mrf.mxu0
      %v1712 = vadd.f32 0.0, %v1711
      %1713 = vmatmul.bf16.gmra.mxu0 %v1673
      %v1714 = vpop.f32.mrf.mxu0
      %v1715 = vadd.f32 0.0, %v1714
      %v1716 = vpop.f32.mrf.mxu0
      %v1717 = vadd.f32 0.0, %v1716
      %1718 = vmatmul.bf16.gmra.mxu0 %v1674
      %v1719 = vpop.f32.mrf.mxu0
      %v1720 = vadd.f32 0.0, %v1719
      %v1721 = vpop.f32.mrf.mxu0
      %v1722 = vadd.f32 0.0, %v1721
      %1723 = vmatmul.bf16.gmra.mxu0 %v1675
      %v1724 = vpop.f32.mrf.mxu0
      %v1725 = vadd.f32 0.0, %v1724
      %v1726 = vpop.f32.mrf.mxu0
      %v1727 = vadd.f32 0.0, %v1726
      %1728 = vmatmul.bf16.gmra.mxu0 %v1676
      %v1729 = vpop.f32.mrf.mxu0
      %v1730 = vadd.f32 0.0, %v1729
      %v1731 = vpop.f32.mrf.mxu0
      %v1732 = vadd.f32 0.0, %v1731
      %1733 = vdwg.mxu0
      %v1734 = vpack.c.bf16 %v1600, %v1598
      %v1735 = vpack.c.bf16 %v1605, %v1603
      %v1736 = vpack.c.bf16 %v1610, %v1608
      %v1737 = vpack.c.bf16 %v1615, %v1613
      %v1738 = vpack.c.bf16 %v1620, %v1618
      %v1739 = vpack.c.bf16 %v1625, %v1623
      %v1740 = vpack.c.bf16 %v1630, %v1628
      %v1741 = vpack.c.bf16 %v1635, %v1633
      %v1742 = vld [vmem:[%s678] sm:$0xf]
      %v1743 = vld [vmem:[%s678 + $0x4] sm:$0xf]
      %v1744 = vld [vmem:[%s678 + $0x8] sm:$0xf]
      %v1745 = vld [vmem:[%s678 + $0xc] sm:$0xf]
      %v1746 = vld [vmem:[%s678 + $0x10] sm:$0xf]
      %v1747 = vld [vmem:[%s678 + $0x14] sm:$0xf]
      %v1748 = vld [vmem:[%s678 + $0x18] sm:$0xf]
      %v1749 = vld [vmem:[%s678 + $0x1c] sm:$0xf]
      %v1750 = vld [vmem:[%s678 + $0x20] sm:$0xf]
      %v1751 = vld [vmem:[%s678 + $0x24] sm:$0xf]
      %v1752 = vld [vmem:[%s678 + $0x28] sm:$0xf]
      %v1753 = vld [vmem:[%s678 + $0x2c] sm:$0xf]
      %v1754 = vld [vmem:[%s678 + $0x30] sm:$0xf]
      %v1755 = vld [vmem:[%s678 + $0x34] sm:$0xf]
      %v1756 = vld [vmem:[%s678 + $0x38] sm:$0xf]
      %v1757 = vld [vmem:[%s678 + $0x3c] sm:$0xf]
      %v1758 = vpack.c.bf16 %v1485, %v1484
      %v1759 = vpack.c.bf16 %v1487, %v1486
      %v1760 = vpack.c.bf16 %v1489, %v1488
      %v1761 = vpack.c.bf16 %v1491, %v1490
      %v1762 = vpack.c.bf16 %v1493, %v1492
      %v1763 = vpack.c.bf16 %v1495, %v1494
      %v1764 = vpack.c.bf16 %v1497, %v1496
      %v1765 = vpack.c.bf16 %v1499, %v1498
      %v1766 = vld [vmem:[%s683] sm:$0xf]
      %v1767 = vld [vmem:[%s683 + $0x4] sm:$0xf]
      %v1768 = vld [vmem:[%s683 + $0x8] sm:$0xf]
      %v1769 = vld [vmem:[%s683 + $0xc] sm:$0xf]
      %v1770 = vld [vmem:[%s683 + $0x10] sm:$0xf]
      %v1771 = vld [vmem:[%s683 + $0x14] sm:$0xf]
      %v1772 = vld [vmem:[%s683 + $0x18] sm:$0xf]
      %v1773 = vld [vmem:[%s683 + $0x1c] sm:$0xf]
      %v1774 = vld [vmem:[%s683 + $0x20] sm:$0xf]
      %v1775 = vld [vmem:[%s683 + $0x24] sm:$0xf]
      %v1776 = vld [vmem:[%s683 + $0x28] sm:$0xf]
      %v1777 = vld [vmem:[%s683 + $0x2c] sm:$0xf]
      %v1778 = vld [vmem:[%s683 + $0x30] sm:$0xf]
      %v1779 = vld [vmem:[%s683 + $0x34] sm:$0xf]
      %v1780 = vld [vmem:[%s683 + $0x38] sm:$0xf]
      %v1781 = vld [vmem:[%s683 + $0x3c] sm:$0xf]
      %v1798 = vunpack.c.l.b16 %v1766
      %v1799 = vunpack.c.l.b16 %v1767
      %v1800 = vunpack.c.l.b16 %v1768
      %v1801 = vunpack.c.l.b16 %v1769
      %v1802 = vunpack.c.l.b16 %v1770
      %v1803 = vunpack.c.l.b16 %v1771
      %v1804 = vunpack.c.l.b16 %v1772
      %v1805 = vunpack.c.l.b16 %v1773
      %v1806 = vunpack.c.l.b16 %v1774
      %v1807 = vunpack.c.l.b16 %v1775
      %v1808 = vunpack.c.l.b16 %v1776
      %v1809 = vunpack.c.l.b16 %v1777
      %v1810 = vunpack.c.l.b16 %v1778
      %v1811 = vunpack.c.l.b16 %v1779
      %v1812 = vunpack.c.l.b16 %v1780
      %v1813 = vunpack.c.l.b16 %v1781
      %v1814 = vpack.c.b16 %v1799, %v1798
      %v1815 = vpack.c.b16 %v1801, %v1800
      %v1816 = vpack.c.b16 %v1803, %v1802
      %v1817 = vpack.c.b16 %v1805, %v1804
      %v1818 = vpack.c.b16 %v1807, %v1806
      %v1819 = vpack.c.b16 %v1809, %v1808
      %v1820 = vpack.c.b16 %v1811, %v1810
      %v1821 = vpack.c.b16 %v1813, %v1812
      %1830 = vmatpush.bf16.msra.mxu0 %v1821
      %1831 = vmatpush.bf16.msra.mxu0 %v1820
      %1832 = vmatpush.bf16.msra.mxu0 %v1819
      %1833 = vmatpush.bf16.msra.mxu0 %v1818
      %1834 = vmatpush.bf16.msra.mxu0 %v1817
      %1835 = vmatpush.bf16.msra.mxu0 %v1816
      %1836 = vmatpush.bf16.msra.mxu0 %v1815
      %1837 = vmatpush.bf16.msra.mxu0 %v1814
      %1838 = vmatmul.bf16.gmra.mxu0 %v1758
      %v1839 = vpop.f32.mrf.mxu0
      %v1840 = vadd.f32 0.0, %v1839
      %v1841 = vpop.f32.mrf.mxu0
      %v1842 = vadd.f32 0.0, %v1841
      %1843 = vmatmul.bf16.gmra.mxu0 %v1759
      %v1844 = vpop.f32.mrf.mxu0
      %v1845 = vadd.f32 0.0, %v1844
      %v1846 = vpop.f32.mrf.mxu0
      %v1847 = vadd.f32 0.0, %v1846
      %1848 = vmatmul.bf16.gmra.mxu0 %v1760
      %v1849 = vpop.f32.mrf.mxu0
      %v1850 = vadd.f32 0.0, %v1849
      %v1851 = vpop.f32.mrf.mxu0
      %v1852 = vadd.f32 0.0, %v1851
      %1853 = vmatmul.bf16.gmra.mxu0 %v1761
      %v1854 = vpop.f32.mrf.mxu0
      %v1855 = vadd.f32 0.0, %v1854
      %v1856 = vpop.f32.mrf.mxu0
      %v1857 = vadd.f32 0.0, %v1856
      %1858 = vmatmul.bf16.gmra.mxu0 %v1762
      %v1859 = vpop.f32.mrf.mxu0
      %v1860 = vadd.f32 0.0, %v1859
      %v1861 = vpop.f32.mrf.mxu0
      %v1862 = vadd.f32 0.0, %v1861
      %1863 = vmatmul.bf16.gmra.mxu0 %v1763
      %v1864 = vpop.f32.mrf.mxu0
      %v1865 = vadd.f32 0.0, %v1864
      %v1866 = vpop.f32.mrf.mxu0
      %v1867 = vadd.f32 0.0, %v1866
      %1868 = vmatmul.bf16.gmra.mxu0 %v1764
      %v1869 = vpop.f32.mrf.mxu0
      %v1870 = vadd.f32 0.0, %v1869
      %v1871 = vpop.f32.mrf.mxu0
      %v1872 = vadd.f32 0.0, %v1871
      %1873 = vmatmul.bf16.gmra.mxu0 %v1765
      %v1874 = vpop.f32.mrf.mxu0
      %v1875 = vadd.f32 0.0, %v1874
      %v1876 = vpop.f32.mrf.mxu0
      %v1877 = vadd.f32 0.0, %v1876
      %1878 = vdwg.mxu0
      %v1895 = vunpack.c.l.b16 %v1742
      %v1896 = vunpack.c.l.b16 %v1743
      %v1897 = vunpack.c.l.b16 %v1744
      %v1898 = vunpack.c.l.b16 %v1745
      %v1899 = vunpack.c.l.b16 %v1746
      %v1900 = vunpack.c.l.b16 %v1747
      %v1901 = vunpack.c.l.b16 %v1748
      %v1902 = vunpack.c.l.b16 %v1749
      %v1903 = vunpack.c.l.b16 %v1750
      %v1904 = vunpack.c.l.b16 %v1751
      %v1905 = vunpack.c.l.b16 %v1752
      %v1906 = vunpack.c.l.b16 %v1753
      %v1907 = vunpack.c.l.b16 %v1754
      %v1908 = vunpack.c.l.b16 %v1755
      %v1909 = vunpack.c.l.b16 %v1756
      %v1910 = vunpack.c.l.b16 %v1757
      %v1911 = vpack.c.b16 %v1896, %v1895
      %v1912 = vpack.c.b16 %v1898, %v1897
      %v1913 = vpack.c.b16 %v1900, %v1899
      %v1914 = vpack.c.b16 %v1902, %v1901
      %v1915 = vpack.c.b16 %v1904, %v1903
      %v1916 = vpack.c.b16 %v1906, %v1905
      %v1917 = vpack.c.b16 %v1908, %v1907
      %v1918 = vpack.c.b16 %v1910, %v1909
      %1927 = vmatpush.bf16.msra.mxu0 %v1918
      %1928 = vmatpush.bf16.msra.mxu0 %v1917
      %1929 = vmatpush.bf16.msra.mxu0 %v1916
      %1930 = vmatpush.bf16.msra.mxu0 %v1915
      %1931 = vmatpush.bf16.msra.mxu0 %v1914
      %1932 = vmatpush.bf16.msra.mxu0 %v1913
      %1933 = vmatpush.bf16.msra.mxu0 %v1912
      %1934 = vmatpush.bf16.msra.mxu0 %v1911
      %1935 = vmatmul.bf16.gmra.mxu0 %v1734
      %v1936 = vpop.f32.mrf.mxu0
      %v1937 = vadd.f32 %v1840, %v1936
      %v1938 = vpop.f32.mrf.mxu0
      %v1939 = vadd.f32 %v1842, %v1938
      %1940 = vmatmul.bf16.gmra.mxu0 %v1735
      %v1941 = vpop.f32.mrf.mxu0
      %v1942 = vadd.f32 %v1845, %v1941
      %v1943 = vpop.f32.mrf.mxu0
      %v1944 = vadd.f32 %v1847, %v1943
      %1945 = vmatmul.bf16.gmra.mxu0 %v1736
      %v1946 = vpop.f32.mrf.mxu0
      %v1947 = vadd.f32 %v1850, %v1946
      %v1948 = vpop.f32.mrf.mxu0
      %v1949 = vadd.f32 %v1852, %v1948
      %1950 = vmatmul.bf16.gmra.mxu0 %v1737
      %v1951 = vpop.f32.mrf.mxu0
      %v1952 = vadd.f32 %v1855, %v1951
      %v1953 = vpop.f32.mrf.mxu0
      %v1954 = vadd.f32 %v1857, %v1953
      %1955 = vmatmul.bf16.gmra.mxu0 %v1738
      %v1956 = vpop.f32.mrf.mxu0
      %v1957 = vadd.f32 %v1860, %v1956
      %v1958 = vpop.f32.mrf.mxu0
      %v1959 = vadd.f32 %v1862, %v1958
      %1960 = vmatmul.bf16.gmra.mxu0 %v1739
      %v1961 = vpop.f32.mrf.mxu0
      %v1962 = vadd.f32 %v1865, %v1961
      %v1963 = vpop.f32.mrf.mxu0
      %v1964 = vadd.f32 %v1867, %v1963
      %1965 = vmatmul.bf16.gmra.mxu0 %v1740
      %v1966 = vpop.f32.mrf.mxu0
      %v1967 = vadd.f32 %v1870, %v1966
      %v1968 = vpop.f32.mrf.mxu0
      %v1969 = vadd.f32 %v1872, %v1968
      %1970 = vmatmul.bf16.gmra.mxu0 %v1741
      %v1971 = vpop.f32.mrf.mxu0
      %v1972 = vadd.f32 %v1875, %v1971
      %v1973 = vpop.f32.mrf.mxu0
      %v1974 = vadd.f32 %v1877, %v1973
      %1975 = vdwg.mxu0
      %v1976 = vpack.c.bf16 %v1697, %v1695
      %v1977 = vpack.c.bf16 %v1702, %v1700
      %v1978 = vpack.c.bf16 %v1707, %v1705
      %v1979 = vpack.c.bf16 %v1712, %v1710
      %v1980 = vpack.c.bf16 %v1717, %v1715
      %v1981 = vpack.c.bf16 %v1722, %v1720
      %v1982 = vpack.c.bf16 %v1727, %v1725
      %v1983 = vpack.c.bf16 %v1732, %v1730
      %v1984 = vld [vmem:[%s688] sm:$0xf]
      %v1985 = vld [vmem:[%s688 + $0x4] sm:$0xf]
      %v1986 = vld [vmem:[%s688 + $0x8] sm:$0xf]
      %v1987 = vld [vmem:[%s688 + $0xc] sm:$0xf]
      %v1988 = vld [vmem:[%s688 + $0x10] sm:$0xf]
      %v1989 = vld [vmem:[%s688 + $0x14] sm:$0xf]
      %v1990 = vld [vmem:[%s688 + $0x18] sm:$0xf]
      %v1991 = vld [vmem:[%s688 + $0x1c] sm:$0xf]
      %v1992 = vld [vmem:[%s688 + $0x20] sm:$0xf]
      %v1993 = vld [vmem:[%s688 + $0x24] sm:$0xf]
      %v1994 = vld [vmem:[%s688 + $0x28] sm:$0xf]
      %v1995 = vld [vmem:[%s688 + $0x2c] sm:$0xf]
      %v1996 = vld [vmem:[%s688 + $0x30] sm:$0xf]
      %v1997 = vld [vmem:[%s688 + $0x34] sm:$0xf]
      %v1998 = vld [vmem:[%s688 + $0x38] sm:$0xf]
      %v1999 = vld [vmem:[%s688 + $0x3c] sm:$0xf]
      %v2016 = vunpack.c.l.b16 %v1984
      %v2017 = vunpack.c.l.b16 %v1985
      %v2018 = vunpack.c.l.b16 %v1986
      %v2019 = vunpack.c.l.b16 %v1987
      %v2020 = vunpack.c.l.b16 %v1988
      %v2021 = vunpack.c.l.b16 %v1989
      %v2022 = vunpack.c.l.b16 %v1990
      %v2023 = vunpack.c.l.b16 %v1991
      %v2024 = vunpack.c.l.b16 %v1992
      %v2025 = vunpack.c.l.b16 %v1993
      %v2026 = vunpack.c.l.b16 %v1994
      %v2027 = vunpack.c.l.b16 %v1995
      %v2028 = vunpack.c.l.b16 %v1996
      %v2029 = vunpack.c.l.b16 %v1997
      %v2030 = vunpack.c.l.b16 %v1998
      %v2031 = vunpack.c.l.b16 %v1999
      %v2032 = vpack.c.b16 %v2017, %v2016
      %v2033 = vpack.c.b16 %v2019, %v2018
      %v2034 = vpack.c.b16 %v2021, %v2020
      %v2035 = vpack.c.b16 %v2023, %v2022
      %v2036 = vpack.c.b16 %v2025, %v2024
      %v2037 = vpack.c.b16 %v2027, %v2026
      %v2038 = vpack.c.b16 %v2029, %v2028
      %v2039 = vpack.c.b16 %v2031, %v2030
      %2048 = vmatpush.bf16.msra.mxu0 %v2039
      %2049 = vmatpush.bf16.msra.mxu0 %v2038
      %2050 = vmatpush.bf16.msra.mxu0 %v2037
      %2051 = vmatpush.bf16.msra.mxu0 %v2036
      %2052 = vmatpush.bf16.msra.mxu0 %v2035
      %2053 = vmatpush.bf16.msra.mxu0 %v2034
      %2054 = vmatpush.bf16.msra.mxu0 %v2033
      %2055 = vmatpush.bf16.msra.mxu0 %v2032
      %2056 = vmatmul.bf16.gmra.mxu0 %v1976
      %v2057 = vpop.f32.mrf.mxu0
      %v2058 = vadd.f32 0.0, %v2057
      %v2059 = vpop.f32.mrf.mxu0
      %v2060 = vadd.f32 0.0, %v2059
      %2061 = vmatmul.bf16.gmra.mxu0 %v1977
      %v2062 = vpop.f32.mrf.mxu0
      %v2063 = vadd.f32 0.0, %v2062
      %v2064 = vpop.f32.mrf.mxu0
      %v2065 = vadd.f32 0.0, %v2064
      %2066 = vmatmul.bf16.gmra.mxu0 %v1978
      %v2067 = vpop.f32.mrf.mxu0
      %v2068 = vadd.f32 0.0, %v2067
      %v2069 = vpop.f32.mrf.mxu0
      %v2070 = vadd.f32 0.0, %v2069
      %2071 = vmatmul.bf16.gmra.mxu0 %v1979
      %v2072 = vpop.f32.mrf.mxu0
      %v2073 = vadd.f32 0.0, %v2072
      %v2074 = vpop.f32.mrf.mxu0
      %v2075 = vadd.f32 0.0, %v2074
      %2076 = vmatmul.bf16.gmra.mxu0 %v1980
      %v2077 = vpop.f32.mrf.mxu0
      %v2078 = vadd.f32 0.0, %v2077
      %v2079 = vpop.f32.mrf.mxu0
      %v2080 = vadd.f32 0.0, %v2079
      %2081 = vmatmul.bf16.gmra.mxu0 %v1981
      %v2082 = vpop.f32.mrf.mxu0
      %v2083 = vadd.f32 0.0, %v2082
      %v2084 = vpop.f32.mrf.mxu0
      %v2085 = vadd.f32 0.0, %v2084
      %2086 = vmatmul.bf16.gmra.mxu0 %v1982
      %v2087 = vpop.f32.mrf.mxu0
      %v2088 = vadd.f32 0.0, %v2087
      %v2089 = vpop.f32.mrf.mxu0
      %v2090 = vadd.f32 0.0, %v2089
      %2091 = vmatmul.bf16.gmra.mxu0 %v1983
      %v2092 = vpop.f32.mrf.mxu0
      %v2093 = vadd.f32 0.0, %v2092
      %v2094 = vpop.f32.mrf.mxu0
      %v2095 = vadd.f32 0.0, %v2094
      %2096 = vdwg.mxu0
      %v2097 = vadd.f32 %v1937, %v2058
      %v2098 = vadd.f32 %v1939, %v2060
      %v2099 = vadd.f32 %v1942, %v2063
      %v2100 = vadd.f32 %v1944, %v2065
      %v2101 = vadd.f32 %v1947, %v2068
      %v2102 = vadd.f32 %v1949, %v2070
      %v2103 = vadd.f32 %v1952, %v2073
      %v2104 = vadd.f32 %v1954, %v2075
      %v2105 = vadd.f32 %v1957, %v2078
      %v2106 = vadd.f32 %v1959, %v2080
      %v2107 = vadd.f32 %v1962, %v2083
      %v2108 = vadd.f32 %v1964, %v2085
      %v2109 = vadd.f32 %v1967, %v2088
      %v2110 = vadd.f32 %v1969, %v2090
      %v2111 = vadd.f32 %v1972, %v2093
      %v2112 = vadd.f32 %v1974, %v2095
      %v2113 = vld [vmem:[%s691] sm:$0x1]
      %v2115 = vperm.slane %v2113, 0
      %v2117 = vadd.f32 %v2097, %v2115
      %v2118 = vadd.f32 %v2098, %v2115
      %v2119 = vadd.f32 %v2099, %v2115
      %v2120 = vadd.f32 %v2100, %v2115
      %v2121 = vadd.f32 %v2101, %v2115
      %v2122 = vadd.f32 %v2102, %v2115
      %v2123 = vadd.f32 %v2103, %v2115
      %v2124 = vadd.f32 %v2104, %v2115
      %v2125 = vadd.f32 %v2105, %v2115
      %v2126 = vadd.f32 %v2106, %v2115
      %v2127 = vadd.f32 %v2107, %v2115
      %v2128 = vadd.f32 %v2108, %v2115
      %v2129 = vadd.f32 %v2109, %v2115
      %v2130 = vadd.f32 %v2110, %v2115
      %v2131 = vadd.f32 %v2111, %v2115
      %v2132 = vadd.f32 %v2112, %v2115
      %v2133 = vmax.f32 %v2117, 0.0
      %v2134 = vmax.f32 %v2118, 0.0
      %v2135 = vmax.f32 %v2119, 0.0
      %v2136 = vmax.f32 %v2120, 0.0
      %v2137 = vmax.f32 %v2121, 0.0
      %v2138 = vmax.f32 %v2122, 0.0
      %v2139 = vmax.f32 %v2123, 0.0
      %v2140 = vmax.f32 %v2124, 0.0
      %v2141 = vmax.f32 %v2125, 0.0
      %v2142 = vmax.f32 %v2126, 0.0
      %v2143 = vmax.f32 %v2127, 0.0
      %v2144 = vmax.f32 %v2128, 0.0
      %v2145 = vmax.f32 %v2129, 0.0
      %v2146 = vmax.f32 %v2130, 0.0
      %v2147 = vmax.f32 %v2131, 0.0
      %v2148 = vmax.f32 %v2132, 0.0
      %v2149 = vpack.c.bf16 %v2134, %v2133
      %v2150 = vpack.c.bf16 %v2136, %v2135
      %v2151 = vpack.c.bf16 %v2138, %v2137
      %v2152 = vpack.c.bf16 %v2140, %v2139
      %v2153 = vpack.c.bf16 %v2142, %v2141
      %v2154 = vpack.c.bf16 %v2144, %v2143
      %v2155 = vpack.c.bf16 %v2146, %v2145
      %v2156 = vpack.c.bf16 %v2148, %v2147
      %v2157 = vld [vmem:[%s696] sm:$0xff]
      %v2158 = vld [vmem:[%s696 + $0x8] sm:$0xf]
      %v2159 = vld [vmem:[%s696 + $0xc] sm:$0xff]
      %v2160 = vld [vmem:[%s696 + $0x14] sm:$0xf]
      %v2161 = vld [vmem:[%s696 + $0x18] sm:$0xff]
      %v2162 = vld [vmem:[%s696 + $0x20] sm:$0xf]
      %v2163 = vld [vmem:[%s696 + $0x24] sm:$0xff]
      %v2164 = vld [vmem:[%s696 + $0x2c] sm:$0xf]
      %v2165 = vld [vmem:[%s696 + $0x30] sm:$0xff]
      %v2166 = vld [vmem:[%s696 + $0x38] sm:$0xf]
      %v2167 = vld [vmem:[%s696 + $0x3c] sm:$0xff]
      %v2168 = vld [vmem:[%s696 + $0x44] sm:$0xf]
      %v2169 = vld [vmem:[%s696 + $0x48] sm:$0xff]
      %v2170 = vld [vmem:[%s696 + $0x50] sm:$0xf]
      %v2171 = vld [vmem:[%s696 + $0x54] sm:$0xff]
      %v2172 = vld [vmem:[%s696 + $0x5c] sm:$0xf]
      %v2173 = vld [vmem:[%s696 + $0x60] sm:$0xff]
      %v2174 = vld [vmem:[%s696 + $0x68] sm:$0xf]
      %v2175 = vld [vmem:[%s696 + $0x6c] sm:$0xff]
      %v2176 = vld [vmem:[%s696 + $0x74] sm:$0xf]
      %v2177 = vld [vmem:[%s696 + $0x78] sm:$0xff]
      %v2178 = vld [vmem:[%s696 + $0x80] sm:$0xf]
      %v2179 = vld [vmem:[%s696 + $0x84] sm:$0xff]
      %v2180 = vld [vmem:[%s696 + $0x8c] sm:$0xf]
      %v2181 = vld [vmem:[%s696 + $0x90] sm:$0xff]
      %v2182 = vld [vmem:[%s696 + $0x98] sm:$0xf]
      %v2183 = vld [vmem:[%s696 + $0x9c] sm:$0xff]
      %v2184 = vld [vmem:[%s696 + $0xa4] sm:$0xf]
      %v2185 = vld [vmem:[%s696 + $0xa8] sm:$0xff]
      %v2186 = vld [vmem:[%s696 + $0xb0] sm:$0xf]
      %v2187 = vld [vmem:[%s696 + $0xb4] sm:$0xff]
      %v2188 = vld [vmem:[%s696 + $0xbc] sm:$0xf]
      %v2189 = vld [vmem:[%s700] sm:$0x7]
      %v2191 = vperm.slane %v2189, 0
      %v2192 = vperm.slane %v2189, 1
      %v2193 = vperm.slane %v2189, 2
      %v2229 = vunpack.c.l.b16 %v2157
      %v2230 = vunpack.c.h.b16 %v2157
      %v2231 = vunpack.c.l.b16 %v2158
      %v2232 = vunpack.c.l.b16 %v2159
      %v2233 = vunpack.c.h.b16 %v2159
      %v2234 = vunpack.c.l.b16 %v2160
      %v2235 = vunpack.c.l.b16 %v2161
      %v2236 = vunpack.c.h.b16 %v2161
      %v2237 = vunpack.c.l.b16 %v2162
      %v2238 = vunpack.c.l.b16 %v2163
      %v2239 = vunpack.c.h.b16 %v2163
      %v2240 = vunpack.c.l.b16 %v2164
      %v2241 = vunpack.c.l.b16 %v2165
      %v2242 = vunpack.c.h.b16 %v2165
      %v2243 = vunpack.c.l.b16 %v2166
      %v2244 = vunpack.c.l.b16 %v2167
      %v2245 = vunpack.c.h.b16 %v2167
      %v2246 = vunpack.c.l.b16 %v2168
      %v2247 = vunpack.c.l.b16 %v2169
      %v2248 = vunpack.c.h.b16 %v2169
      %v2249 = vunpack.c.l.b16 %v2170
      %v2250 = vunpack.c.l.b16 %v2171
      %v2251 = vunpack.c.h.b16 %v2171
      %v2252 = vunpack.c.l.b16 %v2172
      %v2253 = vunpack.c.l.b16 %v2173
      %v2254 = vunpack.c.h.b16 %v2173
      %v2255 = vunpack.c.l.b16 %v2174
      %v2256 = vunpack.c.l.b16 %v2175
      %v2257 = vunpack.c.h.b16 %v2175
      %v2258 = vunpack.c.l.b16 %v2176
      %v2259 = vunpack.c.l.b16 %v2177
      %v2260 = vunpack.c.h.b16 %v2177
      %v2261 = vunpack.c.l.b16 %v2178
      %v2262 = vunpack.c.l.b16 %v2179
      %v2263 = vunpack.c.h.b16 %v2179
      %v2264 = vunpack.c.l.b16 %v2180
      %v2265 = vunpack.c.l.b16 %v2181
      %v2266 = vunpack.c.h.b16 %v2181
      %v2267 = vunpack.c.l.b16 %v2182
      %v2268 = vunpack.c.l.b16 %v2183
      %v2269 = vunpack.c.h.b16 %v2183
      %v2270 = vunpack.c.l.b16 %v2184
      %v2271 = vunpack.c.l.b16 %v2185
      %v2272 = vunpack.c.h.b16 %v2185
      %v2273 = vunpack.c.l.b16 %v2186
      %v2274 = vunpack.c.l.b16 %v2187
      %v2275 = vunpack.c.h.b16 %v2187
      %v2276 = vunpack.c.l.b16 %v2188
      %v2277 = vpack.c.b16 %v2232, %v2229
      %v2278 = vpack.c.b16 %v2233, %v2230
      %v2279 = vpack.c.b16 %v2234, %v2231
      %v2280 = vpack.c.b16 %v2238, %v2235
      %v2281 = vpack.c.b16 %v2239, %v2236
      %v2282 = vpack.c.b16 %v2240, %v2237
      %v2283 = vpack.c.b16 %v2244, %v2241
      %v2284 = vpack.c.b16 %v2245, %v2242
      %v2285 = vpack.c.b16 %v2246, %v2243
      %v2286 = vpack.c.b16 %v2250, %v2247
      %v2287 = vpack.c.b16 %v2251, %v2248
      %v2288 = vpack.c.b16 %v2252, %v2249
      %v2289 = vpack.c.b16 %v2256, %v2253
      %v2290 = vpack.c.b16 %v2257, %v2254
      %v2291 = vpack.c.b16 %v2258, %v2255
      %v2292 = vpack.c.b16 %v2262, %v2259
      %v2293 = vpack.c.b16 %v2263, %v2260
      %v2294 = vpack.c.b16 %v2264, %v2261
      %v2295 = vpack.c.b16 %v2268, %v2265
      %v2296 = vpack.c.b16 %v2269, %v2266
      %v2297 = vpack.c.b16 %v2270, %v2267
      %v2298 = vpack.c.b16 %v2274, %v2271
      %v2299 = vpack.c.b16 %v2275, %v2272
      %v2300 = vpack.c.b16 %v2276, %v2273
      %2325 = vmatpush.bf16.msra.mxu0 %v2298
      %2326 = vmatpush.bf16.msra.mxu0 %v2295
      %2327 = vmatpush.bf16.msra.mxu0 %v2292
      %2328 = vmatpush.bf16.msra.mxu0 %v2289
      %2329 = vmatpush.bf16.msra.mxu0 %v2286
      %2330 = vmatpush.bf16.msra.mxu0 %v2283
      %2331 = vmatpush.bf16.msra.mxu0 %v2280
      %2332 = vmatpush.bf16.msra.mxu0 %v2277
      %2333 = vmatmul.bf16.gmra.mxu0 %v2149
      %v2334 = vpop.f32.mrf.mxu0
      %v2335 = vadd.f32 %v2191, %v2334
      %v2336 = vpop.f32.mrf.mxu0
      %v2337 = vadd.f32 %v2191, %v2336
      %2338 = vmatmul.bf16.gmra.mxu0 %v2150
      %v2339 = vpop.f32.mrf.mxu0
      %v2340 = vadd.f32 %v2191, %v2339
      %v2341 = vpop.f32.mrf.mxu0
      %v2342 = vadd.f32 %v2191, %v2341
      %2343 = vmatmul.bf16.gmra.mxu0 %v2151
      %v2344 = vpop.f32.mrf.mxu0
      %v2345 = vadd.f32 %v2191, %v2344
      %v2346 = vpop.f32.mrf.mxu0
      %v2347 = vadd.f32 %v2191, %v2346
      %2348 = vmatmul.bf16.gmra.mxu0 %v2152
      %v2349 = vpop.f32.mrf.mxu0
      %v2350 = vadd.f32 %v2191, %v2349
      %v2351 = vpop.f32.mrf.mxu0
      %v2352 = vadd.f32 %v2191, %v2351
      %2353 = vmatmul.bf16.gmra.mxu0 %v2153
      %v2354 = vpop.f32.mrf.mxu0
      %v2355 = vadd.f32 %v2191, %v2354
      %v2356 = vpop.f32.mrf.mxu0
      %v2357 = vadd.f32 %v2191, %v2356
      %2358 = vmatmul.bf16.gmra.mxu0 %v2154
      %v2359 = vpop.f32.mrf.mxu0
      %v2360 = vadd.f32 %v2191, %v2359
      %v2361 = vpop.f32.mrf.mxu0
      %v2362 = vadd.f32 %v2191, %v2361
      %2363 = vmatmul.bf16.gmra.mxu0 %v2155
      %v2364 = vpop.f32.mrf.mxu0
      %v2365 = vadd.f32 %v2191, %v2364
      %v2366 = vpop.f32.mrf.mxu0
      %v2367 = vadd.f32 %v2191, %v2366
      %2368 = vmatmul.bf16.gmra.mxu0 %v2156
      %v2369 = vpop.f32.mrf.mxu0
      %v2370 = vadd.f32 %v2191, %v2369
      %v2371 = vpop.f32.mrf.mxu0
      %v2372 = vadd.f32 %v2191, %v2371
      %2373 = vdwg.mxu0
      %2374 = vmatpush.bf16.msra.mxu0 %v2299
      %2375 = vmatpush.bf16.msra.mxu0 %v2296
      %2376 = vmatpush.bf16.msra.mxu0 %v2293
      %2377 = vmatpush.bf16.msra.mxu0 %v2290
      %2378 = vmatpush.bf16.msra.mxu0 %v2287
      %2379 = vmatpush.bf16.msra.mxu0 %v2284
      %2380 = vmatpush.bf16.msra.mxu0 %v2281
      %2381 = vmatpush.bf16.msra.mxu0 %v2278
      %2382 = vmatmul.bf16.gmra.mxu0 %v2149
      %v2383 = vpop.f32.mrf.mxu0
      %v2384 = vadd.f32 %v2192, %v2383
      %v2385 = vpop.f32.mrf.mxu0
      %v2386 = vadd.f32 %v2192, %v2385
      %2387 = vmatmul.bf16.gmra.mxu0 %v2150
      %v2388 = vpop.f32.mrf.mxu0
      %v2389 = vadd.f32 %v2192, %v2388
      %v2390 = vpop.f32.mrf.mxu0
      %v2391 = vadd.f32 %v2192, %v2390
      %2392 = vmatmul.bf16.gmra.mxu0 %v2151
      %v2393 = vpop.f32.mrf.mxu0
      %v2394 = vadd.f32 %v2192, %v2393
      %v2395 = vpop.f32.mrf.mxu0
      %v2396 = vadd.f32 %v2192, %v2395
      %2397 = vmatmul.bf16.gmra.mxu0 %v2152
      %v2398 = vpop.f32.mrf.mxu0
      %v2399 = vadd.f32 %v2192, %v2398
      %v2400 = vpop.f32.mrf.mxu0
      %v2401 = vadd.f32 %v2192, %v2400
      %2402 = vmatmul.bf16.gmra.mxu0 %v2153
      %v2403 = vpop.f32.mrf.mxu0
      %v2404 = vadd.f32 %v2192, %v2403
      %v2405 = vpop.f32.mrf.mxu0
      %v2406 = vadd.f32 %v2192, %v2405
      %2407 = vmatmul.bf16.gmra.mxu0 %v2154
      %v2408 = vpop.f32.mrf.mxu0
      %v2409 = vadd.f32 %v2192, %v2408
      %v2410 = vpop.f32.mrf.mxu0
      %v2411 = vadd.f32 %v2192, %v2410
      %2412 = vmatmul.bf16.gmra.mxu0 %v2155
      %v2413 = vpop.f32.mrf.mxu0
      %v2414 = vadd.f32 %v2192, %v2413
      %v2415 = vpop.f32.mrf.mxu0
      %v2416 = vadd.f32 %v2192, %v2415
      %2417 = vmatmul.bf16.gmra.mxu0 %v2156
      %v2418 = vpop.f32.mrf.mxu0
      %v2419 = vadd.f32 %v2192, %v2418
      %v2420 = vpop.f32.mrf.mxu0
      %v2421 = vadd.f32 %v2192, %v2420
      %2422 = vdwg.mxu0
      %2423 = vmatpush.bf16.msra.mxu0 %v2300
      %2424 = vmatpush.bf16.msra.mxu0 %v2297
      %2425 = vmatpush.bf16.msra.mxu0 %v2294
      %2426 = vmatpush.bf16.msra.mxu0 %v2291
      %2427 = vmatpush.bf16.msra.mxu0 %v2288
      %2428 = vmatpush.bf16.msra.mxu0 %v2285
      %2429 = vmatpush.bf16.msra.mxu0 %v2282
      %2430 = vmatpush.bf16.msra.mxu0 %v2279
      %2431 = vmatmul.bf16.gmra.mxu0 %v2149
      %v2432 = vpop.f32.mrf.mxu0
      %v2433 = vadd.f32 %v2193, %v2432
      %v2434 = vpop.f32.mrf.mxu0
      %v2435 = vadd.f32 %v2193, %v2434
      %2436 = vmatmul.bf16.gmra.mxu0 %v2150
      %v2437 = vpop.f32.mrf.mxu0
      %v2438 = vadd.f32 %v2193, %v2437
      %v2439 = vpop.f32.mrf.mxu0
      %v2440 = vadd.f32 %v2193, %v2439
      %2441 = vmatmul.bf16.gmra.mxu0 %v2151
      %v2442 = vpop.f32.mrf.mxu0
      %v2443 = vadd.f32 %v2193, %v2442
      %v2444 = vpop.f32.mrf.mxu0
      %v2445 = vadd.f32 %v2193, %v2444
      %2446 = vmatmul.bf16.gmra.mxu0 %v2152
      %v2447 = vpop.f32.mrf.mxu0
      %v2448 = vadd.f32 %v2193, %v2447
      %v2449 = vpop.f32.mrf.mxu0
      %v2450 = vadd.f32 %v2193, %v2449
      %2451 = vmatmul.bf16.gmra.mxu0 %v2153
      %v2452 = vpop.f32.mrf.mxu0
      %v2453 = vadd.f32 %v2193, %v2452
      %v2454 = vpop.f32.mrf.mxu0
      %v2455 = vadd.f32 %v2193, %v2454
      %2456 = vmatmul.bf16.gmra.mxu0 %v2154
      %v2457 = vpop.f32.mrf.mxu0
      %v2458 = vadd.f32 %v2193, %v2457
      %v2459 = vpop.f32.mrf.mxu0
      %v2460 = vadd.f32 %v2193, %v2459
      %2461 = vmatmul.bf16.gmra.mxu0 %v2155
      %v2462 = vpop.f32.mrf.mxu0
      %v2463 = vadd.f32 %v2193, %v2462
      %v2464 = vpop.f32.mrf.mxu0
      %v2465 = vadd.f32 %v2193, %v2464
      %2466 = vmatmul.bf16.gmra.mxu0 %v2156
      %v2467 = vpop.f32.mrf.mxu0
      %v2468 = vadd.f32 %v2193, %v2467
      %v2469 = vpop.f32.mrf.mxu0
      %v2470 = vadd.f32 %v2193, %v2469
      %2471 = vdwg.mxu0
      %v2472 = vmax.f32 %v2335, 0.0
      %v2473 = vmax.f32 %v2384, 0.0
      %v2474 = vmax.f32 %v2433, 0.0
      %v2475 = vmax.f32 %v2337, 0.0
      %v2476 = vmax.f32 %v2386, 0.0
      %v2477 = vmax.f32 %v2435, 0.0
      %v2478 = vmax.f32 %v2340, 0.0
      %v2479 = vmax.f32 %v2389, 0.0
      %v2480 = vmax.f32 %v2438, 0.0
      %v2481 = vmax.f32 %v2342, 0.0
      %v2482 = vmax.f32 %v2391, 0.0
      %v2483 = vmax.f32 %v2440, 0.0
      %v2484 = vmax.f32 %v2345, 0.0
      %v2485 = vmax.f32 %v2394, 0.0
      %v2486 = vmax.f32 %v2443, 0.0
      %v2487 = vmax.f32 %v2347, 0.0
      %v2488 = vmax.f32 %v2396, 0.0
      %v2489 = vmax.f32 %v2445, 0.0
      %v2490 = vmax.f32 %v2350, 0.0
      %v2491 = vmax.f32 %v2399, 0.0
      %v2492 = vmax.f32 %v2448, 0.0
      %v2493 = vmax.f32 %v2352, 0.0
      %v2494 = vmax.f32 %v2401, 0.0
      %v2495 = vmax.f32 %v2450, 0.0
      %v2496 = vmax.f32 %v2355, 0.0
      %v2497 = vmax.f32 %v2404, 0.0
      %v2498 = vmax.f32 %v2453, 0.0
      %v2499 = vmax.f32 %v2357, 0.0
      %v2500 = vmax.f32 %v2406, 0.0
      %v2501 = vmax.f32 %v2455, 0.0
      %v2502 = vmax.f32 %v2360, 0.0
      %v2503 = vmax.f32 %v2409, 0.0
      %v2504 = vmax.f32 %v2458, 0.0
      %v2505 = vmax.f32 %v2362, 0.0
      %v2506 = vmax.f32 %v2411, 0.0
      %v2507 = vmax.f32 %v2460, 0.0
      %v2508 = vmax.f32 %v2365, 0.0
      %v2509 = vmax.f32 %v2414, 0.0
      %v2510 = vmax.f32 %v2463, 0.0
      %v2511 = vmax.f32 %v2367, 0.0
      %v2512 = vmax.f32 %v2416, 0.0
      %v2513 = vmax.f32 %v2465, 0.0
      %v2514 = vmax.f32 %v2370, 0.0
      %v2515 = vmax.f32 %v2419, 0.0
      %v2516 = vmax.f32 %v2468, 0.0
      %v2517 = vmax.f32 %v2372, 0.0
      %v2518 = vmax.f32 %v2421, 0.0
      %v2519 = vmax.f32 %v2470, 0.0
      %v2520 = vpack.c.bf16 %v2475, %v2472
      %v2521 = vpack.c.bf16 %v2481, %v2478
      %v2522 = vpack.c.bf16 %v2487, %v2484
      %v2523 = vpack.c.bf16 %v2493, %v2490
      %v2524 = vpack.c.bf16 %v2499, %v2496
      %v2525 = vpack.c.bf16 %v2505, %v2502
      %v2526 = vpack.c.bf16 %v2511, %v2508
      %v2527 = vpack.c.bf16 %v2517, %v2514
      %v2528 = vpack.c.bf16 %v2477, %v2474
      %v2529 = vpack.c.bf16 %v2483, %v2480
      %v2530 = vpack.c.bf16 %v2489, %v2486
      %v2531 = vpack.c.bf16 %v2495, %v2492
      %v2532 = vpack.c.bf16 %v2501, %v2498
      %v2533 = vpack.c.bf16 %v2507, %v2504
      %v2534 = vpack.c.bf16 %v2513, %v2510
      %v2535 = vpack.c.bf16 %v2519, %v2516
      %2536 = vxpose.xlu0.c.b16.start [1/8] %v1669, 128
      %2537 = vxpose.xlu0.c.b16.cont [2/8] %v1670, 128
      %2538 = vxpose.xlu0.c.b16.cont [3/8] %v1671, 128
      %2539 = vxpose.xlu0.c.b16.cont [4/8] %v1672, 128
      %2540 = vxpose.xlu0.c.b16.cont [5/8] %v1673, 128
      %2541 = vxpose.xlu0.c.b16.cont [6/8] %v1674, 128
      %2542 = vxpose.xlu0.c.b16.cont [7/8] %v1675, 128
      %2543 = vxpose.xlu0.c.b16.end [8/8] %v1676, 128
      %v2544 = vpop.trf.xlu0
      %v2545 = vpop.trf.xlu0
      %v2546 = vpop.trf.xlu0
      %v2547 = vpop.trf.xlu0
      %v2548 = vpop.trf.xlu0
      %v2549 = vpop.trf.xlu0
      %v2550 = vpop.trf.xlu0
      %v2551 = vpop.trf.xlu0
      %2552 = vmatpush.bf16.msra.mxu0 %v2535
      %2553 = vmatpush.bf16.msra.mxu0 %v2534
      %2554 = vmatpush.bf16.msra.mxu0 %v2533
      %2555 = vmatpush.bf16.msra.mxu0 %v2532
      %2556 = vmatpush.bf16.msra.mxu0 %v2531
      %2557 = vmatpush.bf16.msra.mxu0 %v2530
      %2558 = vmatpush.bf16.msra.mxu0 %v2529
      %2559 = vmatpush.bf16.msra.mxu0 %v2528
      %2560 = vmatmul.bf16.gmra.mxu0 %v2544
      %v2561 = vpop.f32.mrf.mxu0
      %v2562 = vadd.f32 0.0, %v2561
      %v2563 = vpop.f32.mrf.mxu0
      %v2564 = vadd.f32 0.0, %v2563
      %2565 = vmatmul.bf16.gmra.mxu0 %v2545
      %v2566 = vpop.f32.mrf.mxu0
      %v2567 = vadd.f32 0.0, %v2566
      %v2568 = vpop.f32.mrf.mxu0
      %v2569 = vadd.f32 0.0, %v2568
      %2570 = vmatmul.bf16.gmra.mxu0 %v2546
      %v2571 = vpop.f32.mrf.mxu0
      %v2572 = vadd.f32 0.0, %v2571
      %v2573 = vpop.f32.mrf.mxu0
      %v2574 = vadd.f32 0.0, %v2573
      %2575 = vmatmul.bf16.gmra.mxu0 %v2547
      %v2576 = vpop.f32.mrf.mxu0
      %v2577 = vadd.f32 0.0, %v2576
      %v2578 = vpop.f32.mrf.mxu0
      %v2579 = vadd.f32 0.0, %v2578
      %2580 = vmatmul.bf16.gmra.mxu0 %v2548
      %v2581 = vpop.f32.mrf.mxu0
      %v2582 = vadd.f32 0.0, %v2581
      %v2583 = vpop.f32.mrf.mxu0
      %v2584 = vadd.f32 0.0, %v2583
      %2585 = vmatmul.bf16.gmra.mxu0 %v2549
      %v2586 = vpop.f32.mrf.mxu0
      %v2587 = vadd.f32 0.0, %v2586
      %v2588 = vpop.f32.mrf.mxu0
      %v2589 = vadd.f32 0.0, %v2588
      %2590 = vmatmul.bf16.gmra.mxu0 %v2550
      %v2591 = vpop.f32.mrf.mxu0
      %v2592 = vadd.f32 0.0, %v2591
      %v2593 = vpop.f32.mrf.mxu0
      %v2594 = vadd.f32 0.0, %v2593
      %2595 = vmatmul.bf16.gmra.mxu0 %v2551
      %v2596 = vpop.f32.mrf.mxu0
      %v2597 = vadd.f32 0.0, %v2596
      %v2598 = vpop.f32.mrf.mxu0
      %v2599 = vadd.f32 0.0, %v2598
      %2600 = vdwg.mxu0
      %2601 = vxpose.xlu0.c.b16.start [1/8] %v1572, 128
      %2602 = vxpose.xlu0.c.b16.cont [2/8] %v1573, 128
      %2603 = vxpose.xlu0.c.b16.cont [3/8] %v1574, 128
      %2604 = vxpose.xlu0.c.b16.cont [4/8] %v1575, 128
      %2605 = vxpose.xlu0.c.b16.cont [5/8] %v1576, 128
      %2606 = vxpose.xlu0.c.b16.cont [6/8] %v1577, 128
      %2607 = vxpose.xlu0.c.b16.cont [7/8] %v1578, 128
      %2608 = vxpose.xlu0.c.b16.end [8/8] %v1579, 128
      %v2609 = vpop.trf.xlu0
      %v2610 = vpop.trf.xlu0
      %v2611 = vpop.trf.xlu0
      %v2612 = vpop.trf.xlu0
      %v2613 = vpop.trf.xlu0
      %v2614 = vpop.trf.xlu0
      %v2615 = vpop.trf.xlu0
      %v2616 = vpop.trf.xlu0
      %2617 = vmatpush.bf16.msra.mxu0 %v2527
      %2618 = vmatpush.bf16.msra.mxu0 %v2526
      %2619 = vmatpush.bf16.msra.mxu0 %v2525
      %2620 = vmatpush.bf16.msra.mxu0 %v2524
      %2621 = vmatpush.bf16.msra.mxu0 %v2523
      %2622 = vmatpush.bf16.msra.mxu0 %v2522
      %2623 = vmatpush.bf16.msra.mxu0 %v2521
      %2624 = vmatpush.bf16.msra.mxu0 %v2520
      %2625 = vmatmul.bf16.gmra.mxu0 %v2609
      %v2626 = vpop.f32.mrf.mxu0
      %v2627 = vadd.f32 %v2562, %v2626
      %v2628 = vpop.f32.mrf.mxu0
      %v2629 = vadd.f32 %v2564, %v2628
      %2630 = vmatmul.bf16.gmra.mxu0 %v2610
      %v2631 = vpop.f32.mrf.mxu0
      %v2632 = vadd.f32 %v2567, %v2631
      %v2633 = vpop.f32.mrf.mxu0
      %v2634 = vadd.f32 %v2569, %v2633
      %2635 = vmatmul.bf16.gmra.mxu0 %v2611
      %v2636 = vpop.f32.mrf.mxu0
      %v2637 = vadd.f32 %v2572, %v2636
      %v2638 = vpop.f32.mrf.mxu0
      %v2639 = vadd.f32 %v2574, %v2638
      %2640 = vmatmul.bf16.gmra.mxu0 %v2612
      %v2641 = vpop.f32.mrf.mxu0
      %v2642 = vadd.f32 %v2577, %v2641
      %v2643 = vpop.f32.mrf.mxu0
      %v2644 = vadd.f32 %v2579, %v2643
      %2645 = vmatmul.bf16.gmra.mxu0 %v2613
      %v2646 = vpop.f32.mrf.mxu0
      %v2647 = vadd.f32 %v2582, %v2646
      %v2648 = vpop.f32.mrf.mxu0
      %v2649 = vadd.f32 %v2584, %v2648
      %2650 = vmatmul.bf16.gmra.mxu0 %v2614
      %v2651 = vpop.f32.mrf.mxu0
      %v2652 = vadd.f32 %v2587, %v2651
      %v2653 = vpop.f32.mrf.mxu0
      %v2654 = vadd.f32 %v2589, %v2653
      %2655 = vmatmul.bf16.gmra.mxu0 %v2615
      %v2656 = vpop.f32.mrf.mxu0
      %v2657 = vadd.f32 %v2592, %v2656
      %v2658 = vpop.f32.mrf.mxu0
      %v2659 = vadd.f32 %v2594, %v2658
      %2660 = vmatmul.bf16.gmra.mxu0 %v2616
      %v2661 = vpop.f32.mrf.mxu0
      %v2662 = vadd.f32 %v2597, %v2661
      %v2663 = vpop.f32.mrf.mxu0
      %v2664 = vadd.f32 %v2599, %v2663
      %2665 = vdwg.mxu0
      %v2666 = vld [vmem:[#allocation4] sm:$0xff]
      %v2667 = vld [vmem:[#allocation4 + $0x8] sm:$0xff]
      %v2668 = vld [vmem:[#allocation4 + $0x10] sm:$0xff]
      %v2669 = vld [vmem:[#allocation4 + $0x18] sm:$0xff]
      %v2670 = vld [vmem:[#allocation4 + $0x20] sm:$0xff]
      %v2671 = vld [vmem:[#allocation4 + $0x28] sm:$0xff]
      %v2672 = vld [vmem:[#allocation4 + $0x30] sm:$0xff]
      %v2673 = vld [vmem:[#allocation4 + $0x38] sm:$0xff]
      %v2674 = vld [vmem:[#allocation4 + $0x40] sm:$0xff]
      %v2675 = vld [vmem:[#allocation4 + $0x48] sm:$0xff]
      %v2676 = vld [vmem:[#allocation4 + $0x50] sm:$0xff]
      %v2677 = vld [vmem:[#allocation4 + $0x58] sm:$0xff]
      %v2678 = vld [vmem:[#allocation4 + $0x60] sm:$0xff]
      %v2679 = vld [vmem:[#allocation4 + $0x68] sm:$0xff]
      %v2680 = vld [vmem:[#allocation4 + $0x70] sm:$0xff]
      %v2681 = vld [vmem:[#allocation4 + $0x78] sm:$0xff]
      %v2682 = vmul.f32 %v2627, %v2666
      %v2683 = vmul.f32 %v2629, %v2667
      %v2684 = vmul.f32 %v2632, %v2668
      %v2685 = vmul.f32 %v2634, %v2669
      %v2686 = vmul.f32 %v2637, %v2670
      %v2687 = vmul.f32 %v2639, %v2671
      %v2688 = vmul.f32 %v2642, %v2672
      %v2689 = vmul.f32 %v2644, %v2673
      %v2690 = vmul.f32 %v2647, %v2674
      %v2691 = vmul.f32 %v2649, %v2675
      %v2692 = vmul.f32 %v2652, %v2676
      %v2693 = vmul.f32 %v2654, %v2677
      %v2694 = vmul.f32 %v2657, %v2678
      %v2695 = vmul.f32 %v2659, %v2679
      %v2696 = vmul.f32 %v2662, %v2680
      %v2697 = vmul.f32 %v2664, %v2681
      %v2698 = vpack.c.bf16 %v2683, %v2682
      %v2699 = vpack.c.bf16 %v2685, %v2684
      %v2700 = vpack.c.bf16 %v2687, %v2686
      %v2701 = vpack.c.bf16 %v2689, %v2688
      %v2702 = vpack.c.bf16 %v2691, %v2690
      %v2703 = vpack.c.bf16 %v2693, %v2692
      %v2704 = vpack.c.bf16 %v2695, %v2694
      %v2705 = vpack.c.bf16 %v2697, %v2696
      %v2706 = vld [vmem:[%s705] sm:$0xf]
      %v2707 = vld [vmem:[%s705 + $0x4] sm:$0xf]
      %v2708 = vld [vmem:[%s705 + $0x8] sm:$0xf]
      %v2709 = vld [vmem:[%s705 + $0xc] sm:$0xf]
      %v2710 = vld [vmem:[%s705 + $0x10] sm:$0xf]
      %v2711 = vld [vmem:[%s705 + $0x14] sm:$0xf]
      %v2712 = vld [vmem:[%s705 + $0x18] sm:$0xf]
      %v2713 = vld [vmem:[%s705 + $0x1c] sm:$0xf]
      %v2714 = vld [vmem:[%s705 + $0x20] sm:$0xf]
      %v2715 = vld [vmem:[%s705 + $0x24] sm:$0xf]
      %v2716 = vld [vmem:[%s705 + $0x28] sm:$0xf]
      %v2717 = vld [vmem:[%s705 + $0x2c] sm:$0xf]
      %v2718 = vld [vmem:[%s705 + $0x30] sm:$0xf]
      %v2719 = vld [vmem:[%s705 + $0x34] sm:$0xf]
      %v2720 = vld [vmem:[%s705 + $0x38] sm:$0xf]
      %v2721 = vld [vmem:[%s705 + $0x3c] sm:$0xf]
      %v2722 = vld [vmem:[%s708] sm:$0x1]
      %v2724 = vperm.slane %v2722, 0
      %v2742 = vunpack.c.l.b16 %v2706
      %v2743 = vunpack.c.l.b16 %v2707
      %v2744 = vunpack.c.l.b16 %v2708
      %v2745 = vunpack.c.l.b16 %v2709
      %v2746 = vunpack.c.l.b16 %v2710
      %v2747 = vunpack.c.l.b16 %v2711
      %v2748 = vunpack.c.l.b16 %v2712
      %v2749 = vunpack.c.l.b16 %v2713
      %v2750 = vunpack.c.l.b16 %v2714
      %v2751 = vunpack.c.l.b16 %v2715
      %v2752 = vunpack.c.l.b16 %v2716
      %v2753 = vunpack.c.l.b16 %v2717
      %v2754 = vunpack.c.l.b16 %v2718
      %v2755 = vunpack.c.l.b16 %v2719
      %v2756 = vunpack.c.l.b16 %v2720
      %v2757 = vunpack.c.l.b16 %v2721
      %v2758 = vpack.c.b16 %v2743, %v2742
      %v2759 = vpack.c.b16 %v2745, %v2744
      %v2760 = vpack.c.b16 %v2747, %v2746
      %v2761 = vpack.c.b16 %v2749, %v2748
      %v2762 = vpack.c.b16 %v2751, %v2750
      %v2763 = vpack.c.b16 %v2753, %v2752
      %v2764 = vpack.c.b16 %v2755, %v2754
      %v2765 = vpack.c.b16 %v2757, %v2756
      %2774 = vmatpush.bf16.msra.mxu0 %v2765
      %2775 = vmatpush.bf16.msra.mxu0 %v2764
      %2776 = vmatpush.bf16.msra.mxu0 %v2763
      %2777 = vmatpush.bf16.msra.mxu0 %v2762
      %2778 = vmatpush.bf16.msra.mxu0 %v2761
      %2779 = vmatpush.bf16.msra.mxu0 %v2760
      %2780 = vmatpush.bf16.msra.mxu0 %v2759
      %2781 = vmatpush.bf16.msra.mxu0 %v2758
      %2782 = vmatmul.bf16.gmra.mxu0 %v2698
      %v2783 = vpop.f32.mrf.mxu0
      %v2784 = vadd.f32 %v2724, %v2783
      %v2785 = vpop.f32.mrf.mxu0
      %v2786 = vadd.f32 %v2724, %v2785
      %2787 = vmatmul.bf16.gmra.mxu0 %v2699
      %v2788 = vpop.f32.mrf.mxu0
      %v2789 = vadd.f32 %v2724, %v2788
      %v2790 = vpop.f32.mrf.mxu0
      %v2791 = vadd.f32 %v2724, %v2790
      %2792 = vmatmul.bf16.gmra.mxu0 %v2700
      %v2793 = vpop.f32.mrf.mxu0
      %v2794 = vadd.f32 %v2724, %v2793
      %v2795 = vpop.f32.mrf.mxu0
      %v2796 = vadd.f32 %v2724, %v2795
      %2797 = vmatmul.bf16.gmra.mxu0 %v2701
      %v2798 = vpop.f32.mrf.mxu0
      %v2799 = vadd.f32 %v2724, %v2798
      %v2800 = vpop.f32.mrf.mxu0
      %v2801 = vadd.f32 %v2724, %v2800
      %2802 = vmatmul.bf16.gmra.mxu0 %v2702
      %v2803 = vpop.f32.mrf.mxu0
      %v2804 = vadd.f32 %v2724, %v2803
      %v2805 = vpop.f32.mrf.mxu0
      %v2806 = vadd.f32 %v2724, %v2805
      %2807 = vmatmul.bf16.gmra.mxu0 %v2703
      %v2808 = vpop.f32.mrf.mxu0
      %v2809 = vadd.f32 %v2724, %v2808
      %v2810 = vpop.f32.mrf.mxu0
      %v2811 = vadd.f32 %v2724, %v2810
      %2812 = vmatmul.bf16.gmra.mxu0 %v2704
      %v2813 = vpop.f32.mrf.mxu0
      %v2814 = vadd.f32 %v2724, %v2813
      %v2815 = vpop.f32.mrf.mxu0
      %v2816 = vadd.f32 %v2724, %v2815
      %2817 = vmatmul.bf16.gmra.mxu0 %v2705
      %v2818 = vpop.f32.mrf.mxu0
      %v2819 = vadd.f32 %v2724, %v2818
      %v2820 = vpop.f32.mrf.mxu0
      %v2821 = vadd.f32 %v2724, %v2820
      %2822 = vdwg.mxu0
      %v2823 = vmax.f32 %v2784, 0.0
      %v2824 = vmax.f32 %v2786, 0.0
      %v2825 = vmax.f32 %v2789, 0.0
      %v2826 = vmax.f32 %v2791, 0.0
      %v2827 = vmax.f32 %v2794, 0.0
      %v2828 = vmax.f32 %v2796, 0.0
      %v2829 = vmax.f32 %v2799, 0.0
      %v2830 = vmax.f32 %v2801, 0.0
      %v2831 = vmax.f32 %v2804, 0.0
      %v2832 = vmax.f32 %v2806, 0.0
      %v2833 = vmax.f32 %v2809, 0.0
      %v2834 = vmax.f32 %v2811, 0.0
      %v2835 = vmax.f32 %v2814, 0.0
      %v2836 = vmax.f32 %v2816, 0.0
      %v2837 = vmax.f32 %v2819, 0.0
      %v2838 = vmax.f32 %v2821, 0.0
      %v2839 = vpack.c.bf16 %v2824, %v2823
      %v2840 = vpack.c.bf16 %v2826, %v2825
      %v2841 = vpack.c.bf16 %v2828, %v2827
      %v2842 = vpack.c.bf16 %v2830, %v2829
      %v2843 = vpack.c.bf16 %v2832, %v2831
      %v2844 = vpack.c.bf16 %v2834, %v2833
      %v2845 = vpack.c.bf16 %v2836, %v2835
      %v2846 = vpack.c.bf16 %v2838, %v2837
      %v2847 = vld [vmem:[%s713] sm:$0xf]
      %v2848 = vld [vmem:[%s713 + $0x4] sm:$0xf]
      %v2849 = vld [vmem:[%s713 + $0x8] sm:$0xf]
      %v2850 = vld [vmem:[%s713 + $0xc] sm:$0xf]
      %v2851 = vld [vmem:[%s713 + $0x10] sm:$0xf]
      %v2852 = vld [vmem:[%s713 + $0x14] sm:$0xf]
      %v2853 = vld [vmem:[%s713 + $0x18] sm:$0xf]
      %v2854 = vld [vmem:[%s713 + $0x1c] sm:$0xf]
      %v2855 = vld [vmem:[%s713 + $0x20] sm:$0xf]
      %v2856 = vld [vmem:[%s713 + $0x24] sm:$0xf]
      %v2857 = vld [vmem:[%s713 + $0x28] sm:$0xf]
      %v2858 = vld [vmem:[%s713 + $0x2c] sm:$0xf]
      %v2859 = vld [vmem:[%s713 + $0x30] sm:$0xf]
      %v2860 = vld [vmem:[%s713 + $0x34] sm:$0xf]
      %v2861 = vld [vmem:[%s713 + $0x38] sm:$0xf]
      %v2862 = vld [vmem:[%s713 + $0x3c] sm:$0xf]
      %v2863 = vld [vmem:[%s716] sm:$0x1]
      %v2865 = vperm.slane %v2863, 0
      %v2883 = vunpack.c.l.b16 %v2847
      %v2884 = vunpack.c.l.b16 %v2848
      %v2885 = vunpack.c.l.b16 %v2849
      %v2886 = vunpack.c.l.b16 %v2850
      %v2887 = vunpack.c.l.b16 %v2851
      %v2888 = vunpack.c.l.b16 %v2852
      %v2889 = vunpack.c.l.b16 %v2853
      %v2890 = vunpack.c.l.b16 %v2854
      %v2891 = vunpack.c.l.b16 %v2855
      %v2892 = vunpack.c.l.b16 %v2856
      %v2893 = vunpack.c.l.b16 %v2857
      %v2894 = vunpack.c.l.b16 %v2858
      %v2895 = vunpack.c.l.b16 %v2859
      %v2896 = vunpack.c.l.b16 %v2860
      %v2897 = vunpack.c.l.b16 %v2861
      %v2898 = vunpack.c.l.b16 %v2862
      %v2899 = vpack.c.b16 %v2884, %v2883
      %v2900 = vpack.c.b16 %v2886, %v2885
      %v2901 = vpack.c.b16 %v2888, %v2887
      %v2902 = vpack.c.b16 %v2890, %v2889
      %v2903 = vpack.c.b16 %v2892, %v2891
      %v2904 = vpack.c.b16 %v2894, %v2893
      %v2905 = vpack.c.b16 %v2896, %v2895
      %v2906 = vpack.c.b16 %v2898, %v2897
      %2915 = vmatpush.bf16.msra.mxu0 %v2906
      %2916 = vmatpush.bf16.msra.mxu0 %v2905
      %2917 = vmatpush.bf16.msra.mxu0 %v2904
      %2918 = vmatpush.bf16.msra.mxu0 %v2903
      %2919 = vmatpush.bf16.msra.mxu0 %v2902
      %2920 = vmatpush.bf16.msra.mxu0 %v2901
      %2921 = vmatpush.bf16.msra.mxu0 %v2900
      %2922 = vmatpush.bf16.msra.mxu0 %v2899
      %2923 = vmatmul.bf16.gmra.mxu0 %v2839
      %v2924 = vpop.f32.mrf.mxu0
      %v2925 = vadd.f32 %v2865, %v2924
      %v2926 = vpop.f32.mrf.mxu0
      %v2927 = vadd.f32 %v2865, %v2926
      %2928 = vmatmul.bf16.gmra.mxu0 %v2840
      %v2929 = vpop.f32.mrf.mxu0
      %v2930 = vadd.f32 %v2865, %v2929
      %v2931 = vpop.f32.mrf.mxu0
      %v2932 = vadd.f32 %v2865, %v2931
      %2933 = vmatmul.bf16.gmra.mxu0 %v2841
      %v2934 = vpop.f32.mrf.mxu0
      %v2935 = vadd.f32 %v2865, %v2934
      %v2936 = vpop.f32.mrf.mxu0
      %v2937 = vadd.f32 %v2865, %v2936
      %2938 = vmatmul.bf16.gmra.mxu0 %v2842
      %v2939 = vpop.f32.mrf.mxu0
      %v2940 = vadd.f32 %v2865, %v2939
      %v2941 = vpop.f32.mrf.mxu0
      %v2942 = vadd.f32 %v2865, %v2941
      %2943 = vmatmul.bf16.gmra.mxu0 %v2843
      %v2944 = vpop.f32.mrf.mxu0
      %v2945 = vadd.f32 %v2865, %v2944
      %v2946 = vpop.f32.mrf.mxu0
      %v2947 = vadd.f32 %v2865, %v2946
      %2948 = vmatmul.bf16.gmra.mxu0 %v2844
      %v2949 = vpop.f32.mrf.mxu0
      %v2950 = vadd.f32 %v2865, %v2949
      %v2951 = vpop.f32.mrf.mxu0
      %v2952 = vadd.f32 %v2865, %v2951
      %2953 = vmatmul.bf16.gmra.mxu0 %v2845
      %v2954 = vpop.f32.mrf.mxu0
      %v2955 = vadd.f32 %v2865, %v2954
      %v2956 = vpop.f32.mrf.mxu0
      %v2957 = vadd.f32 %v2865, %v2956
      %2958 = vmatmul.bf16.gmra.mxu0 %v2846
      %v2959 = vpop.f32.mrf.mxu0
      %v2960 = vadd.f32 %v2865, %v2959
      %v2961 = vpop.f32.mrf.mxu0
      %v2962 = vadd.f32 %v2865, %v2961
      %2963 = vdwg.mxu0
      %v2964 = vmax.f32 %v2925, 0.0
      %v2965 = vmax.f32 %v2927, 0.0
      %v2966 = vmax.f32 %v2930, 0.0
      %v2967 = vmax.f32 %v2932, 0.0
      %v2968 = vmax.f32 %v2935, 0.0
      %v2969 = vmax.f32 %v2937, 0.0
      %v2970 = vmax.f32 %v2940, 0.0
      %v2971 = vmax.f32 %v2942, 0.0
      %v2972 = vmax.f32 %v2945, 0.0
      %v2973 = vmax.f32 %v2947, 0.0
      %v2974 = vmax.f32 %v2950, 0.0
      %v2975 = vmax.f32 %v2952, 0.0
      %v2976 = vmax.f32 %v2955, 0.0
      %v2977 = vmax.f32 %v2957, 0.0
      %v2978 = vmax.f32 %v2960, 0.0
      %v2979 = vmax.f32 %v2962, 0.0
      %v2980 = vld [vmem:[%s721] sm:$0xf]
      %v2981 = vld [vmem:[%s721 + $0x4] sm:$0xf]
      %v2982 = vld [vmem:[%s721 + $0x8] sm:$0xf]
      %v2983 = vld [vmem:[%s721 + $0xc] sm:$0xf]
      %v2984 = vld [vmem:[%s721 + $0x10] sm:$0xf]
      %v2985 = vld [vmem:[%s721 + $0x14] sm:$0xf]
      %v2986 = vld [vmem:[%s721 + $0x18] sm:$0xf]
      %v2987 = vld [vmem:[%s721 + $0x1c] sm:$0xf]
      %v2988 = vld [vmem:[%s721 + $0x20] sm:$0xf]
      %v2989 = vld [vmem:[%s721 + $0x24] sm:$0xf]
      %v2990 = vld [vmem:[%s721 + $0x28] sm:$0xf]
      %v2991 = vld [vmem:[%s721 + $0x2c] sm:$0xf]
      %v2992 = vld [vmem:[%s721 + $0x30] sm:$0xf]
      %v2993 = vld [vmem:[%s721 + $0x34] sm:$0xf]
      %v2994 = vld [vmem:[%s721 + $0x38] sm:$0xf]
      %v2995 = vld [vmem:[%s721 + $0x3c] sm:$0xf]
      %v3012 = vunpack.c.l.b16 %v2980
      %v3013 = vunpack.c.l.b16 %v2981
      %v3014 = vunpack.c.l.b16 %v2982
      %v3015 = vunpack.c.l.b16 %v2983
      %v3016 = vunpack.c.l.b16 %v2984
      %v3017 = vunpack.c.l.b16 %v2985
      %v3018 = vunpack.c.l.b16 %v2986
      %v3019 = vunpack.c.l.b16 %v2987
      %v3020 = vunpack.c.l.b16 %v2988
      %v3021 = vunpack.c.l.b16 %v2989
      %v3022 = vunpack.c.l.b16 %v2990
      %v3023 = vunpack.c.l.b16 %v2991
      %v3024 = vunpack.c.l.b16 %v2992
      %v3025 = vunpack.c.l.b16 %v2993
      %v3026 = vunpack.c.l.b16 %v2994
      %v3027 = vunpack.c.l.b16 %v2995
      %v3028 = vpack.c.b16 %v3013, %v3012
      %v3029 = vpack.c.b16 %v3015, %v3014
      %v3030 = vpack.c.b16 %v3017, %v3016
      %v3031 = vpack.c.b16 %v3019, %v3018
      %v3032 = vpack.c.b16 %v3021, %v3020
      %v3033 = vpack.c.b16 %v3023, %v3022
      %v3034 = vpack.c.b16 %v3025, %v3024
      %v3035 = vpack.c.b16 %v3027, %v3026
      %3044 = vmatpush.bf16.msra.mxu0 %v3035
      %3045 = vmatpush.bf16.msra.mxu0 %v3034
      %3046 = vmatpush.bf16.msra.mxu0 %v3033
      %3047 = vmatpush.bf16.msra.mxu0 %v3032
      %3048 = vmatpush.bf16.msra.mxu0 %v3031
      %3049 = vmatpush.bf16.msra.mxu0 %v3030
      %3050 = vmatpush.bf16.msra.mxu0 %v3029
      %3051 = vmatpush.bf16.msra.mxu0 %v3028
      %3052 = vmatmul.bf16.gmra.mxu0 %v1500
      %v3053 = vpop.f32.mrf.mxu0
      %v3054 = vadd.f32 0.0, %v3053
      %v3055 = vpop.f32.mrf.mxu0
      %v3056 = vadd.f32 0.0, %v3055
      %3057 = vmatmul.bf16.gmra.mxu0 %v1501
      %v3058 = vpop.f32.mrf.mxu0
      %v3059 = vadd.f32 0.0, %v3058
      %v3060 = vpop.f32.mrf.mxu0
      %v3061 = vadd.f32 0.0, %v3060
      %3062 = vmatmul.bf16.gmra.mxu0 %v1502
      %v3063 = vpop.f32.mrf.mxu0
      %v3064 = vadd.f32 0.0, %v3063
      %v3065 = vpop.f32.mrf.mxu0
      %v3066 = vadd.f32 0.0, %v3065
      %3067 = vmatmul.bf16.gmra.mxu0 %v1503
      %v3068 = vpop.f32.mrf.mxu0
      %v3069 = vadd.f32 0.0, %v3068
      %v3070 = vpop.f32.mrf.mxu0
      %v3071 = vadd.f32 0.0, %v3070
      %3072 = vmatmul.bf16.gmra.mxu0 %v1504
      %v3073 = vpop.f32.mrf.mxu0
      %v3074 = vadd.f32 0.0, %v3073
      %v3075 = vpop.f32.mrf.mxu0
      %v3076 = vadd.f32 0.0, %v3075
      %3077 = vmatmul.bf16.gmra.mxu0 %v1505
      %v3078 = vpop.f32.mrf.mxu0
      %v3079 = vadd.f32 0.0, %v3078
      %v3080 = vpop.f32.mrf.mxu0
      %v3081 = vadd.f32 0.0, %v3080
      %3082 = vmatmul.bf16.gmra.mxu0 %v1506
      %v3083 = vpop.f32.mrf.mxu0
      %v3084 = vadd.f32 0.0, %v3083
      %v3085 = vpop.f32.mrf.mxu0
      %v3086 = vadd.f32 0.0, %v3085
      %3087 = vmatmul.bf16.gmra.mxu0 %v1507
      %v3088 = vpop.f32.mrf.mxu0
      %v3089 = vadd.f32 0.0, %v3088
      %v3090 = vpop.f32.mrf.mxu0
      %v3091 = vadd.f32 0.0, %v3090
      %3092 = vdwg.mxu0
      %v3093 = vadd.f32 %v2964, %v3054
      %v3094 = vadd.f32 %v2965, %v3056
      %v3095 = vadd.f32 %v2966, %v3059
      %v3096 = vadd.f32 %v2967, %v3061
      %v3097 = vadd.f32 %v2968, %v3064
      %v3098 = vadd.f32 %v2969, %v3066
      %v3099 = vadd.f32 %v2970, %v3069
      %v3100 = vadd.f32 %v2971, %v3071
      %v3101 = vadd.f32 %v2972, %v3074
      %v3102 = vadd.f32 %v2973, %v3076
      %v3103 = vadd.f32 %v2974, %v3079
      %v3104 = vadd.f32 %v2975, %v3081
      %v3105 = vadd.f32 %v2976, %v3084
      %v3106 = vadd.f32 %v2977, %v3086
      %v3107 = vadd.f32 %v2978, %v3089
      %v3108 = vadd.f32 %v2979, %v3091
      %v3109 = vld [vmem:[%s724] sm:$0x1]
      %v3111 = vperm.slane %v3109, 0
      %v3113 = vadd.f32 %v3093, %v3111
      %v3114 = vadd.f32 %v3094, %v3111
      %v3115 = vadd.f32 %v3095, %v3111
      %v3116 = vadd.f32 %v3096, %v3111
      %v3117 = vadd.f32 %v3097, %v3111
      %v3118 = vadd.f32 %v3098, %v3111
      %v3119 = vadd.f32 %v3099, %v3111
      %v3120 = vadd.f32 %v3100, %v3111
      %v3121 = vadd.f32 %v3101, %v3111
      %v3122 = vadd.f32 %v3102, %v3111
      %v3123 = vadd.f32 %v3103, %v3111
      %v3124 = vadd.f32 %v3104, %v3111
      %v3125 = vadd.f32 %v3105, %v3111
      %v3126 = vadd.f32 %v3106, %v3111
      %v3127 = vadd.f32 %v3107, %v3111
      %v3128 = vadd.f32 %v3108, %v3111
      %3129 = vst [vmem:[%s16] sm:$0xff] %v3113
      %3130 = vst [vmem:[%s16 + $0x8] sm:$0xff] %v3114
      %3131 = vst [vmem:[%s16 + $0x10] sm:$0xff] %v3115
      %3132 = vst [vmem:[%s16 + $0x18] sm:$0xff] %v3116
      %3133 = vst [vmem:[%s16 + $0x20] sm:$0xff] %v3117
      %3134 = vst [vmem:[%s16 + $0x28] sm:$0xff] %v3118
      %3135 = vst [vmem:[%s16 + $0x30] sm:$0xff] %v3119
      %3136 = vst [vmem:[%s16 + $0x38] sm:$0xff] %v3120
      %3137 = vst [vmem:[%s16 + $0x40] sm:$0xff] %v3121
      %3138 = vst [vmem:[%s16 + $0x48] sm:$0xff] %v3122
      %3139 = vst [vmem:[%s16 + $0x50] sm:$0xff] %v3123
      %3140 = vst [vmem:[%s16 + $0x58] sm:$0xff] %v3124
      %3141 = vst [vmem:[%s16 + $0x60] sm:$0xff] %v3125
      %3142 = vst [vmem:[%s16 + $0x68] sm:$0xff] %v3126
      %3143 = vst [vmem:[%s16 + $0x70] sm:$0xff] %v3127
      %3144 = vst [vmem:[%s16 + $0x78] sm:$0xff] %v3128
      %3145 = vst [vmem:[%s17] sm:$0xff] %v2473
      %3146 = vst [vmem:[%s17 + $0x8] sm:$0xff] %v2476
      %3147 = vst [vmem:[%s17 + $0x10] sm:$0xff] %v2479
      %3148 = vst [vmem:[%s17 + $0x18] sm:$0xff] %v2482
      %3149 = vst [vmem:[%s17 + $0x20] sm:$0xff] %v2485
      %3150 = vst [vmem:[%s17 + $0x28] sm:$0xff] %v2488
      %3151 = vst [vmem:[%s17 + $0x30] sm:$0xff] %v2491
      %3152 = vst [vmem:[%s17 + $0x38] sm:$0xff] %v2494
      %3153 = vst [vmem:[%s17 + $0x40] sm:$0xff] %v2497
      %3154 = vst [vmem:[%s17 + $0x48] sm:$0xff] %v2500
      %3155 = vst [vmem:[%s17 + $0x50] sm:$0xff] %v2503
      %3156 = vst [vmem:[%s17 + $0x58] sm:$0xff] %v2506
      %3157 = vst [vmem:[%s17 + $0x60] sm:$0xff] %v2509
      %3158 = vst [vmem:[%s17 + $0x68] sm:$0xff] %v2512
      %3159 = vst [vmem:[%s17 + $0x70] sm:$0xff] %v2515
      %3160 = vst [vmem:[%s17 + $0x78] sm:$0xff] %v2518
      // Predicated region
      $region89: #{graph_triple_conv_net.1} parent=83 // pred_check
        %p3161 = pneg %p438
      $region90: #{graph_triple_conv_net.1} parent=83 // pred_check_branch
        %3163 = sbr.rel (%p3161) target = $region92
      $region91: #{graph_triple_conv_net.1} parent=83 // pred_region
        _
      $region92: #{graph_triple_conv_net.1} parent=83 // pred_fallthru
        _
      // Predicated region
      $region93: #{graph_triple_conv_net.1} parent=83 // pred_check
        %p3164 = pneg %p459
      $region94: #{graph_triple_conv_net.1} parent=83 // pred_check_branch
        %3166 = sbr.rel (%p3164) target = $region96
      $region95: #{graph_triple_conv_net.1} parent=83 // pred_region
        _
      $region96: #{graph_triple_conv_net.1} parent=83 // pred_fallthru
        _
      // Predicated region
      $region97: #{graph_triple_conv_net.1} parent=83 // pred_check
        %p3167 = pneg %p438
      $region98: #{graph_triple_conv_net.1} parent=83 // pred_check_branch
        %3169 = sbr.rel (%p3167) target = $region100
      $region99: #{graph_triple_conv_net.1} parent=83 // pred_region
        _
      $region100: #{graph_triple_conv_net.1} parent=83 // pred_fallthru
        _
      // Predicated region
      $region101: #{graph_triple_conv_net.1} parent=83 // pred_check
        %p3170 = pneg %p459
      $region102: #{graph_triple_conv_net.1} parent=83 // pred_check_branch
        %3172 = sbr.rel (%p3170) target = $region104
      $region103: #{graph_triple_conv_net.1} parent=83 // pred_region
        _
      $region104: #{graph_triple_conv_net.1} parent=83 // pred_fallthru
        _
    $region84: #{graph_triple_conv_net.1} parent=5 // pred_fallthru
      _
    %p3173 = scmp.le.s32.totalorder 2, %s24
    // Predicated region
    $region105: #{graph_triple_conv_net.1} parent=5 // pred_check
      %p3174 = pneg %p3173
    $region106: #{graph_triple_conv_net.1} parent=5 // pred_check_branch
      %3176 = sbr.rel (%p3174) target = $region108
    $region107: #{graph_triple_conv_net.1} parent=5 // pred_region
      %s3177 = ssub.s32 %s24, 2
    $region108: #{graph_triple_conv_net.1} parent=5 // pred_fallthru
      _
  $region6: #{graph_triple_conv_net.1} parent=0 // loop_footer
    %s28 = sadd.s32 1, %s24
  $region7: #{graph_triple_conv_net.1} parent=0 // loop_footer_branch
    %23 = sbr.rel target = $region3
  $region8: #{graph_triple_conv_net.1} parent=0 // loop_exit
    _

</llo_original>
